<compile_context>
chip_gen: v7x
topology: tpu7x:2x2x1
jax: 0.10.0
libtpu: 0.0.40
codegen_flags: <defaults>
</compile_context>

<pallas_src>
import functools
import math

import jax
import jax.numpy as jnp
from jax import lax
from jax.experimental import pallas as pl
from jax.experimental.pallas import tpu as pltpu


def _layernorm(x, w, b, eps=1e-5):
    mu = jnp.mean(x, axis=-1, keepdims=True)
    xc = x - mu
    var = jnp.mean(xc * xc, axis=-1, keepdims=True)
    inv = lax.rsqrt(var + eps)
    return xc * inv * w + b


def transformer_block_kernel(
    # per-(b, q-tile) / per-b inputs
    x_q_ref, x_full_ref, amask_row_ref, amask_col_ref,
    # attention weights
    ln1w_ref, ln1b_ref, wq_ref, wk_ref, wv_ref, bq_ref, bk_ref, bv_ref,
    wo_ref, bo_ref, ls1_ref,
    # mlp weights
    ln2w_ref, ln2b_ref, w1_ref, b1_ref, w2_ref, b2_ref, ls2_ref,
    # output
    out_ref,
    # scratch: full-sequence K / V, cached across the q-tile grid axis
    k_scr, v_scr,
    *, heads,
):
    f32 = jnp.float32
    cdt = wq_ref.dtype                      # MXU compute dtype (f32 or bf16)
    D = wq_ref.shape[0]
    Dh = D // heads
    scale = 1.0 / math.sqrt(Dh)

    ln1w = ln1w_ref[...].astype(f32)
    ln1b = ln1b_ref[...].astype(f32)

    # ---- once per batch (first q-tile): project K, V for the whole sequence ----
    @pl.when(pl.program_id(1) == 0)
    def _():
        xf = x_full_ref[0].astype(f32)                                   # (M, D)
        xnf = _layernorm(xf, ln1w, ln1b).astype(cdt)
        k = jnp.dot(xnf, wk_ref[...], preferred_element_type=f32) + bk_ref[...].astype(f32)
        v = jnp.dot(xnf, wv_ref[...], preferred_element_type=f32) + bv_ref[...].astype(f32)
        k_scr[...] = k.astype(k_scr.dtype)
        v_scr[...] = v.astype(v_scr.dtype)

    x_q = x_q_ref[0].astype(f32)                                         # (tq, D)
    tq = x_q.shape[0]

    # Hoisted additive key mask: computed once, reused by every head.
    neg_bias = jnp.where(amask_row_ref[0] > 0.5, 0.0, -1e9).astype(f32)  # (1, M)

    # ---------- attention branch: x + ls1 * attn(LN1(x)) ----------
    xn1 = _layernorm(x_q, ln1w, ln1b)
    q = jnp.dot(xn1.astype(cdt), wq_ref[...], preferred_element_type=f32) \
        + bq_ref[...].astype(f32)                                        # (tq, D)
    k = k_scr[...]                                                       # (M, D)
    v = v_scr[...]                                                       # (M, D)

    acc = jnp.zeros((tq, D), f32)
    for h in range(heads):           # static head loop; accumulate out-projection
        lo = h * Dh
        qh = q[:, lo:lo + Dh].astype(cdt)                                # (tq, Dh)
        kh = k[:, lo:lo + Dh]                                            # (M, Dh)
        vh = v[:, lo:lo + Dh]                                            # (M, Dh)
        # scores = qh @ kh.T without materializing the transpose
        s = lax.dot_general(qh, kh, (((1,), (1,)), ((), ())),
                            preferred_element_type=f32) * scale          # (tq, M)
        s = s + neg_bias
        s = s - jnp.max(s, axis=-1, keepdims=True)
        p = jnp.exp(s)
        p = p * pl.reciprocal(jnp.sum(p, axis=-1, keepdims=True), approx=True)
        oh = jnp.dot(p.astype(cdt), vh, preferred_element_type=f32)      # (tq, Dh)
        # accumulate directly into the output projection (no lane-dim concatenate)
        acc = acc + jnp.dot(oh.astype(cdt), wo_ref[pl.ds(lo, Dh), :],
                            preferred_element_type=f32)                  # (tq, D)
    attn = acc + bo_ref[...].astype(f32)

    x1 = x_q + ls1_ref[...].astype(f32) * attn

    # ---------- MLP branch: x + ls2 * mlp(LN2(x)) ----------
    xn2 = _layernorm(x1, ln2w_ref[...].astype(f32), ln2b_ref[...].astype(f32))
    h1 = jnp.dot(xn2.astype(cdt), w1_ref[...], preferred_element_type=f32) \
        + b1_ref[...].astype(f32)
    h1 = jax.nn.gelu(h1, approximate=True)          # tanh-approx GELU, f32 math
    y = jnp.dot(h1.astype(cdt), w2_ref[...], preferred_element_type=f32) \
        + b2_ref[...].astype(f32)
    y = y * amask_col_ref[0].astype(f32)            # zero MLP output at padded tokens

    out_ref[0] = (x1 + ls2_ref[...].astype(f32) * y).astype(out_ref.dtype)


def transformer_block(x, seg, amask, params, *, heads, block_q=None):
    """x: (B, M, D), seg: (B, M) i32, amask: (B, M) float {0,1}.

    Returns (x_out, seg, amask). TokenMerging is the identity (tome_ratio=0.0).
    """
    B, M, D = x.shape
    Hm = params["w1"].shape[1]
    assert D % heads == 0
    cdt = params["wqkv"].dtype              # compute/storage dtype of the weights

    if block_q is None:
        block_q = M if M <= 256 else 256
    assert M % block_q == 0, "token count must be divisible by block_q"
    tq = block_q
    n_q = M // tq

    # Split the fused qkv projection host-side (once) so the kernel never has to
    # lane-slice the (M, 3D) activation into q/k/v.
    wq = params["wqkv"][:, 0:D]
    wk = params["wqkv"][:, D:2 * D]
    wv = params["wqkv"][:, 2 * D:3 * D]
    bq = params["bqkv"][:, 0:D]
    bk = params["bqkv"][:, D:2 * D]
    bv = params["bqkv"][:, 2 * D:3 * D]

    amask_row = amask.reshape(B, 1, M).astype(jnp.float32)
    amask_col = amask.reshape(B, M, 1).astype(jnp.float32)

    def const(shape):
        # Constant index_map across the whole grid + single VMEM buffer (no
        # pointless double-buffering of weights that are never re-DMA'd).
        return pl.BlockSpec(shape, lambda b, q: (0,) * len(shape),
                            pipeline_mode=pl.Buffered(1))

    in_specs = [
        pl.BlockSpec((1, tq, D), lambda b, q: (b, q, 0)),     # x, q-tile view
        pl.BlockSpec((1, M, D), lambda b, q: (b, 0, 0)),      # x, full-seq view (K/V)
        pl.BlockSpec((1, 1, M), lambda b, q: (b, 0, 0)),      # key mask
        pl.BlockSpec((1, tq, 1), lambda b, q: (b, q, 0)),     # token mask (MLP)
        const((1, D)), const((1, D)),                         # ln1 w, b
        const((D, D)), const((D, D)), const((D, D)),          # wq, wk, wv
        const((1, D)), const((1, D)), const((1, D)),          # bq, bk, bv
        const((D, D)), const((1, D)), const((1, D)),          # wo, bo, ls1
        const((1, D)), const((1, D)),                         # ln2 w, b
        const((D, Hm)), const((1, Hm)),                       # w1, b1
        const((Hm, D)), const((1, D)),                        # w2, b2
        const((1, D)),                                        # ls2
    ]

    grid_spec = pltpu.PrefetchScalarGridSpec(
        num_scalar_prefetch=0,
        grid=(B, n_q),
        in_specs=in_specs,
        out_specs=pl.BlockSpec((1, tq, D), lambda b, q: (b, q, 0)),
        scratch_shapes=[pltpu.VMEM((M, D), cdt),    # K cache (full sequence)
                        pltpu.VMEM((M, D), cdt)],   # V cache (full sequence)
    )

    # Advisory cost estimate so XLA schedules surrounding HLO around the long call.
    flops = B * (8 * M * D * D + 4 * M * M * D + 4 * M * D * Hm)
    transcendentals = B * (heads * M * M + M * Hm)
    weight_bytes = sum(int(v.size) * v.dtype.itemsize for v in params.values())
    bytes_accessed = weight_bytes + int(3 * x.size * x.dtype.itemsize) + int(2 * B * M * 4)

    kernel = functools.partial(transformer_block_kernel, heads=heads)
    out = pl.pallas_call(
        kernel,
        out_shape=jax.ShapeDtypeStruct((B, M, D), x.dtype),
        grid_spec=grid_spec,
        compiler_params=pltpu.CompilerParams(
            dimension_semantics=("parallel", "arbitrary"),
            vmem_limit_bytes=64 * 1024 * 1024,
        ),
        cost_estimate=pl.CostEstimate(
            flops=int(flops),
            transcendentals=int(transcendentals),
            bytes_accessed=int(bytes_accessed),
        ),
    )(
        x, x, amask_row, amask_col,
        params["ln1_w"], params["ln1_b"],
        wq, wk, wv, bq, bk, bv,
        params["wo"], params["bo"], params["ls1"],
        params["ln2_w"], params["ln2_b"],
        params["w1"], params["b1"], params["w2"], params["b2"],
        params["ls2"],
    )
    # TokenMerging is identity (tome_ratio=0.0): seg / amask pass through unchanged.
    return out, seg, amask


def _reference(x, amask, params, heads):
    """Pure-JAX reference for correctness checking (same math as the module)."""
    B, M, D = x.shape
    Dh = D // heads
    amask_row = amask.reshape(B, 1, 1, M)

    def ln(v, w, b):
        mu = jnp.mean(v, -1, keepdims=True)
        var = jnp.mean((v - mu) ** 2, -1, keepdims=True)
        return (v - mu) * lax.rsqrt(var + 1e-5) * w + b

    xn = ln(x, params["ln1_w"], params["ln1_b"])
    qkv = xn @ params["wqkv"] + params["bqkv"]
    q, k, v = jnp.split(qkv, 3, axis=-1)
    rs = lambda t: t.reshape(B, M, heads, Dh).transpose(0, 2, 1, 3)
    q, k, v = rs(q), rs(k), rs(v)
    s = (q @ k.transpose(0, 1, 3, 2)) / math.sqrt(Dh)
    s = jnp.where(amask_row > 0.5, s, -1e9)
    p = jax.nn.softmax(s, axis=-1)
    o = (p @ v).transpose(0, 2, 1, 3).reshape(B, M, D)
    o = o @ params["wo"] + params["bo"]
    x = x + params["ls1"] * o

    xn2 = ln(x, params["ln2_w"], params["ln2_b"])
    h1 = jax.nn.gelu(xn2 @ params["w1"] + params["b1"], approximate=True)
    y = (h1 @ params["w2"] + params["b2"]) * amask.reshape(B, M, 1)
    return x + params["ls2"] * y


def make_params(key, embed_dim, heads, mlp_ratio=4.0, init_scale=0.1):
    D = embed_dim
    H = int(D * mlp_ratio)
    ks = jax.random.split(key, 4)
    w = lambda k, shp: (0.02 * jax.random.normal(k, shp)).astype(jnp.float32)
    return {
        "ln1_w": jnp.ones((1, D), jnp.float32), "ln1_b": jnp.zeros((1, D), jnp.float32),
        "wqkv": w(ks[0], (D, 3 * D)), "bqkv": jnp.zeros((1, 3 * D), jnp.float32),
        "wo": w(ks[1], (D, D)), "bo": jnp.zeros((1, D), jnp.float32),
        "ls1": jnp.full((1, D), init_scale, jnp.float32),
        "ln2_w": jnp.ones((1, D), jnp.float32), "ln2_b": jnp.zeros((1, D), jnp.float32),
        "w1": w(ks[2], (D, H)), "b1": jnp.zeros((1, H), jnp.float32),
        "w2": w(ks[3], (H, D)), "b2": jnp.zeros((1, D), jnp.float32),
        "ls2": jnp.full((1, D), init_scale, jnp.float32),
    }


if __name__ == "__main__":
    key = jax.random.PRNGKey(0)
    kx, kp, kx2 = jax.random.split(key, 3)

    # --- test 1: single q-tile per batch (M == block_q) ---
    B, M, D, heads = 2, 8, 32, 4
    x = jax.random.normal(kx, (B, M, D), jnp.float32)
    seg = jnp.zeros((B, M), jnp.int32)
    amask = jnp.ones((B, M), jnp.float32).at[1, 6:].set(0.0)   # pad last 2 tokens of batch 1
    params = make_params(kp, D, heads)

    out, seg_out, amask_out = transformer_block(x, seg, amask, params, heads=heads)
    out = jax.block_until_ready(out)
    ref = _reference(x, amask, params, heads)
    assert jnp.allclose(out, ref, atol=1e-3, rtol=1e-3), "mismatch vs pure-JAX reference (M=8)"

    # --- test 2: multiple q-tiles per batch (exercises the cached-K/V grid axis) ---
    M2 = 16
    x2 = jax.random.normal(kx2, (B, M2, D), jnp.float32)
    seg2 = jnp.zeros((B, M2), jnp.int32)
    amask2 = jnp.ones((B, M2), jnp.float32).at[1, 12:].set(0.0)
    out2, _, _ = transformer_block(x2, seg2, amask2, params, heads=heads, block_q=8)
    out2 = jax.block_until_ready(out2)
    ref2 = _reference(x2, amask2, params, heads)
    assert jnp.allclose(out2, ref2, atol=1e-3, rtol=1e-3), "mismatch vs pure-JAX reference (M=16)"

    print("KERNEL_OK")
</pallas_src>

<mosaic_0001>
module attributes {stable_mosaic.version = 11 : i64} {
  func.func @transformer_block_kernel(%arg0: i32, %arg1: i32, %arg2: memref<1x8x32xf32, #tpu.memory_space<vmem>>, %arg3: memref<1x8x32xf32, #tpu.memory_space<vmem>>, %arg4: memref<1x1x8xf32, #tpu.memory_space<vmem>>, %arg5: memref<1x8x1xf32, #tpu.memory_space<vmem>>, %arg6: memref<1x32xf32, #tpu.memory_space<vmem>>, %arg7: memref<1x32xf32, #tpu.memory_space<vmem>>, %arg8: memref<32x32xf32, #tpu.memory_space<vmem>>, %arg9: memref<32x32xf32, #tpu.memory_space<vmem>>, %arg10: memref<32x32xf32, #tpu.memory_space<vmem>>, %arg11: memref<1x32xf32, #tpu.memory_space<vmem>>, %arg12: memref<1x32xf32, #tpu.memory_space<vmem>>, %arg13: memref<1x32xf32, #tpu.memory_space<vmem>>, %arg14: memref<32x32xf32, #tpu.memory_space<vmem>>, %arg15: memref<1x32xf32, #tpu.memory_space<vmem>>, %arg16: memref<1x32xf32, #tpu.memory_space<vmem>>, %arg17: memref<1x32xf32, #tpu.memory_space<vmem>>, %arg18: memref<1x32xf32, #tpu.memory_space<vmem>>, %arg19: memref<32x128xf32, #tpu.memory_space<vmem>>, %arg20: memref<1x128xf32, #tpu.memory_space<vmem>>, %arg21: memref<128x32xf32, #tpu.memory_space<vmem>>, %arg22: memref<1x32xf32, #tpu.memory_space<vmem>>, %arg23: memref<1x32xf32, #tpu.memory_space<vmem>>, %arg24: memref<1x8x32xf32, #tpu.memory_space<vmem>>, %arg25: memref<8x32xf32, #tpu.memory_space<vmem>>, %arg26: memref<8x32xf32, #tpu.memory_space<vmem>>) attributes {dimension_semantics = [#tpu.dimension_semantics<parallel>, #tpu.dimension_semantics<arbitrary>], iteration_bounds = array<i64: 2, 1>, scalar_prefetch = 0 : i64, scratch_operands = 2 : i64, tpu.core_type = #tpu.core_type<tc>, window_params = [{transform_indices = @transform_0, window_bounds = array<i64: 1, 8, 32>}, {transform_indices = @transform_1, window_bounds = array<i64: 1, 8, 32>}, {transform_indices = @transform_2, window_bounds = array<i64: 1, 1, 8>}, {transform_indices = @transform_3, window_bounds = array<i64: 1, 8, 1>}, {pipeline_mode = #tpu.pipeline_mode<synchronous>, transform_indices = @transform_4, window_bounds = array<i64: 1, 32>}, {pipeline_mode = #tpu.pipeline_mode<synchronous>, transform_indices = @transform_5, window_bounds = array<i64: 1, 32>}, {pipeline_mode = #tpu.pipeline_mode<synchronous>, transform_indices = @transform_6, window_bounds = array<i64: 32, 32>}, {pipeline_mode = #tpu.pipeline_mode<synchronous>, transform_indices = @transform_7, window_bounds = array<i64: 32, 32>}, {pipeline_mode = #tpu.pipeline_mode<synchronous>, transform_indices = @transform_8, window_bounds = array<i64: 32, 32>}, {pipeline_mode = #tpu.pipeline_mode<synchronous>, transform_indices = @transform_9, window_bounds = array<i64: 1, 32>}, {pipeline_mode = #tpu.pipeline_mode<synchronous>, transform_indices = @transform_10, window_bounds = array<i64: 1, 32>}, {pipeline_mode = #tpu.pipeline_mode<synchronous>, transform_indices = @transform_11, window_bounds = array<i64: 1, 32>}, {pipeline_mode = #tpu.pipeline_mode<synchronous>, transform_indices = @transform_12, window_bounds = array<i64: 32, 32>}, {pipeline_mode = #tpu.pipeline_mode<synchronous>, transform_indices = @transform_13, window_bounds = array<i64: 1, 32>}, {pipeline_mode = #tpu.pipeline_mode<synchronous>, transform_indices = @transform_14, window_bounds = array<i64: 1, 32>}, {pipeline_mode = #tpu.pipeline_mode<synchronous>, transform_indices = @transform_15, window_bounds = array<i64: 1, 32>}, {pipeline_mode = #tpu.pipeline_mode<synchronous>, transform_indices = @transform_16, window_bounds = array<i64: 1, 32>}, {pipeline_mode = #tpu.pipeline_mode<synchronous>, transform_indices = @transform_17, window_bounds = array<i64: 32, 128>}, {pipeline_mode = #tpu.pipeline_mode<synchronous>, transform_indices = @transform_18, window_bounds = array<i64: 1, 128>}, {pipeline_mode = #tpu.pipeline_mode<synchronous>, transform_indices = @transform_19, window_bounds = array<i64: 128, 32>}, {pipeline_mode = #tpu.pipeline_mode<synchronous>, transform_indices = @transform_20, window_bounds = array<i64: 1, 32>}, {pipeline_mode = #tpu.pipeline_mode<synchronous>, transform_indices = @transform_21, window_bounds = array<i64: 1, 32>}, {transform_indices = @transform_22, window_bounds = array<i64: 1, 8, 32>}]} {
    %c0 = arith.constant 0 : index
    %c0_0 = arith.constant 0 : index
    %0 = vector.load %arg6[%c0, %c0_0] : memref<1x32xf32, #tpu.memory_space<vmem>>, vector<1x32xf32>
    %c0_1 = arith.constant 0 : index
    %c0_2 = arith.constant 0 : index
    %1 = vector.load %arg7[%c0_1, %c0_2] : memref<1x32xf32, #tpu.memory_space<vmem>>, vector<1x32xf32>
    %c0_i32 = arith.constant 0 : i32
    %2 = arith.cmpi eq, %arg1, %c0_i32 : i32
    %3 = arith.extui %2 : i1 to i32
    %c0_i32_3 = arith.constant 0 : i32
    %4 = arith.cmpi ne, %3, %c0_i32_3 : i32
    scf.if %4 {
      %c0_91 = arith.constant 0 : index
      %c0_92 = arith.constant 0 : index
      %c0_93 = arith.constant 0 : index
      %193 = vector.load %arg3[%c0_91, %c0_92, %c0_93] : memref<1x8x32xf32, #tpu.memory_space<vmem>>, vector<1x8x32xf32>
      %194 = vector.shape_cast %193 : vector<1x8x32xf32> to vector<8x32xf32>
      %cst_94 = arith.constant dense<0.000000e+00> : vector<8xf32>
      %195 = vector.multi_reduction <add>, %194, %cst_94 [1] : vector<8x32xf32> to vector<8xf32>
      %196 = vector.shape_cast %195 : vector<8xf32> to vector<8x1xf32>
      %cst_95 = arith.constant 3.200000e+01 : f32
      %197 = vector.broadcast %cst_95 : f32 to vector<8x1xf32>
      %198 = arith.divf %196, %197 : vector<8x1xf32>
      %199 = vector.broadcast %198 : vector<8x1xf32> to vector<8x32xf32>
      %200 = arith.subf %194, %199 : vector<8x32xf32>
      %201 = arith.mulf %200, %200 : vector<8x32xf32>
      %cst_96 = arith.constant dense<0.000000e+00> : vector<8xf32>
      %202 = vector.multi_reduction <add>, %201, %cst_96 [1] : vector<8x32xf32> to vector<8xf32>
      %203 = vector.shape_cast %202 : vector<8xf32> to vector<8x1xf32>
      %cst_97 = arith.constant 3.200000e+01 : f32
      %204 = vector.broadcast %cst_97 : f32 to vector<8x1xf32>
      %205 = arith.divf %203, %204 : vector<8x1xf32>
      %cst_98 = arith.constant 9.99999974E-6 : f32
      %206 = vector.broadcast %cst_98 : f32 to vector<8x1xf32>
      %207 = arith.addf %205, %206 : vector<8x1xf32>
      %208 = math.rsqrt %207 : vector<8x1xf32>
      %209 = vector.broadcast %208 : vector<8x1xf32> to vector<8x32xf32>
      %210 = arith.mulf %200, %209 : vector<8x32xf32>
      %211 = vector.broadcast %0 : vector<1x32xf32> to vector<8x32xf32>
      %212 = arith.mulf %210, %211 : vector<8x32xf32>
      %213 = vector.broadcast %1 : vector<1x32xf32> to vector<8x32xf32>
      %214 = arith.addf %212, %213 : vector<8x32xf32>
      %c0_99 = arith.constant 0 : index
      %c0_100 = arith.constant 0 : index
      %215 = vector.load %arg9[%c0_99, %c0_100] : memref<32x32xf32, #tpu.memory_space<vmem>>, vector<32x32xf32>
      %cst_101 = arith.constant dense<0.000000e+00> : vector<8x32xf32>
      %216 = tpu.matmul %214, %215, %cst_101 {dimension_numbers = #tpu.dot_dimension_numbers<[1], [0], [0], [1], [0, 0, 1, 1], [], []>} : vector<8x32xf32>, vector<32x32xf32>, vector<8x32xf32> -> vector<8x32xf32>
      %c0_102 = arith.constant 0 : index
      %c0_103 = arith.constant 0 : index
      %217 = vector.load %arg12[%c0_102, %c0_103] : memref<1x32xf32, #tpu.memory_space<vmem>>, vector<1x32xf32>
      %218 = vector.broadcast %217 : vector<1x32xf32> to vector<8x32xf32>
      %219 = arith.addf %216, %218 : vector<8x32xf32>
      %c0_104 = arith.constant 0 : index
      %c0_105 = arith.constant 0 : index
      %220 = vector.load %arg10[%c0_104, %c0_105] : memref<32x32xf32, #tpu.memory_space<vmem>>, vector<32x32xf32>
      %cst_106 = arith.constant dense<0.000000e+00> : vector<8x32xf32>
      %221 = tpu.matmul %214, %220, %cst_106 {dimension_numbers = #tpu.dot_dimension_numbers<[1], [0], [0], [1], [0, 0, 1, 1], [], []>} : vector<8x32xf32>, vector<32x32xf32>, vector<8x32xf32> -> vector<8x32xf32>
      %c0_107 = arith.constant 0 : index
      %c0_108 = arith.constant 0 : index
      %222 = vector.load %arg13[%c0_107, %c0_108] : memref<1x32xf32, #tpu.memory_space<vmem>>, vector<1x32xf32>
      %223 = vector.broadcast %222 : vector<1x32xf32> to vector<8x32xf32>
      %224 = arith.addf %221, %223 : vector<8x32xf32>
      %c0_109 = arith.constant 0 : index
      %c0_110 = arith.constant 0 : index
      %225 = vector.load %arg25[%c0_109, %c0_110] : memref<8x32xf32, #tpu.memory_space<vmem>>, vector<8x32xf32>
      tpu.vector_store %arg25[%c0_109, %c0_110], %219 {strides = array<i32>} : memref<8x32xf32, #tpu.memory_space<vmem>>, vector<8x32xf32>,
      %c0_111 = arith.constant 0 : index
      %c0_112 = arith.constant 0 : index
      %226 = vector.load %arg26[%c0_111, %c0_112] : memref<8x32xf32, #tpu.memory_space<vmem>>, vector<8x32xf32>
      tpu.vector_store %arg26[%c0_111, %c0_112], %224 {strides = array<i32>} : memref<8x32xf32, #tpu.memory_space<vmem>>, vector<8x32xf32>,
    } else {
    }
    %c0_4 = arith.constant 0 : index
    %c0_5 = arith.constant 0 : index
    %c0_6 = arith.constant 0 : index
    %5 = vector.load %arg2[%c0_4, %c0_5, %c0_6] : memref<1x8x32xf32, #tpu.memory_space<vmem>>, vector<1x8x32xf32>
    %6 = vector.shape_cast %5 : vector<1x8x32xf32> to vector<8x32xf32>
    %c0_7 = arith.constant 0 : index
    %c0_8 = arith.constant 0 : index
    %c0_9 = arith.constant 0 : index
    %7 = vector.load %arg4[%c0_7, %c0_8, %c0_9] : memref<1x1x8xf32, #tpu.memory_space<vmem>>, vector<1x1x8xf32>
    %8 = vector.shape_cast %7 : vector<1x1x8xf32> to vector<1x8xf32>
    %cst = arith.constant 5.000000e-01 : f32
    %9 = vector.broadcast %cst : f32 to vector<1x8xf32>
    %10 = arith.cmpf ogt, %8, %9 : vector<1x8xf32>
    %cst_10 = arith.constant 0.000000e+00 : f32
    %cst_11 = arith.constant -1.000000e+09 : f32
    %11 = vector.broadcast %cst_10 : f32 to vector<1x8xf32>
    %12 = vector.broadcast %cst_11 : f32 to vector<1x8xf32>
    %13 = arith.select %10, %11, %12 : vector<1x8xi1>, vector<1x8xf32>
    %cst_12 = arith.constant dense<0.000000e+00> : vector<8xf32>
    %14 = vector.multi_reduction <add>, %6, %cst_12 [1] : vector<8x32xf32> to vector<8xf32>
    %15 = vector.shape_cast %14 : vector<8xf32> to vector<8x1xf32>
    %cst_13 = arith.constant 3.200000e+01 : f32
    %16 = vector.broadcast %cst_13 : f32 to vector<8x1xf32>
    %17 = arith.divf %15, %16 : vector<8x1xf32>
    %18 = vector.broadcast %17 : vector<8x1xf32> to vector<8x32xf32>
    %19 = arith.subf %6, %18 : vector<8x32xf32>
    %20 = arith.mulf %19, %19 : vector<8x32xf32>
    %cst_14 = arith.constant dense<0.000000e+00> : vector<8xf32>
    %21 = vector.multi_reduction <add>, %20, %cst_14 [1] : vector<8x32xf32> to vector<8xf32>
    %22 = vector.shape_cast %21 : vector<8xf32> to vector<8x1xf32>
    %cst_15 = arith.constant 3.200000e+01 : f32
    %23 = vector.broadcast %cst_15 : f32 to vector<8x1xf32>
    %24 = arith.divf %22, %23 : vector<8x1xf32>
    %cst_16 = arith.constant 9.99999974E-6 : f32
    %25 = vector.broadcast %cst_16 : f32 to vector<8x1xf32>
    %26 = arith.addf %24, %25 : vector<8x1xf32>
    %27 = math.rsqrt %26 : vector<8x1xf32>
    %28 = vector.broadcast %27 : vector<8x1xf32> to vector<8x32xf32>
    %29 = arith.mulf %19, %28 : vector<8x32xf32>
    %30 = vector.broadcast %0 : vector<1x32xf32> to vector<8x32xf32>
    %31 = arith.mulf %29, %30 : vector<8x32xf32>
    %32 = vector.broadcast %1 : vector<1x32xf32> to vector<8x32xf32>
    %33 = arith.addf %31, %32 : vector<8x32xf32>
    %c0_17 = arith.constant 0 : index
    %c0_18 = arith.constant 0 : index
    %34 = vector.load %arg8[%c0_17, %c0_18] : memref<32x32xf32, #tpu.memory_space<vmem>>, vector<32x32xf32>
    %cst_19 = arith.constant dense<0.000000e+00> : vector<8x32xf32>
    %35 = tpu.matmul %33, %34, %cst_19 {dimension_numbers = #tpu.dot_dimension_numbers<[1], [0], [0], [1], [0, 0, 1, 1], [], []>} : vector<8x32xf32>, vector<32x32xf32>, vector<8x32xf32> -> vector<8x32xf32>
    %c0_20 = arith.constant 0 : index
    %c0_21 = arith.constant 0 : index
    %36 = vector.load %arg11[%c0_20, %c0_21] : memref<1x32xf32, #tpu.memory_space<vmem>>, vector<1x32xf32>
    %37 = vector.broadcast %36 : vector<1x32xf32> to vector<8x32xf32>
    %38 = arith.addf %35, %37 : vector<8x32xf32>
    %c0_22 = arith.constant 0 : index
    %c0_23 = arith.constant 0 : index
    %39 = vector.load %arg25[%c0_22, %c0_23] : memref<8x32xf32, #tpu.memory_space<vmem>>, vector<8x32xf32>
    %c0_24 = arith.constant 0 : index
    %c0_25 = arith.constant 0 : index
    %40 = vector.load %arg26[%c0_24, %c0_25] : memref<8x32xf32, #tpu.memory_space<vmem>>, vector<8x32xf32>
    %cst_26 = arith.constant 0.000000e+00 : f32
    %41 = vector.broadcast %cst_26 : f32 to vector<8x32xf32>
    %42 = vector.extract_strided_slice %38 {offsets = [0, 0], sizes = [8, 8], strides = [1, 1]} : vector<8x32xf32> to vector<8x8xf32>
    %43 = vector.extract_strided_slice %39 {offsets = [0, 0], sizes = [8, 8], strides = [1, 1]} : vector<8x32xf32> to vector<8x8xf32>
    %44 = vector.extract_strided_slice %40 {offsets = [0, 0], sizes = [8, 8], strides = [1, 1]} : vector<8x32xf32> to vector<8x8xf32>
    %cst_27 = arith.constant dense<0.000000e+00> : vector<8x8xf32>
    %45 = tpu.matmul %42, %43, %cst_27 {dimension_numbers = #tpu.dot_dimension_numbers<[1], [1], [0], [0], [0, 0, 1, 0], [], []>} : vector<8x8xf32>, vector<8x8xf32>, vector<8x8xf32> -> vector<8x8xf32>
    %cst_28 = arith.constant 0.353553385 : f32
    %46 = vector.broadcast %cst_28 : f32 to vector<8x8xf32>
    %47 = arith.mulf %45, %46 : vector<8x8xf32>
    %48 = vector.broadcast %13 : vector<1x8xf32> to vector<8x8xf32>
    %49 = arith.addf %47, %48 : vector<8x8xf32>
    %cst_29 = arith.constant dense<0xFF800000> : vector<8xf32>
    %50 = vector.multi_reduction <maximumf>, %49, %cst_29 [1] : vector<8x8xf32> to vector<8xf32>
    %51 = vector.shape_cast %50 : vector<8xf32> to vector<8x1xf32>
    %52 = vector.broadcast %51 : vector<8x1xf32> to vector<8x8xf32>
    %53 = arith.subf %49, %52 : vector<8x8xf32>
    %54 = math.exp %53 : vector<8x8xf32>
    %cst_30 = arith.constant dense<0.000000e+00> : vector<8xf32>
    %55 = vector.multi_reduction <add>, %54, %cst_30 [1] : vector<8x8xf32> to vector<8xf32>
    %56 = vector.shape_cast %55 : vector<8xf32> to vector<8x1xf32>
    %57 = tpu.reciprocal %56 {approx = true} : vector<8x1xf32> -> vector<8x1xf32>
    %58 = vector.broadcast %57 : vector<8x1xf32> to vector<8x8xf32>
    %59 = arith.mulf %54, %58 : vector<8x8xf32>
    %cst_31 = arith.constant dense<0.000000e+00> : vector<8x8xf32>
    %60 = tpu.matmul %59, %44, %cst_31 {dimension_numbers = #tpu.dot_dimension_numbers<[1], [0], [0], [1], [0, 0, 1, 1], [], []>} : vector<8x8xf32>, vector<8x8xf32>, vector<8x8xf32> -> vector<8x8xf32>
    %c0_32 = arith.constant 0 : index
    %c0_33 = arith.constant 0 : index
    %61 = vector.load %arg14[%c0_32, %c0_33] : memref<32x32xf32, #tpu.memory_space<vmem>>, vector<8x32xf32>
    %cst_34 = arith.constant dense<0.000000e+00> : vector<8x32xf32>
    %62 = tpu.matmul %60, %61, %cst_34 {dimension_numbers = #tpu.dot_dimension_numbers<[1], [0], [0], [1], [0, 0, 1, 1], [], []>} : vector<8x8xf32>, vector<8x32xf32>, vector<8x32xf32> -> vector<8x32xf32>
    %63 = arith.addf %41, %62 : vector<8x32xf32>
    %64 = vector.extract_strided_slice %38 {offsets = [0, 8], sizes = [8, 8], strides = [1, 1]} : vector<8x32xf32> to vector<8x8xf32>
    %65 = vector.extract_strided_slice %39 {offsets = [0, 8], sizes = [8, 8], strides = [1, 1]} : vector<8x32xf32> to vector<8x8xf32>
    %66 = vector.extract_strided_slice %40 {offsets = [0, 8], sizes = [8, 8], strides = [1, 1]} : vector<8x32xf32> to vector<8x8xf32>
    %cst_35 = arith.constant dense<0.000000e+00> : vector<8x8xf32>
    %67 = tpu.matmul %64, %65, %cst_35 {dimension_numbers = #tpu.dot_dimension_numbers<[1], [1], [0], [0], [0, 0, 1, 0], [], []>} : vector<8x8xf32>, vector<8x8xf32>, vector<8x8xf32> -> vector<8x8xf32>
    %cst_36 = arith.constant 0.353553385 : f32
    %68 = vector.broadcast %cst_36 : f32 to vector<8x8xf32>
    %69 = arith.mulf %67, %68 : vector<8x8xf32>
    %70 = vector.broadcast %13 : vector<1x8xf32> to vector<8x8xf32>
    %71 = arith.addf %69, %70 : vector<8x8xf32>
    %cst_37 = arith.constant dense<0xFF800000> : vector<8xf32>
    %72 = vector.multi_reduction <maximumf>, %71, %cst_37 [1] : vector<8x8xf32> to vector<8xf32>
    %73 = vector.shape_cast %72 : vector<8xf32> to vector<8x1xf32>
    %74 = vector.broadcast %73 : vector<8x1xf32> to vector<8x8xf32>
    %75 = arith.subf %71, %74 : vector<8x8xf32>
    %76 = math.exp %75 : vector<8x8xf32>
    %cst_38 = arith.constant dense<0.000000e+00> : vector<8xf32>
    %77 = vector.multi_reduction <add>, %76, %cst_38 [1] : vector<8x8xf32> to vector<8xf32>
    %78 = vector.shape_cast %77 : vector<8xf32> to vector<8x1xf32>
    %79 = tpu.reciprocal %78 {approx = true} : vector<8x1xf32> -> vector<8x1xf32>
    %80 = vector.broadcast %79 : vector<8x1xf32> to vector<8x8xf32>
    %81 = arith.mulf %76, %80 : vector<8x8xf32>
    %cst_39 = arith.constant dense<0.000000e+00> : vector<8x8xf32>
    %82 = tpu.matmul %81, %66, %cst_39 {dimension_numbers = #tpu.dot_dimension_numbers<[1], [0], [0], [1], [0, 0, 1, 1], [], []>} : vector<8x8xf32>, vector<8x8xf32>, vector<8x8xf32> -> vector<8x8xf32>
    %c8 = arith.constant 8 : index
    %c0_40 = arith.constant 0 : index
    %83 = vector.load %arg14[%c8, %c0_40] : memref<32x32xf32, #tpu.memory_space<vmem>>, vector<8x32xf32>
    %cst_41 = arith.constant dense<0.000000e+00> : vector<8x32xf32>
    %84 = tpu.matmul %82, %83, %cst_41 {dimension_numbers = #tpu.dot_dimension_numbers<[1], [0], [0], [1], [0, 0, 1, 1], [], []>} : vector<8x8xf32>, vector<8x32xf32>, vector<8x32xf32> -> vector<8x32xf32>
    %85 = arith.addf %63, %84 : vector<8x32xf32>
    %86 = vector.extract_strided_slice %38 {offsets = [0, 16], sizes = [8, 8], strides = [1, 1]} : vector<8x32xf32> to vector<8x8xf32>
    %87 = vector.extract_strided_slice %39 {offsets = [0, 16], sizes = [8, 8], strides = [1, 1]} : vector<8x32xf32> to vector<8x8xf32>
    %88 = vector.extract_strided_slice %40 {offsets = [0, 16], sizes = [8, 8], strides = [1, 1]} : vector<8x32xf32> to vector<8x8xf32>
    %cst_42 = arith.constant dense<0.000000e+00> : vector<8x8xf32>
    %89 = tpu.matmul %86, %87, %cst_42 {dimension_numbers = #tpu.dot_dimension_numbers<[1], [1], [0], [0], [0, 0, 1, 0], [], []>} : vector<8x8xf32>, vector<8x8xf32>, vector<8x8xf32> -> vector<8x8xf32>
    %cst_43 = arith.constant 0.353553385 : f32
    %90 = vector.broadcast %cst_43 : f32 to vector<8x8xf32>
    %91 = arith.mulf %89, %90 : vector<8x8xf32>
    %92 = vector.broadcast %13 : vector<1x8xf32> to vector<8x8xf32>
    %93 = arith.addf %91, %92 : vector<8x8xf32>
    %cst_44 = arith.constant dense<0xFF800000> : vector<8xf32>
    %94 = vector.multi_reduction <maximumf>, %93, %cst_44 [1] : vector<8x8xf32> to vector<8xf32>
    %95 = vector.shape_cast %94 : vector<8xf32> to vector<8x1xf32>
    %96 = vector.broadcast %95 : vector<8x1xf32> to vector<8x8xf32>
    %97 = arith.subf %93, %96 : vector<8x8xf32>
    %98 = math.exp %97 : vector<8x8xf32>
    %cst_45 = arith.constant dense<0.000000e+00> : vector<8xf32>
    %99 = vector.multi_reduction <add>, %98, %cst_45 [1] : vector<8x8xf32> to vector<8xf32>
    %100 = vector.shape_cast %99 : vector<8xf32> to vector<8x1xf32>
    %101 = tpu.reciprocal %100 {approx = true} : vector<8x1xf32> -> vector<8x1xf32>
    %102 = vector.broadcast %101 : vector<8x1xf32> to vector<8x8xf32>
    %103 = arith.mulf %98, %102 : vector<8x8xf32>
    %cst_46 = arith.constant dense<0.000000e+00> : vector<8x8xf32>
    %104 = tpu.matmul %103, %88, %cst_46 {dimension_numbers = #tpu.dot_dimension_numbers<[1], [0], [0], [1], [0, 0, 1, 1], [], []>} : vector<8x8xf32>, vector<8x8xf32>, vector<8x8xf32> -> vector<8x8xf32>
    %c16 = arith.constant 16 : index
    %c0_47 = arith.constant 0 : index
    %105 = vector.load %arg14[%c16, %c0_47] : memref<32x32xf32, #tpu.memory_space<vmem>>, vector<8x32xf32>
    %cst_48 = arith.constant dense<0.000000e+00> : vector<8x32xf32>
    %106 = tpu.matmul %104, %105, %cst_48 {dimension_numbers = #tpu.dot_dimension_numbers<[1], [0], [0], [1], [0, 0, 1, 1], [], []>} : vector<8x8xf32>, vector<8x32xf32>, vector<8x32xf32> -> vector<8x32xf32>
    %107 = arith.addf %85, %106 : vector<8x32xf32>
    %108 = vector.extract_strided_slice %38 {offsets = [0, 24], sizes = [8, 8], strides = [1, 1]} : vector<8x32xf32> to vector<8x8xf32>
    %109 = vector.extract_strided_slice %39 {offsets = [0, 24], sizes = [8, 8], strides = [1, 1]} : vector<8x32xf32> to vector<8x8xf32>
    %110 = vector.extract_strided_slice %40 {offsets = [0, 24], sizes = [8, 8], strides = [1, 1]} : vector<8x32xf32> to vector<8x8xf32>
    %cst_49 = arith.constant dense<0.000000e+00> : vector<8x8xf32>
    %111 = tpu.matmul %108, %109, %cst_49 {dimension_numbers = #tpu.dot_dimension_numbers<[1], [1], [0], [0], [0, 0, 1, 0], [], []>} : vector<8x8xf32>, vector<8x8xf32>, vector<8x8xf32> -> vector<8x8xf32>
    %cst_50 = arith.constant 0.353553385 : f32
    %112 = vector.broadcast %cst_50 : f32 to vector<8x8xf32>
    %113 = arith.mulf %111, %112 : vector<8x8xf32>
    %114 = vector.broadcast %13 : vector<1x8xf32> to vector<8x8xf32>
    %115 = arith.addf %113, %114 : vector<8x8xf32>
    %cst_51 = arith.constant dense<0xFF800000> : vector<8xf32>
    %116 = vector.multi_reduction <maximumf>, %115, %cst_51 [1] : vector<8x8xf32> to vector<8xf32>
    %117 = vector.shape_cast %116 : vector<8xf32> to vector<8x1xf32>
    %118 = vector.broadcast %117 : vector<8x1xf32> to vector<8x8xf32>
    %119 = arith.subf %115, %118 : vector<8x8xf32>
    %120 = math.exp %119 : vector<8x8xf32>
    %cst_52 = arith.constant dense<0.000000e+00> : vector<8xf32>
    %121 = vector.multi_reduction <add>, %120, %cst_52 [1] : vector<8x8xf32> to vector<8xf32>
    %122 = vector.shape_cast %121 : vector<8xf32> to vector<8x1xf32>
    %123 = tpu.reciprocal %122 {approx = true} : vector<8x1xf32> -> vector<8x1xf32>
    %124 = vector.broadcast %123 : vector<8x1xf32> to vector<8x8xf32>
    %125 = arith.mulf %120, %124 : vector<8x8xf32>
    %cst_53 = arith.constant dense<0.000000e+00> : vector<8x8xf32>
    %126 = tpu.matmul %125, %110, %cst_53 {dimension_numbers = #tpu.dot_dimension_numbers<[1], [0], [0], [1], [0, 0, 1, 1], [], []>} : vector<8x8xf32>, vector<8x8xf32>, vector<8x8xf32> -> vector<8x8xf32>
    %c24 = arith.constant 24 : index
    %c0_54 = arith.constant 0 : index
    %127 = vector.load %arg14[%c24, %c0_54] : memref<32x32xf32, #tpu.memory_space<vmem>>, vector<8x32xf32>
    %cst_55 = arith.constant dense<0.000000e+00> : vector<8x32xf32>
    %128 = tpu.matmul %126, %127, %cst_55 {dimension_numbers = #tpu.dot_dimension_numbers<[1], [0], [0], [1], [0, 0, 1, 1], [], []>} : vector<8x8xf32>, vector<8x32xf32>, vector<8x32xf32> -> vector<8x32xf32>
    %129 = arith.addf %107, %128 : vector<8x32xf32>
    %c0_56 = arith.constant 0 : index
    %c0_57 = arith.constant 0 : index
    %130 = vector.load %arg15[%c0_56, %c0_57] : memref<1x32xf32, #tpu.memory_space<vmem>>, vector<1x32xf32>
    %131 = vector.broadcast %130 : vector<1x32xf32> to vector<8x32xf32>
    %132 = arith.addf %129, %131 : vector<8x32xf32>
    %c0_58 = arith.constant 0 : index
    %c0_59 = arith.constant 0 : index
    %133 = vector.load %arg16[%c0_58, %c0_59] : memref<1x32xf32, #tpu.memory_space<vmem>>, vector<1x32xf32>
    %134 = vector.broadcast %133 : vector<1x32xf32> to vector<8x32xf32>
    %135 = arith.mulf %134, %132 : vector<8x32xf32>
    %136 = arith.addf %6, %135 : vector<8x32xf32>
    %c0_60 = arith.constant 0 : index
    %c0_61 = arith.constant 0 : index
    %137 = vector.load %arg17[%c0_60, %c0_61] : memref<1x32xf32, #tpu.memory_space<vmem>>, vector<1x32xf32>
    %c0_62 = arith.constant 0 : index
    %c0_63 = arith.constant 0 : index
    %138 = vector.load %arg18[%c0_62, %c0_63] : memref<1x32xf32, #tpu.memory_space<vmem>>, vector<1x32xf32>
    %cst_64 = arith.constant dense<0.000000e+00> : vector<8xf32>
    %139 = vector.multi_reduction <add>, %136, %cst_64 [1] : vector<8x32xf32> to vector<8xf32>
    %140 = vector.shape_cast %139 : vector<8xf32> to vector<8x1xf32>
    %cst_65 = arith.constant 3.200000e+01 : f32
    %141 = vector.broadcast %cst_65 : f32 to vector<8x1xf32>
    %142 = arith.divf %140, %141 : vector<8x1xf32>
    %143 = vector.broadcast %142 : vector<8x1xf32> to vector<8x32xf32>
    %144 = arith.subf %136, %143 : vector<8x32xf32>
    %145 = arith.mulf %144, %144 : vector<8x32xf32>
    %cst_66 = arith.constant dense<0.000000e+00> : vector<8xf32>
    %146 = vector.multi_reduction <add>, %145, %cst_66 [1] : vector<8x32xf32> to vector<8xf32>
    %147 = vector.shape_cast %146 : vector<8xf32> to vector<8x1xf32>
    %cst_67 = arith.constant 3.200000e+01 : f32
    %148 = vector.broadcast %cst_67 : f32 to vector<8x1xf32>
    %149 = arith.divf %147, %148 : vector<8x1xf32>
    %cst_68 = arith.constant 9.99999974E-6 : f32
    %150 = vector.broadcast %cst_68 : f32 to vector<8x1xf32>
    %151 = arith.addf %149, %150 : vector<8x1xf32>
    %152 = math.rsqrt %151 : vector<8x1xf32>
    %153 = vector.broadcast %152 : vector<8x1xf32> to vector<8x32xf32>
    %154 = arith.mulf %144, %153 : vector<8x32xf32>
    %155 = vector.broadcast %137 : vector<1x32xf32> to vector<8x32xf32>
    %156 = arith.mulf %154, %155 : vector<8x32xf32>
    %157 = vector.broadcast %138 : vector<1x32xf32> to vector<8x32xf32>
    %158 = arith.addf %156, %157 : vector<8x32xf32>
    %c0_69 = arith.constant 0 : index
    %c0_70 = arith.constant 0 : index
    %159 = vector.load %arg19[%c0_69, %c0_70] : memref<32x128xf32, #tpu.memory_space<vmem>>, vector<32x128xf32>
    %cst_71 = arith.constant dense<0.000000e+00> : vector<8x128xf32>
    %160 = tpu.matmul %158, %159, %cst_71 {dimension_numbers = #tpu.dot_dimension_numbers<[1], [0], [0], [1], [0, 0, 1, 1], [], []>} : vector<8x32xf32>, vector<32x128xf32>, vector<8x128xf32> -> vector<8x128xf32>
    %c0_72 = arith.constant 0 : index
    %c0_73 = arith.constant 0 : index
    %161 = vector.load %arg20[%c0_72, %c0_73] : memref<1x128xf32, #tpu.memory_space<vmem>>, vector<1x128xf32>
    %162 = vector.broadcast %161 : vector<1x128xf32> to vector<8x128xf32>
    %163 = arith.addf %160, %162 : vector<8x128xf32>
    %164 = arith.mulf %163, %163 : vector<8x128xf32>
    %165 = arith.mulf %163, %164 : vector<8x128xf32>
    %cst_74 = arith.constant 4.471500e-02 : f32
    %166 = vector.broadcast %cst_74 : f32 to vector<8x128xf32>
    %167 = arith.mulf %166, %165 : vector<8x128xf32>
    %168 = arith.addf %163, %167 : vector<8x128xf32>
    %cst_75 = arith.constant 0.797884583 : f32
    %169 = vector.broadcast %cst_75 : f32 to vector<8x128xf32>
    %170 = arith.mulf %169, %168 : vector<8x128xf32>
    %171 = math.tanh %170 : vector<8x128xf32>
    %cst_76 = arith.constant 1.000000e+00 : f32
    %172 = vector.broadcast %cst_76 : f32 to vector<8x128xf32>
    %173 = arith.addf %172, %171 : vector<8x128xf32>
    %cst_77 = arith.constant 5.000000e-01 : f32
    %174 = vector.broadcast %cst_77 : f32 to vector<8x128xf32>
    %175 = arith.mulf %174, %173 : vector<8x128xf32>
    %176 = arith.mulf %163, %175 : vector<8x128xf32>
    %c0_78 = arith.constant 0 : index
    %c0_79 = arith.constant 0 : index
    %177 = vector.load %arg21[%c0_78, %c0_79] : memref<128x32xf32, #tpu.memory_space<vmem>>, vector<128x32xf32>
    %cst_80 = arith.constant dense<0.000000e+00> : vector<8x32xf32>
    %178 = tpu.matmul %176, %177, %cst_80 {dimension_numbers = #tpu.dot_dimension_numbers<[1], [0], [0], [1], [0, 0, 1, 1], [], []>} : vector<8x128xf32>, vector<128x32xf32>, vector<8x32xf32> -> vector<8x32xf32>
    %c0_81 = arith.constant 0 : index
    %c0_82 = arith.constant 0 : index
    %179 = vector.load %arg22[%c0_81, %c0_82] : memref<1x32xf32, #tpu.memory_space<vmem>>, vector<1x32xf32>
    %180 = vector.broadcast %179 : vector<1x32xf32> to vector<8x32xf32>
    %181 = arith.addf %178, %180 : vector<8x32xf32>
    %c0_83 = arith.constant 0 : index
    %c0_84 = arith.constant 0 : index
    %c0_85 = arith.constant 0 : index
    %182 = vector.load %arg5[%c0_83, %c0_84, %c0_85] : memref<1x8x1xf32, #tpu.memory_space<vmem>>, vector<1x8x1xf32>
    %183 = vector.shape_cast %182 : vector<1x8x1xf32> to vector<8x1xf32>
    %184 = vector.broadcast %183 : vector<8x1xf32> to vector<8x32xf32>
    %185 = arith.mulf %181, %184 : vector<8x32xf32>
    %c0_86 = arith.constant 0 : index
    %c0_87 = arith.constant 0 : index
    %186 = vector.load %arg23[%c0_86, %c0_87] : memref<1x32xf32, #tpu.memory_space<vmem>>, vector<1x32xf32>
    %187 = vector.broadcast %186 : vector<1x32xf32> to vector<8x32xf32>
    %188 = arith.mulf %187, %185 : vector<8x32xf32>
    %189 = arith.addf %136, %188 : vector<8x32xf32>
    %c0_88 = arith.constant 0 : index
    %c0_89 = arith.constant 0 : index
    %c0_90 = arith.constant 0 : index
    %190 = vector.load %arg24[%c0_88, %c0_89, %c0_90] : memref<1x8x32xf32, #tpu.memory_space<vmem>>, vector<1x8x32xf32>
    %191 = vector.shape_cast %190 : vector<1x8x32xf32> to vector<8x32xf32>
    %192 = vector.shape_cast %189 : vector<8x32xf32> to vector<1x8x32xf32>
    tpu.vector_store %arg24[%c0_88, %c0_89, %c0_90], %192 {strides = array<i32>} : memref<1x8x32xf32, #tpu.memory_space<vmem>>, vector<1x8x32xf32>,
    return
  }
  func.func @transform_0(%arg0: i32, %arg1: i32) -> (i32, i32, i32) {
    %c0_i32 = arith.constant 0 : i32
    %c0_i32_0 = arith.constant 0 : i32
    return %arg0, %arg1, %c0_i32 : i32, i32, i32
  }
  func.func @transform_1(%arg0: i32, %arg1: i32) -> (i32, i32, i32) {
    %c0_i32 = arith.constant 0 : i32
    %c0_i32_0 = arith.constant 0 : i32
    %c0_i32_1 = arith.constant 0 : i32
    return %arg0, %c0_i32, %c0_i32_0 : i32, i32, i32
  }
  func.func @transform_2(%arg0: i32, %arg1: i32) -> (i32, i32, i32) {
    %c0_i32 = arith.constant 0 : i32
    %c0_i32_0 = arith.constant 0 : i32
    %c0_i32_1 = arith.constant 0 : i32
    return %arg0, %c0_i32, %c0_i32_0 : i32, i32, i32
  }
  func.func @transform_3(%arg0: i32, %arg1: i32) -> (i32, i32, i32) {
    %c0_i32 = arith.constant 0 : i32
    %c0_i32_0 = arith.constant 0 : i32
    return %arg0, %arg1, %c0_i32 : i32, i32, i32
  }
  func.func @transform_4(%arg0: i32, %arg1: i32) -> (i32, i32) {
    %c0_i32 = arith.constant 0 : i32
    %c0_i32_0 = arith.constant 0 : i32
    %c0_i32_1 = arith.constant 0 : i32
    return %c0_i32, %c0_i32_0 : i32, i32
  }
  func.func @transform_5(%arg0: i32, %arg1: i32) -> (i32, i32) {
    %c0_i32 = arith.constant 0 : i32
    %c0_i32_0 = arith.constant 0 : i32
    %c0_i32_1 = arith.constant 0 : i32
    return %c0_i32, %c0_i32_0 : i32, i32
  }
  func.func @transform_6(%arg0: i32, %arg1: i32) -> (i32, i32) {
    %c0_i32 = arith.constant 0 : i32
    %c0_i32_0 = arith.constant 0 : i32
    %c0_i32_1 = arith.constant 0 : i32
    return %c0_i32, %c0_i32_0 : i32, i32
  }
  func.func @transform_7(%arg0: i32, %arg1: i32) -> (i32, i32) {
    %c0_i32 = arith.constant 0 : i32
    %c0_i32_0 = arith.constant 0 : i32
    %c0_i32_1 = arith.constant 0 : i32
    return %c0_i32, %c0_i32_0 : i32, i32
  }
  func.func @transform_8(%arg0: i32, %arg1: i32) -> (i32, i32) {
    %c0_i32 = arith.constant 0 : i32
    %c0_i32_0 = arith.constant 0 : i32
    %c0_i32_1 = arith.constant 0 : i32
    return %c0_i32, %c0_i32_0 : i32, i32
  }
  func.func @transform_9(%arg0: i32, %arg1: i32) -> (i32, i32) {
    %c0_i32 = arith.constant 0 : i32
    %c0_i32_0 = arith.constant 0 : i32
    %c0_i32_1 = arith.constant 0 : i32
    return %c0_i32, %c0_i32_0 : i32, i32
  }
  func.func @transform_10(%arg0: i32, %arg1: i32) -> (i32, i32) {
    %c0_i32 = arith.constant 0 : i32
    %c0_i32_0 = arith.constant 0 : i32
    %c0_i32_1 = arith.constant 0 : i32
    return %c0_i32, %c0_i32_0 : i32, i32
  }
  func.func @transform_11(%arg0: i32, %arg1: i32) -> (i32, i32) {
    %c0_i32 = arith.constant 0 : i32
    %c0_i32_0 = arith.constant 0 : i32
    %c0_i32_1 = arith.constant 0 : i32
    return %c0_i32, %c0_i32_0 : i32, i32
  }
  func.func @transform_12(%arg0: i32, %arg1: i32) -> (i32, i32) {
    %c0_i32 = arith.constant 0 : i32
    %c0_i32_0 = arith.constant 0 : i32
    %c0_i32_1 = arith.constant 0 : i32
    return %c0_i32, %c0_i32_0 : i32, i32
  }
  func.func @transform_13(%arg0: i32, %arg1: i32) -> (i32, i32) {
    %c0_i32 = arith.constant 0 : i32
    %c0_i32_0 = arith.constant 0 : i32
    %c0_i32_1 = arith.constant 0 : i32
    return %c0_i32, %c0_i32_0 : i32, i32
  }
  func.func @transform_14(%arg0: i32, %arg1: i32) -> (i32, i32) {
    %c0_i32 = arith.constant 0 : i32
    %c0_i32_0 = arith.constant 0 : i32
    %c0_i32_1 = arith.constant 0 : i32
    return %c0_i32, %c0_i32_0 : i32, i32
  }
  func.func @transform_15(%arg0: i32, %arg1: i32) -> (i32, i32) {
    %c0_i32 = arith.constant 0 : i32
    %c0_i32_0 = arith.constant 0 : i32
    %c0_i32_1 = arith.constant 0 : i32
    return %c0_i32, %c0_i32_0 : i32, i32
  }
  func.func @transform_16(%arg0: i32, %arg1: i32) -> (i32, i32) {
    %c0_i32 = arith.constant 0 : i32
    %c0_i32_0 = arith.constant 0 : i32
    %c0_i32_1 = arith.constant 0 : i32
    return %c0_i32, %c0_i32_0 : i32, i32
  }
  func.func @transform_17(%arg0: i32, %arg1: i32) -> (i32, i32) {
    %c0_i32 = arith.constant 0 : i32
    %c0_i32_0 = arith.constant 0 : i32
    %c0_i32_1 = arith.constant 0 : i32
    return %c0_i32, %c0_i32_0 : i32, i32
  }
  func.func @transform_18(%arg0: i32, %arg1: i32) -> (i32, i32) {
    %c0_i32 = arith.constant 0 : i32
    %c0_i32_0 = arith.constant 0 : i32
    %c0_i32_1 = arith.constant 0 : i32
    return %c0_i32, %c0_i32_0 : i32, i32
  }
  func.func @transform_19(%arg0: i32, %arg1: i32) -> (i32, i32) {
    %c0_i32 = arith.constant 0 : i32
    %c0_i32_0 = arith.constant 0 : i32
    %c0_i32_1 = arith.constant 0 : i32
    return %c0_i32, %c0_i32_0 : i32, i32
  }
  func.func @transform_20(%arg0: i32, %arg1: i32) -> (i32, i32) {
    %c0_i32 = arith.constant 0 : i32
    %c0_i32_0 = arith.constant 0 : i32
    %c0_i32_1 = arith.constant 0 : i32
    return %c0_i32, %c0_i32_0 : i32, i32
  }
  func.func @transform_21(%arg0: i32, %arg1: i32) -> (i32, i32) {
    %c0_i32 = arith.constant 0 : i32
    %c0_i32_0 = arith.constant 0 : i32
    %c0_i32_1 = arith.constant 0 : i32
    return %c0_i32, %c0_i32_0 : i32, i32
  }
  func.func @transform_22(%arg0: i32, %arg1: i32) -> (i32, i32, i32) {
    %c0_i32 = arith.constant 0 : i32
    %c0_i32_0 = arith.constant 0 : i32
    return %arg0, %arg1, %c0_i32 : i32, i32, i32
  }
}

</mosaic_0001>

<llo_original>
// kernel: tpu_custom_call.1
$region0: #{tpu_custom_call.1}
  #allocation0 [shape = 'u32[]', space=smem, size = 0x4, offset = 0x4, fixed_abs, tag = 'smem constant byte address 0x4 - core index']
  #allocation1 [shape = 'u32[144,128]{1,0:T(1,128)}', space=vmem, size = 0x12000, scoped, tag = 'internal scratch']
  #allocation2 [shape = 'f32[8,32]{1,0:T(8,128)}', space=vmem, size = 0x1000, scoped, tag = 'scratch operand']
  #allocation3 [shape = 'f32[8,32]{1,0:T(8,128)}', space=vmem, size = 0x1000, scoped, tag = 'scratch operand']
  %s0 = inlined_call_operand.hbm [shape: f32[2,8,32], index: 0, kind: input, shape index: {}]
  %s1 = inlined_call_operand.hbm [shape: f32[2,8,32], index: 1, kind: input, shape index: {}]
  %s2 = inlined_call_operand.hbm [shape: f32[2,1,8], index: 2, kind: input, shape index: {}]
  %s3 = inlined_call_operand.hbm [shape: f32[2,8,1], index: 3, kind: input, shape index: {}]
  %s4 = inlined_call_operand.hbm [shape: f32[1,32], index: 4, kind: input, shape index: {}]
  %s5 = inlined_call_operand.hbm [shape: f32[1,32], index: 5, kind: input, shape index: {}]
  %s6 = inlined_call_operand.hbm [shape: f32[32,32], index: 6, kind: input, shape index: {}]
  %s7 = inlined_call_operand.hbm [shape: f32[32,32], index: 7, kind: input, shape index: {}]
  %s8 = inlined_call_operand.hbm [shape: f32[32,32], index: 8, kind: input, shape index: {}]
  %s9 = inlined_call_operand.hbm [shape: f32[1,32], index: 9, kind: input, shape index: {}]
  %s10 = inlined_call_operand.hbm [shape: f32[1,32], index: 10, kind: input, shape index: {}]
  %s11 = inlined_call_operand.hbm [shape: f32[1,32], index: 11, kind: input, shape index: {}]
  %s12 = inlined_call_operand.hbm [shape: f32[32,32], index: 12, kind: input, shape index: {}]
  %s13 = inlined_call_operand.hbm [shape: f32[1,32], index: 13, kind: input, shape index: {}]
  %s14 = inlined_call_operand.hbm [shape: f32[1,32], index: 14, kind: input, shape index: {}]
  %s15 = inlined_call_operand.hbm [shape: f32[1,32], index: 15, kind: input, shape index: {}]
  %s16 = inlined_call_operand.hbm [shape: f32[1,32], index: 16, kind: input, shape index: {}]
  %s17 = inlined_call_operand.hbm [shape: f32[32,128], index: 17, kind: input, shape index: {}]
  %s18 = inlined_call_operand.hbm [shape: f32[1,128], index: 18, kind: input, shape index: {}]
  %s19 = inlined_call_operand.hbm [shape: f32[128,32], index: 19, kind: input, shape index: {}]
  %s20 = inlined_call_operand.hbm [shape: f32[1,32], index: 20, kind: input, shape index: {}]
  %s21 = inlined_call_operand.hbm [shape: f32[1,32], index: 21, kind: input, shape index: {}]
  %s22 = inlined_call_operand.hbm [shape: f32[2,8,32], index: 22, kind: output, shape index: {}]
  %s23 = sld [smem:[#allocation0]]
  $region213: #{tpu_custom_call.1} parent=0
    _
  %s25 = ssub.s32 1, %s23
  %s26 = scalar_select 0, %s25, %s23
  $region1: #{tpu_custom_call.1} parent=0
    #allocation4 [shape = 'u8[8192]{0}', space=vmem, size = 0x2000, scoped, tag = 'input window, operand 0']
    #allocation5 [shape = 's32[2]{0}', space=sflag, size = 0x8, scoped, tag = 'scoped memory for tpu_custom_call.1']
    #allocation6 [shape = 's32[2]{0}', space=sflag, size = 0x8, scoped, tag = 'scoped memory for tpu_custom_call.1']
    #allocation7 [shape = 'u8[8192]{0}', space=vmem, size = 0x2000, scoped, tag = 'input window, operand 1']
    #allocation8 [shape = 's32[2]{0}', space=sflag, size = 0x8, scoped, tag = 'scoped memory for tpu_custom_call.1']
    #allocation9 [shape = 'u8[1024]{0}', space=vmem, size = 0x400, scoped, tag = 'input window, operand 2']
    #allocation10 [shape = 'u8[8192]{0}', space=vmem, size = 0x2000, scoped, tag = 'input window, operand 3']
    #allocation11 [shape = 's32[2]{0}', space=sflag, size = 0x8, scoped, tag = 'scoped memory for tpu_custom_call.1']
    #allocation12 [shape = 'u8[512]{0}', space=vmem, size = 0x400, scoped, tag = 'input window, operand 4, single buffered']
    #allocation13 [shape = 'u8[512]{0}', space=vmem, size = 0x400, scoped, tag = 'input window, operand 5, single buffered']
    #allocation14 [shape = 's32[1]{0}', space=sflag, size = 0x4, scoped, tag = 'scoped memory for tpu_custom_call.1']
    #allocation15 [shape = 'u8[16384]{0}', space=vmem, size = 0x4000, scoped, tag = 'input window, operand 6, single buffered']
    #allocation16 [shape = 'u8[16384]{0}', space=vmem, size = 0x4000, scoped, tag = 'input window, operand 7, single buffered']
    #allocation17 [shape = 's32[1]{0}', space=sflag, size = 0x4, scoped, tag = 'scoped memory for tpu_custom_call.1']
    #allocation18 [shape = 'u8[16384]{0}', space=vmem, size = 0x4000, scoped, tag = 'input window, operand 8, single buffered']
    #allocation19 [shape = 'u8[512]{0}', space=vmem, size = 0x400, scoped, tag = 'input window, operand 9, single buffered']
    #allocation20 [shape = 's32[1]{0}', space=sflag, size = 0x4, scoped, tag = 'scoped memory for tpu_custom_call.1']
    #allocation21 [shape = 'u8[512]{0}', space=vmem, size = 0x400, scoped, tag = 'input window, operand 10, single buffered']
    #allocation22 [shape = 'u8[512]{0}', space=vmem, size = 0x400, scoped, tag = 'input window, operand 11, single buffered']
    #allocation23 [shape = 's32[1]{0}', space=sflag, size = 0x4, scoped, tag = 'scoped memory for tpu_custom_call.1']
    #allocation24 [shape = 'u8[16384]{0}', space=vmem, size = 0x4000, scoped, tag = 'input window, operand 12, single buffered']
    #allocation25 [shape = 'u8[512]{0}', space=vmem, size = 0x400, scoped, tag = 'input window, operand 13, single buffered']
    #allocation26 [shape = 's32[1]{0}', space=sflag, size = 0x4, scoped, tag = 'scoped memory for tpu_custom_call.1']
    #allocation27 [shape = 'u8[512]{0}', space=vmem, size = 0x400, scoped, tag = 'input window, operand 14, single buffered']
    #allocation28 [shape = 'u8[512]{0}', space=vmem, size = 0x400, scoped, tag = 'input window, operand 15, single buffered']
    #allocation29 [shape = 's32[1]{0}', space=sflag, size = 0x4, scoped, tag = 'scoped memory for tpu_custom_call.1']
    #allocation30 [shape = 'u8[512]{0}', space=vmem, size = 0x400, scoped, tag = 'input window, operand 16, single buffered']
    #allocation31 [shape = 'u8[16384]{0}', space=vmem, size = 0x4000, scoped, tag = 'input window, operand 17, single buffered']
    #allocation32 [shape = 's32[1]{0}', space=sflag, size = 0x4, scoped, tag = 'scoped memory for tpu_custom_call.1']
    #allocation33 [shape = 'u8[512]{0}', space=vmem, size = 0x400, scoped, tag = 'input window, operand 18, single buffered']
    #allocation34 [shape = 'u8[65536]{0}', space=vmem, size = 0x10000, scoped, tag = 'input window, operand 19, single buffered']
    #allocation35 [shape = 's32[1]{0}', space=sflag, size = 0x4, scoped, tag = 'scoped memory for tpu_custom_call.1']
    #allocation36 [shape = 'u8[512]{0}', space=vmem, size = 0x400, scoped, tag = 'input window, operand 20, single buffered']
    #allocation37 [shape = 'u8[512]{0}', space=vmem, size = 0x400, scoped, tag = 'input window, operand 21, single buffered']
    #allocation38 [shape = 's32[1]{0}', space=sflag, size = 0x4, scoped, tag = 'scoped memory for tpu_custom_call.1']
    #allocation39 [shape = 'u8[8192]{0}', space=vmem, size = 0x2000, scoped, tag = 'output window, operand 0']
    %27 = vsyncpa [#allocation5], 0
    %s28 = scalar_lea.sflag [#allocation5], 1
    %29 = vsyncpa %s28, 0
    %30 = vsyncpa [#allocation8], 0
    %s31 = scalar_lea.sflag [#allocation8], 1
    %32 = vsyncpa %s31, 0
    %33 = vsyncpa [#allocation11], 0
    %s34 = scalar_lea.sflag [#allocation11], 1
    %35 = vsyncpa %s34, 0
    %36 = vsyncpa [#allocation14], 0
    %37 = vsyncpa [#allocation17], 0
    %38 = vsyncpa [#allocation20], 0
    %39 = vsyncpa [#allocation23], 0
    %40 = vsyncpa [#allocation26], 0
    %41 = vsyncpa [#allocation29], 0
    %42 = vsyncpa [#allocation32], 0
    %43 = vsyncpa [#allocation35], 0
    %44 = vsyncpa [#allocation38], 0
    %45 = vsyncpa [#allocation6], 0
    %s46 = scalar_lea.sflag [#allocation6], 1
    %47 = vsyncpa %s46, 0
    loop: start=0, step=1, limit=4
    $region2: #{tpu_custom_call.1} parent=1 // loop_pre_header
      _
    $region3: #{tpu_custom_call.1} parent=1 // loop_header
      %s49 = sphi 0, %s53
      %p50 = scmp.ge.s32.totalorder %s49, 4
      %s56 = sphi 0, %s68
      %s57 = sphi 0, %s64
      %s58 = sphi 0, %s56
      %s59 = sphi 0, %s57
      %s60 = sphi 0, %s58
      %s61 = sphi 0, %s59
      %s73 = sphi 0, %s75
      %s76 = sphi 0, %s73
      %s77 = sphi 0, %s76
      %s93 = sphi 0, %s77
      %s99 = sphi 0, %s101
      %s102 = sphi 0, %s99
      %s103 = sphi 0, %s102
      %s119 = sphi 0, %s103
      %s125 = sphi 0, %s127
      %s128 = sphi 0, %s125
      %s129 = sphi 0, %s128
      %s145 = sphi 0, %s129
      %s153 = sphi 0, %s155
      %s156 = sphi 0, %s153
      %s157 = sphi 0, %s156
      %s173 = sphi 0, %s157
      %s177 = sphi 0, %s177
      %s179 = sphi 0, %s177
      %s180 = sphi 0, %s179
      %s194 = sphi 0, %s180
      %s198 = sphi 0, %s198
      %s200 = sphi 0, %s198
      %s201 = sphi 0, %s200
      %s215 = sphi 0, %s201
      %s219 = sphi 0, %s219
      %s221 = sphi 0, %s219
      %s222 = sphi 0, %s221
      %s236 = sphi 0, %s222
      %s240 = sphi 0, %s240
      %s242 = sphi 0, %s240
      %s243 = sphi 0, %s242
      %s257 = sphi 0, %s243
      %s261 = sphi 0, %s261
      %s263 = sphi 0, %s261
      %s264 = sphi 0, %s263
      %s278 = sphi 0, %s264
      %s282 = sphi 0, %s282
      %s284 = sphi 0, %s282
      %s285 = sphi 0, %s284
      %s299 = sphi 0, %s285
      %s303 = sphi 0, %s303
      %s305 = sphi 0, %s303
      %s306 = sphi 0, %s305
      %s320 = sphi 0, %s306
      %s324 = sphi 0, %s324
      %s326 = sphi 0, %s324
      %s327 = sphi 0, %s326
      %s341 = sphi 0, %s327
      %s345 = sphi 0, %s345
      %s347 = sphi 0, %s345
      %s348 = sphi 0, %s347
      %s362 = sphi 0, %s348
      %s366 = sphi 0, %s366
      %s368 = sphi 0, %s366
      %s369 = sphi 0, %s368
      %s383 = sphi 0, %s369
      %s387 = sphi 0, %s387
      %s389 = sphi 0, %s387
      %s390 = sphi 0, %s389
      %s404 = sphi 0, %s390
      %s408 = sphi 0, %s408
      %s410 = sphi 0, %s408
      %s411 = sphi 0, %s410
      %s425 = sphi 0, %s411
      %s429 = sphi 0, %s429
      %s431 = sphi 0, %s429
      %s432 = sphi 0, %s431
      %s446 = sphi 0, %s432
      %s450 = sphi 0, %s450
      %s452 = sphi 0, %s450
      %s453 = sphi 0, %s452
      %s467 = sphi 0, %s453
      %s471 = sphi 0, %s471
      %s473 = sphi 0, %s471
      %s474 = sphi 0, %s473
      %s488 = sphi 0, %s474
      %s492 = sphi 0, %s492
      %s494 = sphi 0, %s492
      %s495 = sphi 0, %s494
      %s509 = sphi 0, %s495
      %s513 = sphi 0, %s513
      %s515 = sphi 0, %s513
      %s516 = sphi 0, %s515
      %s530 = sphi 0, %s516
      %s534 = sphi 0, %s534
      %s536 = sphi 0, %s534
      %s537 = sphi 0, %s536
      %s551 = sphi 0, %s537
      %s559 = sphi 0, %s561
      %s562 = sphi 0, %s559
      %s563 = sphi 0, %s562
      %s579 = sphi 0, %s563
    $region4: #{tpu_custom_call.1} parent=1 // loop_header_branch
      %52 = sbr.rel (%p50) target = $region8
    $region5: #{tpu_custom_call.1} parent=1 // loop_body
      %s54 = ssub.s32 %s49, 1
      %s55 = ssub.s32 %s49, 2
      %s62 = sadd.s32 1, %s57
      %p63 = scmp.ge.s32.totalorder %s62, 1
      %s64 = scalar_select %p63, 0, %s62
      %s65 = sadd.s32 1, %s56
      %s66 = scalar_select %p63, %s65, %s56
      %p67 = scmp.ge.s32.totalorder %s66, 2
      %s68 = scalar_select %p67, 0, %s66
      %s69 = ssub.s32 %s56, %s68
      %s70 = ssub.s32 %s57, %s64
      %s71 = sor.u32 %s69, %s70
      %p72 = scmp.eq.s32.totalorder %s71, 0
      %s74 = sadd.s32 %s73, 1
      %s75 = scalar_select %p72, %s73, %s74
      %p78 = pneg %p72
      %p79 = scmp.eq.s32.totalorder %s49, 1
      %p80 = por %p78, %p79
      %p81 = scmp.ne.s32.totalorder %s73, %s76
      %p82 = scmp.eq.s32.totalorder %s49, 0
      %p83 = por %p81, %p82
      %p84 = scmp.ne.s32.totalorder %s73, %s76
      %p85 = scmp.eq.s32.totalorder %s54, 1
      %p86 = por %p84, %p85
      %p87 = scmp.ne.s32.totalorder %s76, %s77
      %p88 = scmp.eq.s32.totalorder %s54, 0
      %p89 = por %p87, %p88
      %p90 = scmp.ne.s32.totalorder %s76, %s77
      %p91 = scmp.eq.s32.totalorder %s55, 1
      %p92 = por %p90, %p91
      %p94 = scmp.ne.s32.totalorder %s77, %s93
      %p95 = scmp.eq.s32.totalorder %s55, 0
      %p96 = por %p94, %p95
      %s97 = ssub.s32 %s56, %s68
      %p98 = scmp.eq.s32.totalorder %s97, 0
      %s100 = sadd.s32 %s99, 1
      %s101 = scalar_select %p98, %s99, %s100
      %p104 = pneg %p98
      %p105 = scmp.eq.s32.totalorder %s49, 1
      %p106 = por %p104, %p105
      %p107 = scmp.ne.s32.totalorder %s99, %s102
      %p108 = scmp.eq.s32.totalorder %s49, 0
      %p109 = por %p107, %p108
      %p110 = scmp.ne.s32.totalorder %s99, %s102
      %p111 = scmp.eq.s32.totalorder %s54, 1
      %p112 = por %p110, %p111
      %p113 = scmp.ne.s32.totalorder %s102, %s103
      %p114 = scmp.eq.s32.totalorder %s54, 0
      %p115 = por %p113, %p114
      %p116 = scmp.ne.s32.totalorder %s102, %s103
      %p117 = scmp.eq.s32.totalorder %s55, 1
      %p118 = por %p116, %p117
      %p120 = scmp.ne.s32.totalorder %s103, %s119
      %p121 = scmp.eq.s32.totalorder %s55, 0
      %p122 = por %p120, %p121
      %s123 = ssub.s32 %s56, %s68
      %p124 = scmp.eq.s32.totalorder %s123, 0
      %s126 = sadd.s32 %s125, 1
      %s127 = scalar_select %p124, %s125, %s126
      %p130 = pneg %p124
      %p131 = scmp.eq.s32.totalorder %s49, 1
      %p132 = por %p130, %p131
      %p133 = scmp.ne.s32.totalorder %s125, %s128
      %p134 = scmp.eq.s32.totalorder %s49, 0
      %p135 = por %p133, %p134
      %p136 = scmp.ne.s32.totalorder %s125, %s128
      %p137 = scmp.eq.s32.totalorder %s54, 1
      %p138 = por %p136, %p137
      %p139 = scmp.ne.s32.totalorder %s128, %s129
      %p140 = scmp.eq.s32.totalorder %s54, 0
      %p141 = por %p139, %p140
      %p142 = scmp.ne.s32.totalorder %s128, %s129
      %p143 = scmp.eq.s32.totalorder %s55, 1
      %p144 = por %p142, %p143
      %p146 = scmp.ne.s32.totalorder %s129, %s145
      %p147 = scmp.eq.s32.totalorder %s55, 0
      %p148 = por %p146, %p147
      %s149 = ssub.s32 %s56, %s68
      %s150 = ssub.s32 %s57, %s64
      %s151 = sor.u32 %s149, %s150
      %p152 = scmp.eq.s32.totalorder %s151, 0
      %s154 = sadd.s32 %s153, 1
      %s155 = scalar_select %p152, %s153, %s154
      %p158 = pneg %p152
      %p159 = scmp.eq.s32.totalorder %s49, 1
      %p160 = por %p158, %p159
      %p161 = scmp.ne.s32.totalorder %s153, %s156
      %p162 = scmp.eq.s32.totalorder %s49, 0
      %p163 = por %p161, %p162
      %p164 = scmp.ne.s32.totalorder %s153, %s156
      %p165 = scmp.eq.s32.totalorder %s54, 1
      %p166 = por %p164, %p165
      %p167 = scmp.ne.s32.totalorder %s156, %s157
      %p168 = scmp.eq.s32.totalorder %s54, 0
      %p169 = por %p167, %p168
      %p170 = scmp.ne.s32.totalorder %s156, %s157
      %p171 = scmp.eq.s32.totalorder %s55, 1
      %p172 = por %p170, %p171
      %p174 = scmp.ne.s32.totalorder %s157, %s173
      %p175 = scmp.eq.s32.totalorder %s55, 0
      %p176 = por %p174, %p175
      %s178 = sadd.s32 %s177, 1
      %p181 = scmp.eq.s32.totalorder %s49, 1
      %p182 = scmp.ne.s32.totalorder %s177, %s179
      %p183 = scmp.eq.s32.totalorder %s49, 0
      %p184 = por %p182, %p183
      %p185 = scmp.ne.s32.totalorder %s177, %s179
      %p186 = scmp.eq.s32.totalorder %s54, 1
      %p187 = por %p185, %p186
      %p188 = scmp.ne.s32.totalorder %s179, %s180
      %p189 = scmp.eq.s32.totalorder %s54, 0
      %p190 = por %p188, %p189
      %p191 = scmp.ne.s32.totalorder %s179, %s180
      %p192 = scmp.eq.s32.totalorder %s55, 1
      %p193 = por %p191, %p192
      %p195 = scmp.ne.s32.totalorder %s180, %s194
      %p196 = scmp.eq.s32.totalorder %s55, 0
      %p197 = por %p195, %p196
      %s199 = sadd.s32 %s198, 1
      %p202 = scmp.eq.s32.totalorder %s49, 1
      %p203 = scmp.ne.s32.totalorder %s198, %s200
      %p204 = scmp.eq.s32.totalorder %s49, 0
      %p205 = por %p203, %p204
      %p206 = scmp.ne.s32.totalorder %s198, %s200
      %p207 = scmp.eq.s32.totalorder %s54, 1
      %p208 = por %p206, %p207
      %p209 = scmp.ne.s32.totalorder %s200, %s201
      %p210 = scmp.eq.s32.totalorder %s54, 0
      %p211 = por %p209, %p210
      %p212 = scmp.ne.s32.totalorder %s200, %s201
      %p213 = scmp.eq.s32.totalorder %s55, 1
      %p214 = por %p212, %p213
      %p216 = scmp.ne.s32.totalorder %s201, %s215
      %p217 = scmp.eq.s32.totalorder %s55, 0
      %p218 = por %p216, %p217
      %s220 = sadd.s32 %s219, 1
      %p223 = scmp.eq.s32.totalorder %s49, 1
      %p224 = scmp.ne.s32.totalorder %s219, %s221
      %p225 = scmp.eq.s32.totalorder %s49, 0
      %p226 = por %p224, %p225
      %p227 = scmp.ne.s32.totalorder %s219, %s221
      %p228 = scmp.eq.s32.totalorder %s54, 1
      %p229 = por %p227, %p228
      %p230 = scmp.ne.s32.totalorder %s221, %s222
      %p231 = scmp.eq.s32.totalorder %s54, 0
      %p232 = por %p230, %p231
      %p233 = scmp.ne.s32.totalorder %s221, %s222
      %p234 = scmp.eq.s32.totalorder %s55, 1
      %p235 = por %p233, %p234
      %p237 = scmp.ne.s32.totalorder %s222, %s236
      %p238 = scmp.eq.s32.totalorder %s55, 0
      %p239 = por %p237, %p238
      %s241 = sadd.s32 %s240, 1
      %p244 = scmp.eq.s32.totalorder %s49, 1
      %p245 = scmp.ne.s32.totalorder %s240, %s242
      %p246 = scmp.eq.s32.totalorder %s49, 0
      %p247 = por %p245, %p246
      %p248 = scmp.ne.s32.totalorder %s240, %s242
      %p249 = scmp.eq.s32.totalorder %s54, 1
      %p250 = por %p248, %p249
      %p251 = scmp.ne.s32.totalorder %s242, %s243
      %p252 = scmp.eq.s32.totalorder %s54, 0
      %p253 = por %p251, %p252
      %p254 = scmp.ne.s32.totalorder %s242, %s243
      %p255 = scmp.eq.s32.totalorder %s55, 1
      %p256 = por %p254, %p255
      %p258 = scmp.ne.s32.totalorder %s243, %s257
      %p259 = scmp.eq.s32.totalorder %s55, 0
      %p260 = por %p258, %p259
      %s262 = sadd.s32 %s261, 1
      %p265 = scmp.eq.s32.totalorder %s49, 1
      %p266 = scmp.ne.s32.totalorder %s261, %s263
      %p267 = scmp.eq.s32.totalorder %s49, 0
      %p268 = por %p266, %p267
      %p269 = scmp.ne.s32.totalorder %s261, %s263
      %p270 = scmp.eq.s32.totalorder %s54, 1
      %p271 = por %p269, %p270
      %p272 = scmp.ne.s32.totalorder %s263, %s264
      %p273 = scmp.eq.s32.totalorder %s54, 0
      %p274 = por %p272, %p273
      %p275 = scmp.ne.s32.totalorder %s263, %s264
      %p276 = scmp.eq.s32.totalorder %s55, 1
      %p277 = por %p275, %p276
      %p279 = scmp.ne.s32.totalorder %s264, %s278
      %p280 = scmp.eq.s32.totalorder %s55, 0
      %p281 = por %p279, %p280
      %s283 = sadd.s32 %s282, 1
      %p286 = scmp.eq.s32.totalorder %s49, 1
      %p287 = scmp.ne.s32.totalorder %s282, %s284
      %p288 = scmp.eq.s32.totalorder %s49, 0
      %p289 = por %p287, %p288
      %p290 = scmp.ne.s32.totalorder %s282, %s284
      %p291 = scmp.eq.s32.totalorder %s54, 1
      %p292 = por %p290, %p291
      %p293 = scmp.ne.s32.totalorder %s284, %s285
      %p294 = scmp.eq.s32.totalorder %s54, 0
      %p295 = por %p293, %p294
      %p296 = scmp.ne.s32.totalorder %s284, %s285
      %p297 = scmp.eq.s32.totalorder %s55, 1
      %p298 = por %p296, %p297
      %p300 = scmp.ne.s32.totalorder %s285, %s299
      %p301 = scmp.eq.s32.totalorder %s55, 0
      %p302 = por %p300, %p301
      %s304 = sadd.s32 %s303, 1
      %p307 = scmp.eq.s32.totalorder %s49, 1
      %p308 = scmp.ne.s32.totalorder %s303, %s305
      %p309 = scmp.eq.s32.totalorder %s49, 0
      %p310 = por %p308, %p309
      %p311 = scmp.ne.s32.totalorder %s303, %s305
      %p312 = scmp.eq.s32.totalorder %s54, 1
      %p313 = por %p311, %p312
      %p314 = scmp.ne.s32.totalorder %s305, %s306
      %p315 = scmp.eq.s32.totalorder %s54, 0
      %p316 = por %p314, %p315
      %p317 = scmp.ne.s32.totalorder %s305, %s306
      %p318 = scmp.eq.s32.totalorder %s55, 1
      %p319 = por %p317, %p318
      %p321 = scmp.ne.s32.totalorder %s306, %s320
      %p322 = scmp.eq.s32.totalorder %s55, 0
      %p323 = por %p321, %p322
      %s325 = sadd.s32 %s324, 1
      %p328 = scmp.eq.s32.totalorder %s49, 1
      %p329 = scmp.ne.s32.totalorder %s324, %s326
      %p330 = scmp.eq.s32.totalorder %s49, 0
      %p331 = por %p329, %p330
      %p332 = scmp.ne.s32.totalorder %s324, %s326
      %p333 = scmp.eq.s32.totalorder %s54, 1
      %p334 = por %p332, %p333
      %p335 = scmp.ne.s32.totalorder %s326, %s327
      %p336 = scmp.eq.s32.totalorder %s54, 0
      %p337 = por %p335, %p336
      %p338 = scmp.ne.s32.totalorder %s326, %s327
      %p339 = scmp.eq.s32.totalorder %s55, 1
      %p340 = por %p338, %p339
      %p342 = scmp.ne.s32.totalorder %s327, %s341
      %p343 = scmp.eq.s32.totalorder %s55, 0
      %p344 = por %p342, %p343
      %s346 = sadd.s32 %s345, 1
      %p349 = scmp.eq.s32.totalorder %s49, 1
      %p350 = scmp.ne.s32.totalorder %s345, %s347
      %p351 = scmp.eq.s32.totalorder %s49, 0
      %p352 = por %p350, %p351
      %p353 = scmp.ne.s32.totalorder %s345, %s347
      %p354 = scmp.eq.s32.totalorder %s54, 1
      %p355 = por %p353, %p354
      %p356 = scmp.ne.s32.totalorder %s347, %s348
      %p357 = scmp.eq.s32.totalorder %s54, 0
      %p358 = por %p356, %p357
      %p359 = scmp.ne.s32.totalorder %s347, %s348
      %p360 = scmp.eq.s32.totalorder %s55, 1
      %p361 = por %p359, %p360
      %p363 = scmp.ne.s32.totalorder %s348, %s362
      %p364 = scmp.eq.s32.totalorder %s55, 0
      %p365 = por %p363, %p364
      %s367 = sadd.s32 %s366, 1
      %p370 = scmp.eq.s32.totalorder %s49, 1
      %p371 = scmp.ne.s32.totalorder %s366, %s368
      %p372 = scmp.eq.s32.totalorder %s49, 0
      %p373 = por %p371, %p372
      %p374 = scmp.ne.s32.totalorder %s366, %s368
      %p375 = scmp.eq.s32.totalorder %s54, 1
      %p376 = por %p374, %p375
      %p377 = scmp.ne.s32.totalorder %s368, %s369
      %p378 = scmp.eq.s32.totalorder %s54, 0
      %p379 = por %p377, %p378
      %p380 = scmp.ne.s32.totalorder %s368, %s369
      %p381 = scmp.eq.s32.totalorder %s55, 1
      %p382 = por %p380, %p381
      %p384 = scmp.ne.s32.totalorder %s369, %s383
      %p385 = scmp.eq.s32.totalorder %s55, 0
      %p386 = por %p384, %p385
      %s388 = sadd.s32 %s387, 1
      %p391 = scmp.eq.s32.totalorder %s49, 1
      %p392 = scmp.ne.s32.totalorder %s387, %s389
      %p393 = scmp.eq.s32.totalorder %s49, 0
      %p394 = por %p392, %p393
      %p395 = scmp.ne.s32.totalorder %s387, %s389
      %p396 = scmp.eq.s32.totalorder %s54, 1
      %p397 = por %p395, %p396
      %p398 = scmp.ne.s32.totalorder %s389, %s390
      %p399 = scmp.eq.s32.totalorder %s54, 0
      %p400 = por %p398, %p399
      %p401 = scmp.ne.s32.totalorder %s389, %s390
      %p402 = scmp.eq.s32.totalorder %s55, 1
      %p403 = por %p401, %p402
      %p405 = scmp.ne.s32.totalorder %s390, %s404
      %p406 = scmp.eq.s32.totalorder %s55, 0
      %p407 = por %p405, %p406
      %s409 = sadd.s32 %s408, 1
      %p412 = scmp.eq.s32.totalorder %s49, 1
      %p413 = scmp.ne.s32.totalorder %s408, %s410
      %p414 = scmp.eq.s32.totalorder %s49, 0
      %p415 = por %p413, %p414
      %p416 = scmp.ne.s32.totalorder %s408, %s410
      %p417 = scmp.eq.s32.totalorder %s54, 1
      %p418 = por %p416, %p417
      %p419 = scmp.ne.s32.totalorder %s410, %s411
      %p420 = scmp.eq.s32.totalorder %s54, 0
      %p421 = por %p419, %p420
      %p422 = scmp.ne.s32.totalorder %s410, %s411
      %p423 = scmp.eq.s32.totalorder %s55, 1
      %p424 = por %p422, %p423
      %p426 = scmp.ne.s32.totalorder %s411, %s425
      %p427 = scmp.eq.s32.totalorder %s55, 0
      %p428 = por %p426, %p427
      %s430 = sadd.s32 %s429, 1
      %p433 = scmp.eq.s32.totalorder %s49, 1
      %p434 = scmp.ne.s32.totalorder %s429, %s431
      %p435 = scmp.eq.s32.totalorder %s49, 0
      %p436 = por %p434, %p435
      %p437 = scmp.ne.s32.totalorder %s429, %s431
      %p438 = scmp.eq.s32.totalorder %s54, 1
      %p439 = por %p437, %p438
      %p440 = scmp.ne.s32.totalorder %s431, %s432
      %p441 = scmp.eq.s32.totalorder %s54, 0
      %p442 = por %p440, %p441
      %p443 = scmp.ne.s32.totalorder %s431, %s432
      %p444 = scmp.eq.s32.totalorder %s55, 1
      %p445 = por %p443, %p444
      %p447 = scmp.ne.s32.totalorder %s432, %s446
      %p448 = scmp.eq.s32.totalorder %s55, 0
      %p449 = por %p447, %p448
      %s451 = sadd.s32 %s450, 1
      %p454 = scmp.eq.s32.totalorder %s49, 1
      %p455 = scmp.ne.s32.totalorder %s450, %s452
      %p456 = scmp.eq.s32.totalorder %s49, 0
      %p457 = por %p455, %p456
      %p458 = scmp.ne.s32.totalorder %s450, %s452
      %p459 = scmp.eq.s32.totalorder %s54, 1
      %p460 = por %p458, %p459
      %p461 = scmp.ne.s32.totalorder %s452, %s453
      %p462 = scmp.eq.s32.totalorder %s54, 0
      %p463 = por %p461, %p462
      %p464 = scmp.ne.s32.totalorder %s452, %s453
      %p465 = scmp.eq.s32.totalorder %s55, 1
      %p466 = por %p464, %p465
      %p468 = scmp.ne.s32.totalorder %s453, %s467
      %p469 = scmp.eq.s32.totalorder %s55, 0
      %p470 = por %p468, %p469
      %s472 = sadd.s32 %s471, 1
      %p475 = scmp.eq.s32.totalorder %s49, 1
      %p476 = scmp.ne.s32.totalorder %s471, %s473
      %p477 = scmp.eq.s32.totalorder %s49, 0
      %p478 = por %p476, %p477
      %p479 = scmp.ne.s32.totalorder %s471, %s473
      %p480 = scmp.eq.s32.totalorder %s54, 1
      %p481 = por %p479, %p480
      %p482 = scmp.ne.s32.totalorder %s473, %s474
      %p483 = scmp.eq.s32.totalorder %s54, 0
      %p484 = por %p482, %p483
      %p485 = scmp.ne.s32.totalorder %s473, %s474
      %p486 = scmp.eq.s32.totalorder %s55, 1
      %p487 = por %p485, %p486
      %p489 = scmp.ne.s32.totalorder %s474, %s488
      %p490 = scmp.eq.s32.totalorder %s55, 0
      %p491 = por %p489, %p490
      %s493 = sadd.s32 %s492, 1
      %p496 = scmp.eq.s32.totalorder %s49, 1
      %p497 = scmp.ne.s32.totalorder %s492, %s494
      %p498 = scmp.eq.s32.totalorder %s49, 0
      %p499 = por %p497, %p498
      %p500 = scmp.ne.s32.totalorder %s492, %s494
      %p501 = scmp.eq.s32.totalorder %s54, 1
      %p502 = por %p500, %p501
      %p503 = scmp.ne.s32.totalorder %s494, %s495
      %p504 = scmp.eq.s32.totalorder %s54, 0
      %p505 = por %p503, %p504
      %p506 = scmp.ne.s32.totalorder %s494, %s495
      %p507 = scmp.eq.s32.totalorder %s55, 1
      %p508 = por %p506, %p507
      %p510 = scmp.ne.s32.totalorder %s495, %s509
      %p511 = scmp.eq.s32.totalorder %s55, 0
      %p512 = por %p510, %p511
      %s514 = sadd.s32 %s513, 1
      %p517 = scmp.eq.s32.totalorder %s49, 1
      %p518 = scmp.ne.s32.totalorder %s513, %s515
      %p519 = scmp.eq.s32.totalorder %s49, 0
      %p520 = por %p518, %p519
      %p521 = scmp.ne.s32.totalorder %s513, %s515
      %p522 = scmp.eq.s32.totalorder %s54, 1
      %p523 = por %p521, %p522
      %p524 = scmp.ne.s32.totalorder %s515, %s516
      %p525 = scmp.eq.s32.totalorder %s54, 0
      %p526 = por %p524, %p525
      %p527 = scmp.ne.s32.totalorder %s515, %s516
      %p528 = scmp.eq.s32.totalorder %s55, 1
      %p529 = por %p527, %p528
      %p531 = scmp.ne.s32.totalorder %s516, %s530
      %p532 = scmp.eq.s32.totalorder %s55, 0
      %p533 = por %p531, %p532
      %s535 = sadd.s32 %s534, 1
      %p538 = scmp.eq.s32.totalorder %s49, 1
      %p539 = scmp.ne.s32.totalorder %s534, %s536
      %p540 = scmp.eq.s32.totalorder %s49, 0
      %p541 = por %p539, %p540
      %p542 = scmp.ne.s32.totalorder %s534, %s536
      %p543 = scmp.eq.s32.totalorder %s54, 1
      %p544 = por %p542, %p543
      %p545 = scmp.ne.s32.totalorder %s536, %s537
      %p546 = scmp.eq.s32.totalorder %s54, 0
      %p547 = por %p545, %p546
      %p548 = scmp.ne.s32.totalorder %s536, %s537
      %p549 = scmp.eq.s32.totalorder %s55, 1
      %p550 = por %p548, %p549
      %p552 = scmp.ne.s32.totalorder %s537, %s551
      %p553 = scmp.eq.s32.totalorder %s55, 0
      %p554 = por %p552, %p553
      %s555 = ssub.s32 %s56, %s68
      %s556 = ssub.s32 %s57, %s64
      %s557 = sor.u32 %s555, %s556
      %p558 = scmp.eq.s32.totalorder %s557, 0
      %s560 = sadd.s32 %s559, 1
      %s561 = scalar_select %p558, %s559, %s560
      %p564 = pneg %p558
      %p565 = scmp.eq.s32.totalorder %s49, 1
      %p566 = por %p564, %p565
      %p567 = scmp.ne.s32.totalorder %s559, %s562
      %p568 = scmp.eq.s32.totalorder %s49, 0
      %p569 = por %p567, %p568
      %p570 = scmp.ne.s32.totalorder %s559, %s562
      %p571 = scmp.eq.s32.totalorder %s54, 1
      %p572 = por %p570, %p571
      %p573 = scmp.ne.s32.totalorder %s562, %s563
      %p574 = scmp.eq.s32.totalorder %s54, 0
      %p575 = por %p573, %p574
      %p576 = scmp.ne.s32.totalorder %s562, %s563
      %p577 = scmp.eq.s32.totalorder %s55, 1
      %p578 = por %p576, %p577
      %p580 = scmp.ne.s32.totalorder %s563, %s579
      %p581 = scmp.eq.s32.totalorder %s55, 0
      %p582 = por %p580, %p581
      %p583 = scmp.le.s32.totalorder 1, %s49
      %p584 = scmp.lt.s32.totalorder %s49, 3
      %p585 = pnand %p583, %p584
      %p586 = pneg %p585
      // Predicated region
      $region9: #{tpu_custom_call.1} parent=5 // pred_check
        _
      $region10: #{tpu_custom_call.1} parent=5 // pred_check_branch
        %588 = sbr.rel (%p585) target = $region12
      $region11: #{tpu_custom_call.1} parent=5 // pred_region
        %s589 = ssub.s32 %s49, 1
        // Predicated region
        $region13: #{tpu_custom_call.1} parent=11 // pred_check
          %p590 = pneg %p190
        $region14: #{tpu_custom_call.1} parent=11 // pred_check_branch
          %592 = sbr.rel (%p590) target = $region16
        $region15: #{tpu_custom_call.1} parent=11 // pred_region
          %s594 = ssub.s32 16, 16
          %595 = vsyncadd [#allocation11], %s594
          %s597 = sshll.u32 [#allocation12], 4
          %s598 = int_to_ptr.vmem [resolvable:$true] %s597
          %600 = dma.hbm_to_vmem [thread:$0]  %s4, 16, %s598, [#allocation11]
        $region16: #{tpu_custom_call.1} parent=11 // pred_fallthru
          _
        // Predicated region
        $region17: #{tpu_custom_call.1} parent=11 // pred_check
          %p601 = pneg %p211
        $region18: #{tpu_custom_call.1} parent=11 // pred_check_branch
          %603 = sbr.rel (%p601) target = $region20
        $region19: #{tpu_custom_call.1} parent=11 // pred_region
          %s605 = ssub.s32 16, 16
          %606 = vsyncadd [#allocation14], %s605
          %s608 = sshll.u32 [#allocation13], 4
          %s609 = int_to_ptr.vmem [resolvable:$true] %s608
          %611 = dma.hbm_to_vmem [thread:$0]  %s5, 16, %s609, [#allocation14]
        $region20: #{tpu_custom_call.1} parent=11 // pred_fallthru
          _
        // Predicated region
        $region21: #{tpu_custom_call.1} parent=11 // pred_check
          %p612 = pneg %p232
        $region22: #{tpu_custom_call.1} parent=11 // pred_check_branch
          %614 = sbr.rel (%p612) target = $region24
        $region23: #{tpu_custom_call.1} parent=11 // pred_region
          %s616 = ssub.s32 512, 512
          %617 = vsyncadd [#allocation14], %s616
          %s618 = sshll.u32 [#allocation15], 4
          %s619 = int_to_ptr.vmem [resolvable:$true] %s618
          %624 = dma.hbm_to_vmem [thread:$0]  %s6, 512, %s619, [#allocation14], 128, 128, 8
        $region24: #{tpu_custom_call.1} parent=11 // pred_fallthru
          _
        // Predicated region
        $region25: #{tpu_custom_call.1} parent=11 // pred_check
          %p625 = pneg %p253
        $region26: #{tpu_custom_call.1} parent=11 // pred_check_branch
          %627 = sbr.rel (%p625) target = $region28
        $region27: #{tpu_custom_call.1} parent=11 // pred_region
          %s629 = ssub.s32 512, 512
          %630 = vsyncadd [#allocation17], %s629
          %s631 = sshll.u32 [#allocation16], 4
          %s632 = int_to_ptr.vmem [resolvable:$true] %s631
          %637 = dma.hbm_to_vmem [thread:$0]  %s7, 512, %s632, [#allocation17], 128, 128, 8
        $region28: #{tpu_custom_call.1} parent=11 // pred_fallthru
          _
        // Predicated region
        $region29: #{tpu_custom_call.1} parent=11 // pred_check
          %p638 = pneg %p274
        $region30: #{tpu_custom_call.1} parent=11 // pred_check_branch
          %640 = sbr.rel (%p638) target = $region32
        $region31: #{tpu_custom_call.1} parent=11 // pred_region
          %s642 = ssub.s32 512, 512
          %643 = vsyncadd [#allocation17], %s642
          %s644 = sshll.u32 [#allocation18], 4
          %s645 = int_to_ptr.vmem [resolvable:$true] %s644
          %650 = dma.hbm_to_vmem [thread:$0]  %s8, 512, %s645, [#allocation17], 128, 128, 8
        $region32: #{tpu_custom_call.1} parent=11 // pred_fallthru
          _
        // Predicated region
        $region33: #{tpu_custom_call.1} parent=11 // pred_check
          %p651 = pneg %p295
        $region34: #{tpu_custom_call.1} parent=11 // pred_check_branch
          %653 = sbr.rel (%p651) target = $region36
        $region35: #{tpu_custom_call.1} parent=11 // pred_region
          %s655 = ssub.s32 16, 16
          %656 = vsyncadd [#allocation20], %s655
          %s658 = sshll.u32 [#allocation19], 4
          %s659 = int_to_ptr.vmem [resolvable:$true] %s658
          %661 = dma.hbm_to_vmem [thread:$0]  %s9, 16, %s659, [#allocation20]
        $region36: #{tpu_custom_call.1} parent=11 // pred_fallthru
          _
        // Predicated region
        $region37: #{tpu_custom_call.1} parent=11 // pred_check
          %p662 = pneg %p316
        $region38: #{tpu_custom_call.1} parent=11 // pred_check_branch
          %664 = sbr.rel (%p662) target = $region40
        $region39: #{tpu_custom_call.1} parent=11 // pred_region
          %s666 = ssub.s32 16, 16
          %667 = vsyncadd [#allocation20], %s666
          %s669 = sshll.u32 [#allocation21], 4
          %s670 = int_to_ptr.vmem [resolvable:$true] %s669
          %672 = dma.hbm_to_vmem [thread:$0]  %s10, 16, %s670, [#allocation20]
        $region40: #{tpu_custom_call.1} parent=11 // pred_fallthru
          _
        // Predicated region
        $region41: #{tpu_custom_call.1} parent=11 // pred_check
          %p673 = pneg %p337
        $region42: #{tpu_custom_call.1} parent=11 // pred_check_branch
          %675 = sbr.rel (%p673) target = $region44
        $region43: #{tpu_custom_call.1} parent=11 // pred_region
          %s677 = ssub.s32 16, 16
          %678 = vsyncadd [#allocation23], %s677
          %s680 = sshll.u32 [#allocation22], 4
          %s681 = int_to_ptr.vmem [resolvable:$true] %s680
          %683 = dma.hbm_to_vmem [thread:$0]  %s11, 16, %s681, [#allocation23]
        $region44: #{tpu_custom_call.1} parent=11 // pred_fallthru
          _
        // Predicated region
        $region45: #{tpu_custom_call.1} parent=11 // pred_check
          %p684 = pneg %p358
        $region46: #{tpu_custom_call.1} parent=11 // pred_check_branch
          %686 = sbr.rel (%p684) target = $region48
        $region47: #{tpu_custom_call.1} parent=11 // pred_region
          %s688 = ssub.s32 512, 512
          %689 = vsyncadd [#allocation23], %s688
          %s690 = sshll.u32 [#allocation24], 4
          %s691 = int_to_ptr.vmem [resolvable:$true] %s690
          %696 = dma.hbm_to_vmem [thread:$0]  %s12, 512, %s691, [#allocation23], 128, 128, 8
        $region48: #{tpu_custom_call.1} parent=11 // pred_fallthru
          _
        // Predicated region
        $region49: #{tpu_custom_call.1} parent=11 // pred_check
          %p697 = pneg %p379
        $region50: #{tpu_custom_call.1} parent=11 // pred_check_branch
          %699 = sbr.rel (%p697) target = $region52
        $region51: #{tpu_custom_call.1} parent=11 // pred_region
          %s701 = ssub.s32 16, 16
          %702 = vsyncadd [#allocation26], %s701
          %s704 = sshll.u32 [#allocation25], 4
          %s705 = int_to_ptr.vmem [resolvable:$true] %s704
          %707 = dma.hbm_to_vmem [thread:$0]  %s13, 16, %s705, [#allocation26]
        $region52: #{tpu_custom_call.1} parent=11 // pred_fallthru
          _
        // Predicated region
        $region53: #{tpu_custom_call.1} parent=11 // pred_check
          %p708 = pneg %p400
        $region54: #{tpu_custom_call.1} parent=11 // pred_check_branch
          %710 = sbr.rel (%p708) target = $region56
        $region55: #{tpu_custom_call.1} parent=11 // pred_region
          %s712 = ssub.s32 16, 16
          %713 = vsyncadd [#allocation26], %s712
          %s715 = sshll.u32 [#allocation27], 4
          %s716 = int_to_ptr.vmem [resolvable:$true] %s715
          %718 = dma.hbm_to_vmem [thread:$0]  %s14, 16, %s716, [#allocation26]
        $region56: #{tpu_custom_call.1} parent=11 // pred_fallthru
          _
        // Predicated region
        $region57: #{tpu_custom_call.1} parent=11 // pred_check
          %p719 = pneg %p421
        $region58: #{tpu_custom_call.1} parent=11 // pred_check_branch
          %721 = sbr.rel (%p719) target = $region60
        $region59: #{tpu_custom_call.1} parent=11 // pred_region
          %s723 = ssub.s32 16, 16
          %724 = vsyncadd [#allocation29], %s723
          %s726 = sshll.u32 [#allocation28], 4
          %s727 = int_to_ptr.vmem [resolvable:$true] %s726
          %729 = dma.hbm_to_vmem [thread:$0]  %s15, 16, %s727, [#allocation29]
        $region60: #{tpu_custom_call.1} parent=11 // pred_fallthru
          _
        // Predicated region
        $region61: #{tpu_custom_call.1} parent=11 // pred_check
          %p730 = pneg %p442
        $region62: #{tpu_custom_call.1} parent=11 // pred_check_branch
          %732 = sbr.rel (%p730) target = $region64
        $region63: #{tpu_custom_call.1} parent=11 // pred_region
          %s734 = ssub.s32 16, 16
          %735 = vsyncadd [#allocation29], %s734
          %s737 = sshll.u32 [#allocation30], 4
          %s738 = int_to_ptr.vmem [resolvable:$true] %s737
          %740 = dma.hbm_to_vmem [thread:$0]  %s16, 16, %s738, [#allocation29]
        $region64: #{tpu_custom_call.1} parent=11 // pred_fallthru
          _
        // Predicated region
        $region65: #{tpu_custom_call.1} parent=11 // pred_check
          %p741 = pneg %p463
        $region66: #{tpu_custom_call.1} parent=11 // pred_check_branch
          %743 = sbr.rel (%p741) target = $region68
        $region67: #{tpu_custom_call.1} parent=11 // pred_region
          %s745 = ssub.s32 512, 512
          %746 = vsyncadd [#allocation32], %s745
          %s747 = sshll.u32 [#allocation31], 4
          %s748 = int_to_ptr.vmem [resolvable:$true] %s747
          %753 = dma.hbm_to_vmem [thread:$0]  %s17, 512, %s748, [#allocation32], 128, 128, 8
        $region68: #{tpu_custom_call.1} parent=11 // pred_fallthru
          _
        // Predicated region
        $region69: #{tpu_custom_call.1} parent=11 // pred_check
          %p754 = pneg %p484
        $region70: #{tpu_custom_call.1} parent=11 // pred_check_branch
          %756 = sbr.rel (%p754) target = $region72
        $region71: #{tpu_custom_call.1} parent=11 // pred_region
          %s758 = ssub.s32 16, 16
          %759 = vsyncadd [#allocation32], %s758
          %s761 = sshll.u32 [#allocation33], 4
          %s762 = int_to_ptr.vmem [resolvable:$true] %s761
          %764 = dma.hbm_to_vmem [thread:$0]  %s18, 16, %s762, [#allocation32]
        $region72: #{tpu_custom_call.1} parent=11 // pred_fallthru
          _
        // Predicated region
        $region73: #{tpu_custom_call.1} parent=11 // pred_check
          %p765 = pneg %p505
        $region74: #{tpu_custom_call.1} parent=11 // pred_check_branch
          %767 = sbr.rel (%p765) target = $region76
        $region75: #{tpu_custom_call.1} parent=11 // pred_region
          %s769 = ssub.s32 2048, 2048
          %770 = vsyncadd [#allocation35], %s769
          %s771 = sshll.u32 [#allocation34], 4
          %s772 = int_to_ptr.vmem [resolvable:$true] %s771
          %777 = dma.hbm_to_vmem [thread:$0]  %s19, 2048, %s772, [#allocation35], 128, 128, 8
        $region76: #{tpu_custom_call.1} parent=11 // pred_fallthru
          _
        // Predicated region
        $region77: #{tpu_custom_call.1} parent=11 // pred_check
          %p778 = pneg %p526
        $region78: #{tpu_custom_call.1} parent=11 // pred_check_branch
          %780 = sbr.rel (%p778) target = $region80
        $region79: #{tpu_custom_call.1} parent=11 // pred_region
          %s782 = ssub.s32 16, 16
          %783 = vsyncadd [#allocation35], %s782
          %s785 = sshll.u32 [#allocation36], 4
          %s786 = int_to_ptr.vmem [resolvable:$true] %s785
          %788 = dma.hbm_to_vmem [thread:$0]  %s20, 16, %s786, [#allocation35]
        $region80: #{tpu_custom_call.1} parent=11 // pred_fallthru
          _
        // Predicated region
        $region81: #{tpu_custom_call.1} parent=11 // pred_check
          %p789 = pneg %p547
        $region82: #{tpu_custom_call.1} parent=11 // pred_check_branch
          %791 = sbr.rel (%p789) target = $region84
        $region83: #{tpu_custom_call.1} parent=11 // pred_region
          %s793 = ssub.s32 16, 16
          %794 = vsyncadd [#allocation38], %s793
          %s796 = sshll.u32 [#allocation37], 4
          %s797 = int_to_ptr.vmem [resolvable:$true] %s796
          %799 = dma.hbm_to_vmem [thread:$0]  %s21, 16, %s797, [#allocation38]
        $region84: #{tpu_custom_call.1} parent=11 // pred_fallthru
          _
      $region12: #{tpu_custom_call.1} parent=5 // pred_fallthru
        _
      %p800 = scmp.lt.s32.totalorder %s49, 2
      // Predicated region
      $region85: #{tpu_custom_call.1} parent=5 // pred_check
        %p801 = pneg %p800
      $region86: #{tpu_custom_call.1} parent=5 // pred_check_branch
        %803 = sbr.rel (%p801) target = $region88
      $region87: #{tpu_custom_call.1} parent=5 // pred_region
        // Predicated region
        $region89: #{tpu_custom_call.1} parent=87 // pred_check
          %p804 = pneg %p83
        $region90: #{tpu_custom_call.1} parent=87 // pred_check_branch
          %806 = sbr.rel (%p804) target = $region92
        $region91: #{tpu_custom_call.1} parent=87 // pred_region
          %s807 = sand.u32 %s73, 1
          %s808 = scalar_lea.sflag [#allocation5], %s807
          %s809 = sand.u32 %s73, 1
          %s810 = smul.addr %s809, 8
          %s811 = scalar_lea.vmem [#allocation4], %s810
          %s813 = ssub.s32 128, 128
          %814 = vsyncadd %s808, %s813
          %s815 = sadd.s32 %s57, %s56
          %s816 = smul.addr %s815, 128
          %s817 = scalar_lea.hbm %s0, %s816
          %s819 = sshll.u32 %s811, 4
          %s820 = int_to_ptr.vmem [resolvable:$true] %s819
          %822 = dma.hbm_to_vmem [thread:$0]  %s817, 128, %s820, %s808
        $region92: #{tpu_custom_call.1} parent=87 // pred_fallthru
          _
        // Predicated region
        $region93: #{tpu_custom_call.1} parent=87 // pred_check
          %p823 = pneg %p109
        $region94: #{tpu_custom_call.1} parent=87 // pred_check_branch
          %825 = sbr.rel (%p823) target = $region96
        $region95: #{tpu_custom_call.1} parent=87 // pred_region
          %s826 = sand.u32 %s49, 1
          %s827 = scalar_lea.sflag [#allocation8], %s826
          %s828 = sand.u32 %s99, 1
          %s829 = smul.addr %s828, 8
          %s830 = scalar_lea.vmem [#allocation7], %s829
          %s832 = ssub.s32 128, 128
          %833 = vsyncadd %s827, %s832
          %s834 = smul.addr %s56, 128
          %s835 = scalar_lea.hbm %s1, %s834
          %s837 = sshll.u32 %s830, 4
          %s838 = int_to_ptr.vmem [resolvable:$true] %s837
          %840 = dma.hbm_to_vmem [thread:$0]  %s835, 128, %s838, %s827
        $region96: #{tpu_custom_call.1} parent=87 // pred_fallthru
          _
        // Predicated region
        $region97: #{tpu_custom_call.1} parent=87 // pred_check
          %p841 = pneg %p135
        $region98: #{tpu_custom_call.1} parent=87 // pred_check_branch
          %843 = sbr.rel (%p841) target = $region100
        $region99: #{tpu_custom_call.1} parent=87 // pred_region
          %s844 = sand.u32 %s49, 1
          %s845 = scalar_lea.sflag [#allocation8], %s844
          %s846 = sand.u32 %s125, 1
          %s847 = scalar_lea.vmem [#allocation9], %s846
          %s849 = ssub.s32 16, 16
          %850 = vsyncadd %s845, %s849
          %s851 = smul.addr %s56, 16
          %s852 = scalar_lea.hbm %s2, %s851
          %s854 = sshll.u32 %s847, 4
          %s855 = int_to_ptr.vmem [resolvable:$true] %s854
          %857 = dma.hbm_to_vmem [thread:$0]  %s852, 16, %s855, %s845
        $region100: #{tpu_custom_call.1} parent=87 // pred_fallthru
          _
        // Predicated region
        $region101: #{tpu_custom_call.1} parent=87 // pred_check
          %p858 = pneg %p163
        $region102: #{tpu_custom_call.1} parent=87 // pred_check_branch
          %860 = sbr.rel (%p858) target = $region104
        $region103: #{tpu_custom_call.1} parent=87 // pred_region
          %s861 = sand.u32 %s49, 1
          %s862 = scalar_lea.sflag [#allocation11], %s861
          %s863 = sand.u32 %s153, 1
          %s864 = smul.addr %s863, 8
          %s865 = scalar_lea.vmem [#allocation10], %s864
          %s867 = ssub.s32 128, 128
          %868 = vsyncadd %s862, %s867
          %s869 = sadd.s32 %s57, %s56
          %s870 = smul.addr %s869, 128
          %s871 = scalar_lea.hbm %s3, %s870
          %s873 = sshll.u32 %s865, 4
          %s874 = int_to_ptr.vmem [resolvable:$true] %s873
          %876 = dma.hbm_to_vmem [thread:$0]  %s871, 128, %s874, %s862
        $region104: #{tpu_custom_call.1} parent=87 // pred_fallthru
          _
      $region88: #{tpu_custom_call.1} parent=5 // pred_fallthru
        _
      %p877 = scmp.le.s32.totalorder 1, %s49
      %p878 = scmp.lt.s32.totalorder %s49, 3
      %p879 = pnand %p877, %p878
      %p880 = pneg %p879
      // Predicated region
      $region105: #{tpu_custom_call.1} parent=5 // pred_check
        _
      $region106: #{tpu_custom_call.1} parent=5 // pred_check_branch
        %882 = sbr.rel (%p879) target = $region108
      $region107: #{tpu_custom_call.1} parent=5 // pred_region
        %s883 = ssub.s32 %s49, 1
        %s884 = sand.u32 %s76, 1
        %s885 = scalar_lea.sflag [#allocation5], %s884
        %s886 = sand.u32 %s76, 1
        %s887 = smul.addr %s886, 8
        %s888 = scalar_lea.vmem [#allocation4], %s887
        // Predicated region
        $region109: #{tpu_custom_call.1} parent=107 // pred_check
          %p889 = pneg %p89
        $region110: #{tpu_custom_call.1} parent=107 // pred_check_branch
          %891 = sbr.rel (%p889) target = $region112
        $region111: #{tpu_custom_call.1} parent=107 // pred_region
          %892 = dma.done %s885, 128
        $region112: #{tpu_custom_call.1} parent=107 // pred_fallthru
          _
        %s893 = sand.u32 %s54, 1
        %s894 = scalar_lea.sflag [#allocation8], %s893
        %s895 = sand.u32 %s102, 1
        %s896 = smul.addr %s895, 8
        %s897 = scalar_lea.vmem [#allocation7], %s896
        // Predicated region
        $region113: #{tpu_custom_call.1} parent=107 // pred_check
          %p898 = pneg %p115
        $region114: #{tpu_custom_call.1} parent=107 // pred_check_branch
          %900 = sbr.rel (%p898) target = $region116
        $region115: #{tpu_custom_call.1} parent=107 // pred_region
          %901 = dma.done %s894, 128
        $region116: #{tpu_custom_call.1} parent=107 // pred_fallthru
          _
        %s902 = sand.u32 %s54, 1
        %s903 = scalar_lea.sflag [#allocation8], %s902
        %s904 = sand.u32 %s128, 1
        %s905 = scalar_lea.vmem [#allocation9], %s904
        // Predicated region
        $region117: #{tpu_custom_call.1} parent=107 // pred_check
          %p906 = pneg %p141
        $region118: #{tpu_custom_call.1} parent=107 // pred_check_branch
          %908 = sbr.rel (%p906) target = $region120
        $region119: #{tpu_custom_call.1} parent=107 // pred_region
          %909 = dma.done %s903, 16
        $region120: #{tpu_custom_call.1} parent=107 // pred_fallthru
          _
        %s910 = sand.u32 %s54, 1
        %s911 = scalar_lea.sflag [#allocation11], %s910
        %s912 = sand.u32 %s156, 1
        %s913 = smul.addr %s912, 8
        %s914 = scalar_lea.vmem [#allocation10], %s913
        // Predicated region
        $region121: #{tpu_custom_call.1} parent=107 // pred_check
          %p915 = pneg %p169
        $region122: #{tpu_custom_call.1} parent=107 // pred_check_branch
          %917 = sbr.rel (%p915) target = $region124
        $region123: #{tpu_custom_call.1} parent=107 // pred_region
          %918 = dma.done %s911, 128
        $region124: #{tpu_custom_call.1} parent=107 // pred_fallthru
          _
        // Predicated region
        $region125: #{tpu_custom_call.1} parent=107 // pred_check
          %p919 = pneg %p190
        $region126: #{tpu_custom_call.1} parent=107 // pred_check_branch
          %921 = sbr.rel (%p919) target = $region128
        $region127: #{tpu_custom_call.1} parent=107 // pred_region
          %922 = dma.done [#allocation11], 16
        $region128: #{tpu_custom_call.1} parent=107 // pred_fallthru
          _
        // Predicated region
        $region129: #{tpu_custom_call.1} parent=107 // pred_check
          %p923 = pneg %p211
        $region130: #{tpu_custom_call.1} parent=107 // pred_check_branch
          %925 = sbr.rel (%p923) target = $region132
        $region131: #{tpu_custom_call.1} parent=107 // pred_region
          %926 = dma.done [#allocation14], 16
        $region132: #{tpu_custom_call.1} parent=107 // pred_fallthru
          _
        // Predicated region
        $region133: #{tpu_custom_call.1} parent=107 // pred_check
          %p927 = pneg %p232
        $region134: #{tpu_custom_call.1} parent=107 // pred_check_branch
          %929 = sbr.rel (%p927) target = $region136
        $region135: #{tpu_custom_call.1} parent=107 // pred_region
          %930 = dma.done [#allocation14], 512
        $region136: #{tpu_custom_call.1} parent=107 // pred_fallthru
          _
        // Predicated region
        $region137: #{tpu_custom_call.1} parent=107 // pred_check
          %p931 = pneg %p253
        $region138: #{tpu_custom_call.1} parent=107 // pred_check_branch
          %933 = sbr.rel (%p931) target = $region140
        $region139: #{tpu_custom_call.1} parent=107 // pred_region
          %934 = dma.done [#allocation17], 512
        $region140: #{tpu_custom_call.1} parent=107 // pred_fallthru
          _
        // Predicated region
        $region141: #{tpu_custom_call.1} parent=107 // pred_check
          %p935 = pneg %p274
        $region142: #{tpu_custom_call.1} parent=107 // pred_check_branch
          %937 = sbr.rel (%p935) target = $region144
        $region143: #{tpu_custom_call.1} parent=107 // pred_region
          %938 = dma.done [#allocation17], 512
        $region144: #{tpu_custom_call.1} parent=107 // pred_fallthru
          _
        // Predicated region
        $region145: #{tpu_custom_call.1} parent=107 // pred_check
          %p939 = pneg %p295
        $region146: #{tpu_custom_call.1} parent=107 // pred_check_branch
          %941 = sbr.rel (%p939) target = $region148
        $region147: #{tpu_custom_call.1} parent=107 // pred_region
          %942 = dma.done [#allocation20], 16
        $region148: #{tpu_custom_call.1} parent=107 // pred_fallthru
          _
        // Predicated region
        $region149: #{tpu_custom_call.1} parent=107 // pred_check
          %p943 = pneg %p316
        $region150: #{tpu_custom_call.1} parent=107 // pred_check_branch
          %945 = sbr.rel (%p943) target = $region152
        $region151: #{tpu_custom_call.1} parent=107 // pred_region
          %946 = dma.done [#allocation20], 16
        $region152: #{tpu_custom_call.1} parent=107 // pred_fallthru
          _
        // Predicated region
        $region153: #{tpu_custom_call.1} parent=107 // pred_check
          %p947 = pneg %p337
        $region154: #{tpu_custom_call.1} parent=107 // pred_check_branch
          %949 = sbr.rel (%p947) target = $region156
        $region155: #{tpu_custom_call.1} parent=107 // pred_region
          %950 = dma.done [#allocation23], 16
        $region156: #{tpu_custom_call.1} parent=107 // pred_fallthru
          _
        // Predicated region
        $region157: #{tpu_custom_call.1} parent=107 // pred_check
          %p951 = pneg %p358
        $region158: #{tpu_custom_call.1} parent=107 // pred_check_branch
          %953 = sbr.rel (%p951) target = $region160
        $region159: #{tpu_custom_call.1} parent=107 // pred_region
          %954 = dma.done [#allocation23], 512
        $region160: #{tpu_custom_call.1} parent=107 // pred_fallthru
          _
        // Predicated region
        $region161: #{tpu_custom_call.1} parent=107 // pred_check
          %p955 = pneg %p379
        $region162: #{tpu_custom_call.1} parent=107 // pred_check_branch
          %957 = sbr.rel (%p955) target = $region164
        $region163: #{tpu_custom_call.1} parent=107 // pred_region
          %958 = dma.done [#allocation26], 16
        $region164: #{tpu_custom_call.1} parent=107 // pred_fallthru
          _
        // Predicated region
        $region165: #{tpu_custom_call.1} parent=107 // pred_check
          %p959 = pneg %p400
        $region166: #{tpu_custom_call.1} parent=107 // pred_check_branch
          %961 = sbr.rel (%p959) target = $region168
        $region167: #{tpu_custom_call.1} parent=107 // pred_region
          %962 = dma.done [#allocation26], 16
        $region168: #{tpu_custom_call.1} parent=107 // pred_fallthru
          _
        // Predicated region
        $region169: #{tpu_custom_call.1} parent=107 // pred_check
          %p963 = pneg %p421
        $region170: #{tpu_custom_call.1} parent=107 // pred_check_branch
          %965 = sbr.rel (%p963) target = $region172
        $region171: #{tpu_custom_call.1} parent=107 // pred_region
          %966 = dma.done [#allocation29], 16
        $region172: #{tpu_custom_call.1} parent=107 // pred_fallthru
          _
        // Predicated region
        $region173: #{tpu_custom_call.1} parent=107 // pred_check
          %p967 = pneg %p442
        $region174: #{tpu_custom_call.1} parent=107 // pred_check_branch
          %969 = sbr.rel (%p967) target = $region176
        $region175: #{tpu_custom_call.1} parent=107 // pred_region
          %970 = dma.done [#allocation29], 16
        $region176: #{tpu_custom_call.1} parent=107 // pred_fallthru
          _
        // Predicated region
        $region177: #{tpu_custom_call.1} parent=107 // pred_check
          %p971 = pneg %p463
        $region178: #{tpu_custom_call.1} parent=107 // pred_check_branch
          %973 = sbr.rel (%p971) target = $region180
        $region179: #{tpu_custom_call.1} parent=107 // pred_region
          %974 = dma.done [#allocation32], 512
        $region180: #{tpu_custom_call.1} parent=107 // pred_fallthru
          _
        // Predicated region
        $region181: #{tpu_custom_call.1} parent=107 // pred_check
          %p975 = pneg %p484
        $region182: #{tpu_custom_call.1} parent=107 // pred_check_branch
          %977 = sbr.rel (%p975) target = $region184
        $region183: #{tpu_custom_call.1} parent=107 // pred_region
          %978 = dma.done [#allocation32], 16
        $region184: #{tpu_custom_call.1} parent=107 // pred_fallthru
          _
        // Predicated region
        $region185: #{tpu_custom_call.1} parent=107 // pred_check
          %p979 = pneg %p505
        $region186: #{tpu_custom_call.1} parent=107 // pred_check_branch
          %981 = sbr.rel (%p979) target = $region188
        $region187: #{tpu_custom_call.1} parent=107 // pred_region
          %982 = dma.done [#allocation35], 2048
        $region188: #{tpu_custom_call.1} parent=107 // pred_fallthru
          _
        // Predicated region
        $region189: #{tpu_custom_call.1} parent=107 // pred_check
          %p983 = pneg %p526
        $region190: #{tpu_custom_call.1} parent=107 // pred_check_branch
          %985 = sbr.rel (%p983) target = $region192
        $region191: #{tpu_custom_call.1} parent=107 // pred_region
          %986 = dma.done [#allocation35], 16
        $region192: #{tpu_custom_call.1} parent=107 // pred_fallthru
          _
        // Predicated region
        $region193: #{tpu_custom_call.1} parent=107 // pred_check
          %p987 = pneg %p547
        $region194: #{tpu_custom_call.1} parent=107 // pred_check_branch
          %989 = sbr.rel (%p987) target = $region196
        $region195: #{tpu_custom_call.1} parent=107 // pred_region
          %990 = dma.done [#allocation38], 16
        $region196: #{tpu_custom_call.1} parent=107 // pred_fallthru
          _
        %s991 = sand.u32 %s76, 1
        %s992 = scalar_lea.sflag [#allocation5], %s991
        %s993 = sand.u32 %s76, 1
        %s994 = smul.addr %s993, 8
        %s995 = scalar_lea.vmem [#allocation4], %s994
        %p996 = pneg %p89
        %p997 = pneg %p86
        %s998 = sand.u32 %s54, 1
        %s999 = scalar_lea.sflag [#allocation8], %s998
        %s1000 = sand.u32 %s102, 1
        %s1001 = smul.addr %s1000, 8
        %s1002 = scalar_lea.vmem [#allocation7], %s1001
        %p1003 = pneg %p115
        %p1004 = pneg %p112
        %s1005 = sand.u32 %s54, 1
        %s1006 = scalar_lea.sflag [#allocation8], %s1005
        %s1007 = sand.u32 %s128, 1
        %s1008 = scalar_lea.vmem [#allocation9], %s1007
        %p1009 = pneg %p141
        %p1010 = pneg %p138
        %s1011 = sand.u32 %s54, 1
        %s1012 = scalar_lea.sflag [#allocation11], %s1011
        %s1013 = sand.u32 %s156, 1
        %s1014 = smul.addr %s1013, 8
        %s1015 = scalar_lea.vmem [#allocation10], %s1014
        %p1016 = pneg %p169
        %p1017 = pneg %p166
        %p1018 = pneg %p190
        %p1019 = pneg %p187
        %p1020 = pneg %p211
        %p1021 = pneg %p208
        %p1022 = pneg %p232
        %p1023 = pneg %p229
        %p1024 = pneg %p253
        %p1025 = pneg %p250
        %p1026 = pneg %p274
        %p1027 = pneg %p271
        %p1028 = pneg %p295
        %p1029 = pneg %p292
        %p1030 = pneg %p316
        %p1031 = pneg %p313
        %p1032 = pneg %p337
        %p1033 = pneg %p334
        %p1034 = pneg %p358
        %p1035 = pneg %p355
        %p1036 = pneg %p379
        %p1037 = pneg %p376
        %p1038 = pneg %p400
        %p1039 = pneg %p397
        %p1040 = pneg %p421
        %p1041 = pneg %p418
        %p1042 = pneg %p442
        %p1043 = pneg %p439
        %p1044 = pneg %p463
        %p1045 = pneg %p460
        %p1046 = pneg %p484
        %p1047 = pneg %p481
        %p1048 = pneg %p505
        %p1049 = pneg %p502
        %p1050 = pneg %p526
        %p1051 = pneg %p523
        %p1052 = pneg %p547
        %p1053 = pneg %p544
        %p1054 = pneg %p575
        %p1055 = pneg %p572
        %s1056 = sand.u32 %s562, 1
        %s1057 = scalar_lea.sflag [#allocation6], %s1056
        %s1058 = sand.u32 %s562, 1
        %s1059 = smul.addr %s1058, 8
        %s1060 = scalar_lea.vmem [#allocation39], %s1059
        %v1061 = vld [vmem:[#allocation12] sm:$0x1]
        %v1062 = vld [vmem:[#allocation13] sm:$0x1]
        %p1063 = scmp.eq.s32.totalorder %s59, 0
        // Predicated region
        $region197: #{tpu_custom_call.1} parent=107 // pred_check
          %p1064 = pneg %p1063
        $region198: #{tpu_custom_call.1} parent=107 // pred_check_branch
          %1066 = sbr.rel (%p1064) target = $region200
        $region199: #{tpu_custom_call.1} parent=107 // pred_region
          %v1067 = vld [vmem:[%s897] sm:$0xff]
          %vm1068 = vcmask 261120
          %v1069 = vsel %vm1068, %v1067, 0.0
          %1070 = vadd.xlane.f32.xlu0 %v1069
          %v1071 = vpop.xlane.xlu0 %1070
          %v1072 = vrcp.pop 32.0
          %v1073 = vmul.f32 %v1071, %v1072
          %v1074 = vsub.f32 %v1067, %v1073
          %v1075 = vmul.f32 %v1074, %v1074
          %v1076 = vsel %vm1068, %v1075, 0.0
          %1077 = vadd.xlane.f32.xlu0 %v1076
          %v1078 = vpop.xlane.xlu0 %1077
          %v1079 = vmul.f32 %v1078, %v1072
          %v1080 = vadd.f32 %v1079, 1e-05
          %v1081 = vrsqrt.pop %v1080
          %v1082 = vmul.f32 %v1074, %v1081
          %v1084 = vlaneseq
          %v1085 = vshrl.u32 %v1084, 7
          %v1086 = vsub.s32 0, %v1085
          %v1087 = vrot.slane %v1061, %v1086
          %v1089 = vmul.f32 %v1082, %v1087
          %v1091 = vlaneseq
          %v1092 = vshrl.u32 %v1091, 7
          %v1093 = vsub.s32 0, %v1092
          %v1094 = vrot.slane %v1062, %v1093
          %v1096 = vadd.f32 %v1089, %v1094
          %v1097 = vld [vmem:[#allocation16] sm:$0xff]
          %v1098 = vld [vmem:[#allocation16 + $0x8] sm:$0xff]
          %v1099 = vld [vmem:[#allocation16 + $0x10] sm:$0xff]
          %v1100 = vld [vmem:[#allocation16 + $0x18] sm:$0xff]
          %v1101 = vld [vmem:[#allocation21] sm:$0x1]
          %v1103 = vlaneseq
          %v1104 = vshrl.u32 %v1103, 7
          %v1105 = vsub.s32 0, %v1104
          %v1106 = vrot.slane %v1101, %v1105
          %v1109 = vsel %vm1068, %v1096, 0
          %1111 = vmatprep.subr.mxu0 0.0
          %1112 = vmatpush1.msra.mxu0 %v1097
          %1113 = vmatprep.subr.mxu0 0.0
          %1114 = vmatpush1.msra.mxu0 %v1098
          %1115 = vmatprep.subr.mxu0 0.0
          %1116 = vmatpush1.msra.mxu0 %v1099
          %1117 = vmatprep.subr.mxu0 0.0
          %1118 = vmatpush1.msra.mxu0 %v1100
          %1119 = vmatprep.subr.mxu0 0.0
          %1120 = vmatpush1.msra.mxu0 0.0
          %1121 = vmatprep.subr.mxu0 0.0
          %1122 = vmatpush1.msra.mxu0 0.0
          %1123 = vmatprep.subr.mxu0 0.0
          %1124 = vmatpush1.msra.mxu0 0.0
          %1125 = vmatprep.subr.mxu0 0.0
          %1126 = vmatpush1.msra.mxu0 0.0
          %1127 = vmatprep.subr.mxu0 0.0
          %1128 = vmatpush1.msra.mxu0 0.0
          %1129 = vmatprep.subr.mxu0 0.0
          %1130 = vmatpush1.msra.mxu0 0.0
          %1131 = vmatprep.subr.mxu0 0.0
          %1132 = vmatpush1.msra.mxu0 0.0
          %1133 = vmatprep.subr.mxu0 0.0
          %1134 = vmatpush1.msra.mxu0 0.0
          %1135 = vmatprep.subr.mxu0 0.0
          %1136 = vmatpush1.msra.mxu0 0.0
          %1137 = vmatprep.subr.mxu0 0.0
          %1138 = vmatpush1.msra.mxu0 0.0
          %1139 = vmatprep.subr.mxu0 0.0
          %1140 = vmatpush1.msra.mxu0 0.0
          %1141 = vmatprep.subr.mxu0 0.0
          %1142 = vmatpush1.msra.mxu0 0.0
          %1143 = vmatprep.subr.mxu0 0.0
          %1144 = vmatpush1.msra.mxu0 0.0
          %1145 = vmatprep.subr.mxu0 0.0
          %1146 = vmatpush1.msra.mxu0 0.0
          %1147 = vmatprep.subr.mxu0 0.0
          %1148 = vmatpush1.msra.mxu0 0.0
          %1149 = vmatprep.subr.mxu0 0.0
          %1150 = vmatpush1.msra.mxu0 0.0
          %1151 = vmatprep.subr.mxu0 0.0
          %1152 = vmatpush1.msra.mxu0 0.0
          %1153 = vmatprep.subr.mxu0 0.0
          %1154 = vmatpush1.msra.mxu0 0.0
          %1155 = vmatprep.subr.mxu0 0.0
          %1156 = vmatpush1.msra.mxu0 0.0
          %1157 = vmatprep.subr.mxu0 0.0
          %1158 = vmatpush1.msra.mxu0 0.0
          %1159 = vmatprep.subr.mxu0 0.0
          %1160 = vmatpush1.msra.mxu0 0.0
          %1161 = vmatprep.subr.mxu0 0.0
          %1162 = vmatpush1.msra.mxu0 0.0
          %1163 = vmatprep.subr.mxu0 0.0
          %1164 = vmatpush1.msra.mxu0 0.0
          %1165 = vmatprep.subr.mxu0 0.0
          %1166 = vmatpush1.msra.mxu0 0.0
          %1167 = vmatprep.subr.mxu0 0.0
          %1168 = vmatpush1.msra.mxu0 0.0
          %1169 = vmatprep.subr.mxu0 0.0
          %1170 = vmatpush1.msra.mxu0 0.0
          %1171 = vmatprep.subr.mxu0 0.0
          %1172 = vmatpush1.msra.mxu0 0.0
          %1173 = vmatprep.subr.mxu0 0.0
          %1174 = vmatpush1.msra.mxu0 0.0
          %1175 = vmatprep.mubr.f32.mxu0 0.0
          %1176 = vmatmul.mubr.f32.gmra.mrb[0].mxu0 %v1109
          %v1177 = vpop.f32.mrb[0].mxu0
          %v1178 = vadd.f32 %v1106, %v1177
          %v1179 = vpop.f32.mrb[0].mxu0
          %1180 = vdwg.mxu0
          %v1181 = vld [vmem:[#allocation18] sm:$0xff]
          %v1182 = vld [vmem:[#allocation18 + $0x8] sm:$0xff]
          %v1183 = vld [vmem:[#allocation18 + $0x10] sm:$0xff]
          %v1184 = vld [vmem:[#allocation18 + $0x18] sm:$0xff]
          %v1185 = vld [vmem:[#allocation22] sm:$0x1]
          %v1187 = vlaneseq
          %v1188 = vshrl.u32 %v1187, 7
          %v1189 = vsub.s32 0, %v1188
          %v1190 = vrot.slane %v1185, %v1189
          %1192 = vmatprep.subr.mxu0 0.0
          %1193 = vmatpush1.msra.mxu0 %v1181
          %1194 = vmatprep.subr.mxu0 0.0
          %1195 = vmatpush1.msra.mxu0 %v1182
          %1196 = vmatprep.subr.mxu0 0.0
          %1197 = vmatpush1.msra.mxu0 %v1183
          %1198 = vmatprep.subr.mxu0 0.0
          %1199 = vmatpush1.msra.mxu0 %v1184
          %1200 = vmatprep.subr.mxu0 0.0
          %1201 = vmatpush1.msra.mxu0 0.0
          %1202 = vmatprep.subr.mxu0 0.0
          %1203 = vmatpush1.msra.mxu0 0.0
          %1204 = vmatprep.subr.mxu0 0.0
          %1205 = vmatpush1.msra.mxu0 0.0
          %1206 = vmatprep.subr.mxu0 0.0
          %1207 = vmatpush1.msra.mxu0 0.0
          %1208 = vmatprep.subr.mxu0 0.0
          %1209 = vmatpush1.msra.mxu0 0.0
          %1210 = vmatprep.subr.mxu0 0.0
          %1211 = vmatpush1.msra.mxu0 0.0
          %1212 = vmatprep.subr.mxu0 0.0
          %1213 = vmatpush1.msra.mxu0 0.0
          %1214 = vmatprep.subr.mxu0 0.0
          %1215 = vmatpush1.msra.mxu0 0.0
          %1216 = vmatprep.subr.mxu0 0.0
          %1217 = vmatpush1.msra.mxu0 0.0
          %1218 = vmatprep.subr.mxu0 0.0
          %1219 = vmatpush1.msra.mxu0 0.0
          %1220 = vmatprep.subr.mxu0 0.0
          %1221 = vmatpush1.msra.mxu0 0.0
          %1222 = vmatprep.subr.mxu0 0.0
          %1223 = vmatpush1.msra.mxu0 0.0
          %1224 = vmatprep.subr.mxu0 0.0
          %1225 = vmatpush1.msra.mxu0 0.0
          %1226 = vmatprep.subr.mxu0 0.0
          %1227 = vmatpush1.msra.mxu0 0.0
          %1228 = vmatprep.subr.mxu0 0.0
          %1229 = vmatpush1.msra.mxu0 0.0
          %1230 = vmatprep.subr.mxu0 0.0
          %1231 = vmatpush1.msra.mxu0 0.0
          %1232 = vmatprep.subr.mxu0 0.0
          %1233 = vmatpush1.msra.mxu0 0.0
          %1234 = vmatprep.subr.mxu0 0.0
          %1235 = vmatpush1.msra.mxu0 0.0
          %1236 = vmatprep.subr.mxu0 0.0
          %1237 = vmatpush1.msra.mxu0 0.0
          %1238 = vmatprep.subr.mxu0 0.0
          %1239 = vmatpush1.msra.mxu0 0.0
          %1240 = vmatprep.subr.mxu0 0.0
          %1241 = vmatpush1.msra.mxu0 0.0
          %1242 = vmatprep.subr.mxu0 0.0
          %1243 = vmatpush1.msra.mxu0 0.0
          %1244 = vmatprep.subr.mxu0 0.0
          %1245 = vmatpush1.msra.mxu0 0.0
          %1246 = vmatprep.subr.mxu0 0.0
          %1247 = vmatpush1.msra.mxu0 0.0
          %1248 = vmatprep.subr.mxu0 0.0
          %1249 = vmatpush1.msra.mxu0 0.0
          %1250 = vmatprep.subr.mxu0 0.0
          %1251 = vmatpush1.msra.mxu0 0.0
          %1252 = vmatprep.subr.mxu0 0.0
          %1253 = vmatpush1.msra.mxu0 0.0
          %1254 = vmatprep.subr.mxu0 0.0
          %1255 = vmatpush1.msra.mxu0 0.0
          %1256 = vmatprep.mubr.f32.mxu0 0.0
          %1257 = vmatmul.mubr.f32.gmra.mrb[0].mxu0 %v1109
          %v1258 = vpop.f32.mrb[0].mxu0
          %v1259 = vadd.f32 %v1190, %v1258
          %v1260 = vpop.f32.mrb[0].mxu0
          %1261 = vdwg.mxu0
          %1262 = vst.msk [vmem:[#allocation2] sm:$0xff] %vm1068, %v1178
          %1263 = vst.msk [vmem:[#allocation3] sm:$0xff] %vm1068, %v1259
        $region200: #{tpu_custom_call.1} parent=107 // pred_fallthru
          _
        %v1264 = vld [vmem:[%s888] sm:$0xff]
        %v1265 = vld [vmem:[%s905] sm:$0x1]
        %vm1266 = vcmp.gt.f32.partialorder %v1265, 0.5
        %v1267 = vsel %vm1266, 0.0, -1e+09
        %vm1268 = vcmask 261120
        %v1269 = vsel %vm1268, %v1264, 0.0
        %1270 = vadd.xlane.f32.xlu0 %v1269
        %v1271 = vpop.xlane.xlu0 %1270
        %v1272 = vrcp.pop 32.0
        %v1273 = vmul.f32 %v1271, %v1272
        %v1274 = vsub.f32 %v1264, %v1273
        %v1275 = vmul.f32 %v1274, %v1274
        %v1276 = vsel %vm1268, %v1275, 0.0
        %1277 = vadd.xlane.f32.xlu0 %v1276
        %v1278 = vpop.xlane.xlu0 %1277
        %v1279 = vmul.f32 %v1278, %v1272
        %v1280 = vadd.f32 %v1279, 1e-05
        %v1281 = vrsqrt.pop %v1280
        %v1282 = vmul.f32 %v1274, %v1281
        %v1284 = vlaneseq
        %v1285 = vshrl.u32 %v1284, 7
        %v1286 = vsub.s32 0, %v1285
        %v1287 = vrot.slane %v1061, %v1286
        %v1289 = vmul.f32 %v1282, %v1287
        %v1291 = vlaneseq
        %v1292 = vshrl.u32 %v1291, 7
        %v1293 = vsub.s32 0, %v1292
        %v1294 = vrot.slane %v1062, %v1293
        %v1296 = vadd.f32 %v1289, %v1294
        %v1297 = vld [vmem:[#allocation15] sm:$0xff]
        %v1298 = vld [vmem:[#allocation15 + $0x8] sm:$0xff]
        %v1299 = vld [vmem:[#allocation15 + $0x10] sm:$0xff]
        %v1300 = vld [vmem:[#allocation15 + $0x18] sm:$0xff]
        %v1301 = vld [vmem:[#allocation19] sm:$0x1]
        %v1303 = vlaneseq
        %v1304 = vshrl.u32 %v1303, 7
        %v1305 = vsub.s32 0, %v1304
        %v1306 = vrot.slane %v1301, %v1305
        %v1309 = vsel %vm1268, %v1296, 0
        %1311 = vmatprep.subr.mxu0 0.0
        %1312 = vmatpush1.msra.mxu0 %v1297
        %1313 = vmatprep.subr.mxu0 0.0
        %1314 = vmatpush1.msra.mxu0 %v1298
        %1315 = vmatprep.subr.mxu0 0.0
        %1316 = vmatpush1.msra.mxu0 %v1299
        %1317 = vmatprep.subr.mxu0 0.0
        %1318 = vmatpush1.msra.mxu0 %v1300
        %1319 = vmatprep.subr.mxu0 0.0
        %1320 = vmatpush1.msra.mxu0 0.0
        %1321 = vmatprep.subr.mxu0 0.0
        %1322 = vmatpush1.msra.mxu0 0.0
        %1323 = vmatprep.subr.mxu0 0.0
        %1324 = vmatpush1.msra.mxu0 0.0
        %1325 = vmatprep.subr.mxu0 0.0
        %1326 = vmatpush1.msra.mxu0 0.0
        %1327 = vmatprep.subr.mxu0 0.0
        %1328 = vmatpush1.msra.mxu0 0.0
        %1329 = vmatprep.subr.mxu0 0.0
        %1330 = vmatpush1.msra.mxu0 0.0
        %1331 = vmatprep.subr.mxu0 0.0
        %1332 = vmatpush1.msra.mxu0 0.0
        %1333 = vmatprep.subr.mxu0 0.0
        %1334 = vmatpush1.msra.mxu0 0.0
        %1335 = vmatprep.subr.mxu0 0.0
        %1336 = vmatpush1.msra.mxu0 0.0
        %1337 = vmatprep.subr.mxu0 0.0
        %1338 = vmatpush1.msra.mxu0 0.0
        %1339 = vmatprep.subr.mxu0 0.0
        %1340 = vmatpush1.msra.mxu0 0.0
        %1341 = vmatprep.subr.mxu0 0.0
        %1342 = vmatpush1.msra.mxu0 0.0
        %1343 = vmatprep.subr.mxu0 0.0
        %1344 = vmatpush1.msra.mxu0 0.0
        %1345 = vmatprep.subr.mxu0 0.0
        %1346 = vmatpush1.msra.mxu0 0.0
        %1347 = vmatprep.subr.mxu0 0.0
        %1348 = vmatpush1.msra.mxu0 0.0
        %1349 = vmatprep.subr.mxu0 0.0
        %1350 = vmatpush1.msra.mxu0 0.0
        %1351 = vmatprep.subr.mxu0 0.0
        %1352 = vmatpush1.msra.mxu0 0.0
        %1353 = vmatprep.subr.mxu0 0.0
        %1354 = vmatpush1.msra.mxu0 0.0
        %1355 = vmatprep.subr.mxu0 0.0
        %1356 = vmatpush1.msra.mxu0 0.0
        %1357 = vmatprep.subr.mxu0 0.0
        %1358 = vmatpush1.msra.mxu0 0.0
        %1359 = vmatprep.subr.mxu0 0.0
        %1360 = vmatpush1.msra.mxu0 0.0
        %1361 = vmatprep.subr.mxu0 0.0
        %1362 = vmatpush1.msra.mxu0 0.0
        %1363 = vmatprep.subr.mxu0 0.0
        %1364 = vmatpush1.msra.mxu0 0.0
        %1365 = vmatprep.subr.mxu0 0.0
        %1366 = vmatpush1.msra.mxu0 0.0
        %1367 = vmatprep.subr.mxu0 0.0
        %1368 = vmatpush1.msra.mxu0 0.0
        %1369 = vmatprep.subr.mxu0 0.0
        %1370 = vmatpush1.msra.mxu0 0.0
        %1371 = vmatprep.subr.mxu0 0.0
        %1372 = vmatpush1.msra.mxu0 0.0
        %1373 = vmatprep.subr.mxu0 0.0
        %1374 = vmatpush1.msra.mxu0 0.0
        %1375 = vmatprep.mubr.f32.mxu0 0.0
        %1376 = vmatmul.mubr.f32.gmra.mrb[0].mxu0 %v1309
        %v1377 = vpop.f32.mrb[0].mxu0
        %v1378 = vadd.f32 %v1306, %v1377
        %v1379 = vpop.f32.mrb[0].mxu0
        %1380 = vdwg.mxu0
        %v1381 = vld [vmem:[#allocation2] sm:$0xff]
        %v1382 = vld [vmem:[#allocation3] sm:$0xff]
        %vm1383 = vcmask 64512
        %v1385 = vsel %vm1383, %v1378, 0
        %v1388 = vsel %vm1383, %v1381, 0
        %1390 = vmatprep.subr.mxu0 0.0
        %1391 = vmatpush1.xpose.msra.mxu0 %v1388
        %1392 = vmatprep.subr.mxu0 0.0
        %1393 = vmatpush1.xpose.msra.mxu0 0.0
        %1394 = vmatprep.subr.mxu0 0.0
        %1395 = vmatpush1.xpose.msra.mxu0 0.0
        %1396 = vmatprep.subr.mxu0 0.0
        %1397 = vmatpush1.xpose.msra.mxu0 0.0
        %1398 = vmatprep.subr.mxu0 0.0
        %1399 = vmatpush1.xpose.msra.mxu0 0.0
        %1400 = vmatprep.subr.mxu0 0.0
        %1401 = vmatpush1.xpose.msra.mxu0 0.0
        %1402 = vmatprep.subr.mxu0 0.0
        %1403 = vmatpush1.xpose.msra.mxu0 0.0
        %1404 = vmatprep.subr.mxu0 0.0
        %1405 = vmatpush1.xpose.msra.mxu0 0.0
        %1406 = vmatprep.subr.mxu0 0.0
        %1407 = vmatpush1.xpose.msra.mxu0 0.0
        %1408 = vmatprep.subr.mxu0 0.0
        %1409 = vmatpush1.xpose.msra.mxu0 0.0
        %1410 = vmatprep.subr.mxu0 0.0
        %1411 = vmatpush1.xpose.msra.mxu0 0.0
        %1412 = vmatprep.subr.mxu0 0.0
        %1413 = vmatpush1.xpose.msra.mxu0 0.0
        %1414 = vmatprep.subr.mxu0 0.0
        %1415 = vmatpush1.xpose.msra.mxu0 0.0
        %1416 = vmatprep.subr.mxu0 0.0
        %1417 = vmatpush1.xpose.msra.mxu0 0.0
        %1418 = vmatprep.subr.mxu0 0.0
        %1419 = vmatpush1.xpose.msra.mxu0 0.0
        %1420 = vmatprep.subr.mxu0 0.0
        %1421 = vmatpush1.xpose.msra.mxu0 0.0
        %1422 = vmatprep.subr.mxu0 0.0
        %1423 = vmatpush1.xpose.msra.mxu0 0.0
        %1424 = vmatprep.subr.mxu0 0.0
        %1425 = vmatpush1.xpose.msra.mxu0 0.0
        %1426 = vmatprep.subr.mxu0 0.0
        %1427 = vmatpush1.xpose.msra.mxu0 0.0
        %1428 = vmatprep.subr.mxu0 0.0
        %1429 = vmatpush1.xpose.msra.mxu0 0.0
        %1430 = vmatprep.subr.mxu0 0.0
        %1431 = vmatpush1.xpose.msra.mxu0 0.0
        %1432 = vmatprep.subr.mxu0 0.0
        %1433 = vmatpush1.xpose.msra.mxu0 0.0
        %1434 = vmatprep.subr.mxu0 0.0
        %1435 = vmatpush1.xpose.msra.mxu0 0.0
        %1436 = vmatprep.subr.mxu0 0.0
        %1437 = vmatpush1.xpose.msra.mxu0 0.0
        %1438 = vmatprep.subr.mxu0 0.0
        %1439 = vmatpush1.xpose.msra.mxu0 0.0
        %1440 = vmatprep.subr.mxu0 0.0
        %1441 = vmatpush1.xpose.msra.mxu0 0.0
        %1442 = vmatprep.subr.mxu0 0.0
        %1443 = vmatpush1.xpose.msra.mxu0 0.0
        %1444 = vmatprep.subr.mxu0 0.0
        %1445 = vmatpush1.xpose.msra.mxu0 0.0
        %1446 = vmatprep.subr.mxu0 0.0
        %1447 = vmatpush1.xpose.msra.mxu0 0.0
        %1448 = vmatprep.subr.mxu0 0.0
        %1449 = vmatpush1.xpose.msra.mxu0 0.0
        %1450 = vmatprep.subr.mxu0 0.0
        %1451 = vmatpush1.xpose.msra.mxu0 0.0
        %1452 = vmatprep.subr.mxu0 0.0
        %1453 = vmatpush1.xpose.msra.mxu0 0.0
        %1454 = vmatprep.mubr.f32.mxu0 0.0
        %1455 = vmatmul.mubr.f32.gmra.mrb[0].mxu0 %v1385
        %v1456 = vpop.f32.mrb[0].mxu0
        %v1457 = vadd.f32 0.0, %v1456
        %v1458 = vpop.f32.mrb[0].mxu0
        %1459 = vdwg.mxu0
        %v1460 = vmul.f32 %v1457, 0.35355338
        %v1462 = vlaneseq
        %v1463 = vshrl.u32 %v1462, 7
        %v1464 = vsub.s32 0, %v1463
        %v1465 = vrot.slane %v1267, %v1464
        %v1467 = vadd.f32 %v1460, %v1465
        %v1468 = vsel %vm1383, %v1467, -inf
        %1469 = vmax.xlane.f32.xlu0 %v1468
        %v1470 = vpop.xlane.xlu0 %1469
        %v1471 = vsub.f32 %v1467, %v1470
        %v1472 = vmul.f32 %v1471, 1.442695
        %v1473 = vpow.pop %v1472
        %v1474 = vsel %vm1383, %v1473, 0.0
        %1475 = vadd.xlane.f32.xlu0 %v1474
        %v1476 = vpop.xlane.xlu0 %1475
        %v1477 = vrcp.pop %v1476
        %v1478 = vmul.f32 %v1473, %v1477
        %v1480 = vsel %vm1383, %v1478, 0
        %1482 = vmatprep.subr.mxu0 0.0
        %1483 = vmatpush1.msra.mxu0 %v1382
        %1484 = vmatprep.subr.mxu0 0.0
        %1485 = vmatpush1.msra.mxu0 0.0
        %1486 = vmatprep.subr.mxu0 0.0
        %1487 = vmatpush1.msra.mxu0 0.0
        %1488 = vmatprep.subr.mxu0 0.0
        %1489 = vmatpush1.msra.mxu0 0.0
        %1490 = vmatprep.subr.mxu0 0.0
        %1491 = vmatpush1.msra.mxu0 0.0
        %1492 = vmatprep.subr.mxu0 0.0
        %1493 = vmatpush1.msra.mxu0 0.0
        %1494 = vmatprep.subr.mxu0 0.0
        %1495 = vmatpush1.msra.mxu0 0.0
        %1496 = vmatprep.subr.mxu0 0.0
        %1497 = vmatpush1.msra.mxu0 0.0
        %1498 = vmatprep.subr.mxu0 0.0
        %1499 = vmatpush1.msra.mxu0 0.0
        %1500 = vmatprep.subr.mxu0 0.0
        %1501 = vmatpush1.msra.mxu0 0.0
        %1502 = vmatprep.subr.mxu0 0.0
        %1503 = vmatpush1.msra.mxu0 0.0
        %1504 = vmatprep.subr.mxu0 0.0
        %1505 = vmatpush1.msra.mxu0 0.0
        %1506 = vmatprep.subr.mxu0 0.0
        %1507 = vmatpush1.msra.mxu0 0.0
        %1508 = vmatprep.subr.mxu0 0.0
        %1509 = vmatpush1.msra.mxu0 0.0
        %1510 = vmatprep.subr.mxu0 0.0
        %1511 = vmatpush1.msra.mxu0 0.0
        %1512 = vmatprep.subr.mxu0 0.0
        %1513 = vmatpush1.msra.mxu0 0.0
        %1514 = vmatprep.subr.mxu0 0.0
        %1515 = vmatpush1.msra.mxu0 0.0
        %1516 = vmatprep.subr.mxu0 0.0
        %1517 = vmatpush1.msra.mxu0 0.0
        %1518 = vmatprep.subr.mxu0 0.0
        %1519 = vmatpush1.msra.mxu0 0.0
        %1520 = vmatprep.subr.mxu0 0.0
        %1521 = vmatpush1.msra.mxu0 0.0
        %1522 = vmatprep.subr.mxu0 0.0
        %1523 = vmatpush1.msra.mxu0 0.0
        %1524 = vmatprep.subr.mxu0 0.0
        %1525 = vmatpush1.msra.mxu0 0.0
        %1526 = vmatprep.subr.mxu0 0.0
        %1527 = vmatpush1.msra.mxu0 0.0
        %1528 = vmatprep.subr.mxu0 0.0
        %1529 = vmatpush1.msra.mxu0 0.0
        %1530 = vmatprep.subr.mxu0 0.0
        %1531 = vmatpush1.msra.mxu0 0.0
        %1532 = vmatprep.subr.mxu0 0.0
        %1533 = vmatpush1.msra.mxu0 0.0
        %1534 = vmatprep.subr.mxu0 0.0
        %1535 = vmatpush1.msra.mxu0 0.0
        %1536 = vmatprep.subr.mxu0 0.0
        %1537 = vmatpush1.msra.mxu0 0.0
        %1538 = vmatprep.subr.mxu0 0.0
        %1539 = vmatpush1.msra.mxu0 0.0
        %1540 = vmatprep.subr.mxu0 0.0
        %1541 = vmatpush1.msra.mxu0 0.0
        %1542 = vmatprep.subr.mxu0 0.0
        %1543 = vmatpush1.msra.mxu0 0.0
        %1544 = vmatprep.subr.mxu0 0.0
        %1545 = vmatpush1.msra.mxu0 0.0
        %1546 = vmatprep.mubr.f32.mxu0 0.0
        %1547 = vmatmul.mubr.f32.gmra.mrb[0].mxu0 %v1480
        %v1548 = vpop.f32.mrb[0].mxu0
        %v1549 = vadd.f32 0.0, %v1548
        %v1550 = vpop.f32.mrb[0].mxu0
        %1551 = vdwg.mxu0
        %v1552 = vld [vmem:[#allocation24] sm:$0xff]
        %1553 = vrot.lane.b32.xlu0 %v1378, 120
        %v1554 = vpop.permute.xlu0 %1553
        %1555 = vrot.lane.b32.xlu0 %v1381, 120
        %v1556 = vpop.permute.xlu0 %1555
        %v1557 = vsel %vm1383, %v1554, 0
        %v1559 = vsel %vm1383, %v1556, 0
        %1561 = vmatprep.subr.mxu0 0.0
        %1562 = vmatpush1.xpose.msra.mxu0 %v1559
        %1563 = vmatprep.subr.mxu0 0.0
        %1564 = vmatpush1.xpose.msra.mxu0 0.0
        %1565 = vmatprep.subr.mxu0 0.0
        %1566 = vmatpush1.xpose.msra.mxu0 0.0
        %1567 = vmatprep.subr.mxu0 0.0
        %1568 = vmatpush1.xpose.msra.mxu0 0.0
        %1569 = vmatprep.subr.mxu0 0.0
        %1570 = vmatpush1.xpose.msra.mxu0 0.0
        %1571 = vmatprep.subr.mxu0 0.0
        %1572 = vmatpush1.xpose.msra.mxu0 0.0
        %1573 = vmatprep.subr.mxu0 0.0
        %1574 = vmatpush1.xpose.msra.mxu0 0.0
        %1575 = vmatprep.subr.mxu0 0.0
        %1576 = vmatpush1.xpose.msra.mxu0 0.0
        %1577 = vmatprep.subr.mxu0 0.0
        %1578 = vmatpush1.xpose.msra.mxu0 0.0
        %1579 = vmatprep.subr.mxu0 0.0
        %1580 = vmatpush1.xpose.msra.mxu0 0.0
        %1581 = vmatprep.subr.mxu0 0.0
        %1582 = vmatpush1.xpose.msra.mxu0 0.0
        %1583 = vmatprep.subr.mxu0 0.0
        %1584 = vmatpush1.xpose.msra.mxu0 0.0
        %1585 = vmatprep.subr.mxu0 0.0
        %1586 = vmatpush1.xpose.msra.mxu0 0.0
        %1587 = vmatprep.subr.mxu0 0.0
        %1588 = vmatpush1.xpose.msra.mxu0 0.0
        %1589 = vmatprep.subr.mxu0 0.0
        %1590 = vmatpush1.xpose.msra.mxu0 0.0
        %1591 = vmatprep.subr.mxu0 0.0
        %1592 = vmatpush1.xpose.msra.mxu0 0.0
        %1593 = vmatprep.subr.mxu0 0.0
        %1594 = vmatpush1.xpose.msra.mxu0 0.0
        %1595 = vmatprep.subr.mxu0 0.0
        %1596 = vmatpush1.xpose.msra.mxu0 0.0
        %1597 = vmatprep.subr.mxu0 0.0
        %1598 = vmatpush1.xpose.msra.mxu0 0.0
        %1599 = vmatprep.subr.mxu0 0.0
        %1600 = vmatpush1.xpose.msra.mxu0 0.0
        %1601 = vmatprep.subr.mxu0 0.0
        %1602 = vmatpush1.xpose.msra.mxu0 0.0
        %1603 = vmatprep.subr.mxu0 0.0
        %1604 = vmatpush1.xpose.msra.mxu0 0.0
        %1605 = vmatprep.subr.mxu0 0.0
        %1606 = vmatpush1.xpose.msra.mxu0 0.0
        %1607 = vmatprep.subr.mxu0 0.0
        %1608 = vmatpush1.xpose.msra.mxu0 0.0
        %1609 = vmatprep.subr.mxu0 0.0
        %1610 = vmatpush1.xpose.msra.mxu0 0.0
        %1611 = vmatprep.subr.mxu0 0.0
        %1612 = vmatpush1.xpose.msra.mxu0 0.0
        %1613 = vmatprep.subr.mxu0 0.0
        %1614 = vmatpush1.xpose.msra.mxu0 0.0
        %1615 = vmatprep.subr.mxu0 0.0
        %1616 = vmatpush1.xpose.msra.mxu0 0.0
        %1617 = vmatprep.subr.mxu0 0.0
        %1618 = vmatpush1.xpose.msra.mxu0 0.0
        %1619 = vmatprep.subr.mxu0 0.0
        %1620 = vmatpush1.xpose.msra.mxu0 0.0
        %1621 = vmatprep.subr.mxu0 0.0
        %1622 = vmatpush1.xpose.msra.mxu0 0.0
        %1623 = vmatprep.subr.mxu0 0.0
        %1624 = vmatpush1.xpose.msra.mxu0 0.0
        %1625 = vmatprep.mubr.f32.mxu0 0.0
        %1626 = vmatmul.mubr.f32.gmra.mrb[0].mxu0 %v1557
        %v1627 = vpop.f32.mrb[0].mxu0
        %v1628 = vadd.f32 0.0, %v1627
        %v1629 = vpop.f32.mrb[0].mxu0
        %1630 = vdwg.mxu0
        %v1631 = vmul.f32 %v1628, 0.35355338
        %v1632 = vadd.f32 %v1631, %v1465
        %v1633 = vsel %vm1383, %v1632, -inf
        %1634 = vmax.xlane.f32.xlu0 %v1633
        %v1635 = vpop.xlane.xlu0 %1634
        %v1636 = vsub.f32 %v1632, %v1635
        %v1637 = vmul.f32 %v1636, 1.442695
        %v1638 = vpow.pop %v1637
        %v1639 = vsel %vm1383, %v1638, 0.0
        %1640 = vadd.xlane.f32.xlu0 %v1639
        %v1641 = vpop.xlane.xlu0 %1640
        %v1642 = vrcp.pop %v1641
        %v1643 = vmul.f32 %v1638, %v1642
        %1645 = vrot.lane.b32.xlu0 %v1382, 120
        %v1646 = vpop.permute.xlu0 %1645
        %v1649 = vsel %vm1383, %v1643, 0
        %1651 = vmatprep.subr.mxu0 0.0
        %1652 = vmatpush1.msra.mxu0 %v1646
        %1653 = vmatprep.subr.mxu0 0.0
        %1654 = vmatpush1.msra.mxu0 0.0
        %1655 = vmatprep.subr.mxu0 0.0
        %1656 = vmatpush1.msra.mxu0 0.0
        %1657 = vmatprep.subr.mxu0 0.0
        %1658 = vmatpush1.msra.mxu0 0.0
        %1659 = vmatprep.subr.mxu0 0.0
        %1660 = vmatpush1.msra.mxu0 0.0
        %1661 = vmatprep.subr.mxu0 0.0
        %1662 = vmatpush1.msra.mxu0 0.0
        %1663 = vmatprep.subr.mxu0 0.0
        %1664 = vmatpush1.msra.mxu0 0.0
        %1665 = vmatprep.subr.mxu0 0.0
        %1666 = vmatpush1.msra.mxu0 0.0
        %1667 = vmatprep.subr.mxu0 0.0
        %1668 = vmatpush1.msra.mxu0 0.0
        %1669 = vmatprep.subr.mxu0 0.0
        %1670 = vmatpush1.msra.mxu0 0.0
        %1671 = vmatprep.subr.mxu0 0.0
        %1672 = vmatpush1.msra.mxu0 0.0
        %1673 = vmatprep.subr.mxu0 0.0
        %1674 = vmatpush1.msra.mxu0 0.0
        %1675 = vmatprep.subr.mxu0 0.0
        %1676 = vmatpush1.msra.mxu0 0.0
        %1677 = vmatprep.subr.mxu0 0.0
        %1678 = vmatpush1.msra.mxu0 0.0
        %1679 = vmatprep.subr.mxu0 0.0
        %1680 = vmatpush1.msra.mxu0 0.0
        %1681 = vmatprep.subr.mxu0 0.0
        %1682 = vmatpush1.msra.mxu0 0.0
        %1683 = vmatprep.subr.mxu0 0.0
        %1684 = vmatpush1.msra.mxu0 0.0
        %1685 = vmatprep.subr.mxu0 0.0
        %1686 = vmatpush1.msra.mxu0 0.0
        %1687 = vmatprep.subr.mxu0 0.0
        %1688 = vmatpush1.msra.mxu0 0.0
        %1689 = vmatprep.subr.mxu0 0.0
        %1690 = vmatpush1.msra.mxu0 0.0
        %1691 = vmatprep.subr.mxu0 0.0
        %1692 = vmatpush1.msra.mxu0 0.0
        %1693 = vmatprep.subr.mxu0 0.0
        %1694 = vmatpush1.msra.mxu0 0.0
        %1695 = vmatprep.subr.mxu0 0.0
        %1696 = vmatpush1.msra.mxu0 0.0
        %1697 = vmatprep.subr.mxu0 0.0
        %1698 = vmatpush1.msra.mxu0 0.0
        %1699 = vmatprep.subr.mxu0 0.0
        %1700 = vmatpush1.msra.mxu0 0.0
        %1701 = vmatprep.subr.mxu0 0.0
        %1702 = vmatpush1.msra.mxu0 0.0
        %1703 = vmatprep.subr.mxu0 0.0
        %1704 = vmatpush1.msra.mxu0 0.0
        %1705 = vmatprep.subr.mxu0 0.0
        %1706 = vmatpush1.msra.mxu0 0.0
        %1707 = vmatprep.subr.mxu0 0.0
        %1708 = vmatpush1.msra.mxu0 0.0
        %1709 = vmatprep.subr.mxu0 0.0
        %1710 = vmatpush1.msra.mxu0 0.0
        %1711 = vmatprep.subr.mxu0 0.0
        %1712 = vmatpush1.msra.mxu0 0.0
        %1713 = vmatprep.subr.mxu0 0.0
        %1714 = vmatpush1.msra.mxu0 0.0
        %1715 = vmatprep.mubr.f32.mxu0 0.0
        %1716 = vmatmul.mubr.f32.gmra.mrb[0].mxu0 %v1649
        %v1717 = vpop.f32.mrb[0].mxu0
        %v1718 = vadd.f32 0.0, %v1717
        %v1719 = vpop.f32.mrb[0].mxu0
        %1720 = vdwg.mxu0
        %v1721 = vld [vmem:[#allocation24 + $0x8] sm:$0xff]
        %v1723 = vsel %vm1383, %v1718, 0
        %1725 = vmatprep.subr.mxu0 0.0
        %1726 = vmatpush1.msra.mxu0 %v1721
        %1727 = vmatprep.subr.mxu0 0.0
        %1728 = vmatpush1.msra.mxu0 0.0
        %1729 = vmatprep.subr.mxu0 0.0
        %1730 = vmatpush1.msra.mxu0 0.0
        %1731 = vmatprep.subr.mxu0 0.0
        %1732 = vmatpush1.msra.mxu0 0.0
        %1733 = vmatprep.subr.mxu0 0.0
        %1734 = vmatpush1.msra.mxu0 0.0
        %1735 = vmatprep.subr.mxu0 0.0
        %1736 = vmatpush1.msra.mxu0 0.0
        %1737 = vmatprep.subr.mxu0 0.0
        %1738 = vmatpush1.msra.mxu0 0.0
        %1739 = vmatprep.subr.mxu0 0.0
        %1740 = vmatpush1.msra.mxu0 0.0
        %1741 = vmatprep.subr.mxu0 0.0
        %1742 = vmatpush1.msra.mxu0 0.0
        %1743 = vmatprep.subr.mxu0 0.0
        %1744 = vmatpush1.msra.mxu0 0.0
        %1745 = vmatprep.subr.mxu0 0.0
        %1746 = vmatpush1.msra.mxu0 0.0
        %1747 = vmatprep.subr.mxu0 0.0
        %1748 = vmatpush1.msra.mxu0 0.0
        %1749 = vmatprep.subr.mxu0 0.0
        %1750 = vmatpush1.msra.mxu0 0.0
        %1751 = vmatprep.subr.mxu0 0.0
        %1752 = vmatpush1.msra.mxu0 0.0
        %1753 = vmatprep.subr.mxu0 0.0
        %1754 = vmatpush1.msra.mxu0 0.0
        %1755 = vmatprep.subr.mxu0 0.0
        %1756 = vmatpush1.msra.mxu0 0.0
        %1757 = vmatprep.subr.mxu0 0.0
        %1758 = vmatpush1.msra.mxu0 0.0
        %1759 = vmatprep.subr.mxu0 0.0
        %1760 = vmatpush1.msra.mxu0 0.0
        %1761 = vmatprep.subr.mxu0 0.0
        %1762 = vmatpush1.msra.mxu0 0.0
        %1763 = vmatprep.subr.mxu0 0.0
        %1764 = vmatpush1.msra.mxu0 0.0
        %1765 = vmatprep.subr.mxu0 0.0
        %1766 = vmatpush1.msra.mxu0 0.0
        %1767 = vmatprep.subr.mxu0 0.0
        %1768 = vmatpush1.msra.mxu0 0.0
        %1769 = vmatprep.subr.mxu0 0.0
        %1770 = vmatpush1.msra.mxu0 0.0
        %1771 = vmatprep.subr.mxu0 0.0
        %1772 = vmatpush1.msra.mxu0 0.0
        %1773 = vmatprep.subr.mxu0 0.0
        %1774 = vmatpush1.msra.mxu0 0.0
        %1775 = vmatprep.subr.mxu0 0.0
        %1776 = vmatpush1.msra.mxu0 0.0
        %1777 = vmatprep.subr.mxu0 0.0
        %1778 = vmatpush1.msra.mxu0 0.0
        %1779 = vmatprep.subr.mxu0 0.0
        %1780 = vmatpush1.msra.mxu0 0.0
        %1781 = vmatprep.subr.mxu0 0.0
        %1782 = vmatpush1.msra.mxu0 0.0
        %1783 = vmatprep.subr.mxu0 0.0
        %1784 = vmatpush1.msra.mxu0 0.0
        %1785 = vmatprep.subr.mxu0 0.0
        %1786 = vmatpush1.msra.mxu0 0.0
        %1787 = vmatprep.subr.mxu0 0.0
        %1788 = vmatpush1.msra.mxu0 0.0
        %1789 = vmatprep.mubr.f32.mxu0 0.0
        %1790 = vmatmul.mubr.f32.gmra.mrb[0].mxu0 %v1723
        %v1791 = vpop.f32.mrb[0].mxu0
        %v1792 = vadd.f32 0.0, %v1791
        %v1793 = vpop.f32.mrb[0].mxu0
        %1794 = vdwg.mxu0
        %v1796 = vsel %vm1383, %v1549, 0
        %1798 = vmatprep.subr.mxu0 0.0
        %1799 = vmatpush1.msra.mxu0 %v1552
        %1800 = vmatprep.subr.mxu0 0.0
        %1801 = vmatpush1.msra.mxu0 0.0
        %1802 = vmatprep.subr.mxu0 0.0
        %1803 = vmatpush1.msra.mxu0 0.0
        %1804 = vmatprep.subr.mxu0 0.0
        %1805 = vmatpush1.msra.mxu0 0.0
        %1806 = vmatprep.subr.mxu0 0.0
        %1807 = vmatpush1.msra.mxu0 0.0
        %1808 = vmatprep.subr.mxu0 0.0
        %1809 = vmatpush1.msra.mxu0 0.0
        %1810 = vmatprep.subr.mxu0 0.0
        %1811 = vmatpush1.msra.mxu0 0.0
        %1812 = vmatprep.subr.mxu0 0.0
        %1813 = vmatpush1.msra.mxu0 0.0
        %1814 = vmatprep.subr.mxu0 0.0
        %1815 = vmatpush1.msra.mxu0 0.0
        %1816 = vmatprep.subr.mxu0 0.0
        %1817 = vmatpush1.msra.mxu0 0.0
        %1818 = vmatprep.subr.mxu0 0.0
        %1819 = vmatpush1.msra.mxu0 0.0
        %1820 = vmatprep.subr.mxu0 0.0
        %1821 = vmatpush1.msra.mxu0 0.0
        %1822 = vmatprep.subr.mxu0 0.0
        %1823 = vmatpush1.msra.mxu0 0.0
        %1824 = vmatprep.subr.mxu0 0.0
        %1825 = vmatpush1.msra.mxu0 0.0
        %1826 = vmatprep.subr.mxu0 0.0
        %1827 = vmatpush1.msra.mxu0 0.0
        %1828 = vmatprep.subr.mxu0 0.0
        %1829 = vmatpush1.msra.mxu0 0.0
        %1830 = vmatprep.subr.mxu0 0.0
        %1831 = vmatpush1.msra.mxu0 0.0
        %1832 = vmatprep.subr.mxu0 0.0
        %1833 = vmatpush1.msra.mxu0 0.0
        %1834 = vmatprep.subr.mxu0 0.0
        %1835 = vmatpush1.msra.mxu0 0.0
        %1836 = vmatprep.subr.mxu0 0.0
        %1837 = vmatpush1.msra.mxu0 0.0
        %1838 = vmatprep.subr.mxu0 0.0
        %1839 = vmatpush1.msra.mxu0 0.0
        %1840 = vmatprep.subr.mxu0 0.0
        %1841 = vmatpush1.msra.mxu0 0.0
        %1842 = vmatprep.subr.mxu0 0.0
        %1843 = vmatpush1.msra.mxu0 0.0
        %1844 = vmatprep.subr.mxu0 0.0
        %1845 = vmatpush1.msra.mxu0 0.0
        %1846 = vmatprep.subr.mxu0 0.0
        %1847 = vmatpush1.msra.mxu0 0.0
        %1848 = vmatprep.subr.mxu0 0.0
        %1849 = vmatpush1.msra.mxu0 0.0
        %1850 = vmatprep.subr.mxu0 0.0
        %1851 = vmatpush1.msra.mxu0 0.0
        %1852 = vmatprep.subr.mxu0 0.0
        %1853 = vmatpush1.msra.mxu0 0.0
        %1854 = vmatprep.subr.mxu0 0.0
        %1855 = vmatpush1.msra.mxu0 0.0
        %1856 = vmatprep.subr.mxu0 0.0
        %1857 = vmatpush1.msra.mxu0 0.0
        %1858 = vmatprep.subr.mxu0 0.0
        %1859 = vmatpush1.msra.mxu0 0.0
        %1860 = vmatprep.subr.mxu0 0.0
        %1861 = vmatpush1.msra.mxu0 0.0
        %1862 = vmatprep.mubr.f32.mxu0 0.0
        %1863 = vmatmul.mubr.f32.gmra.mrb[0].mxu0 %v1796
        %v1864 = vpop.f32.mrb[0].mxu0
        %v1865 = vadd.f32 %v1792, %v1864
        %v1866 = vpop.f32.mrb[0].mxu0
        %1867 = vdwg.mxu0
        %1868 = vrot.lane.b32.xlu0 %v1378, 112
        %v1869 = vpop.permute.xlu0 %1868
        %1870 = vrot.lane.b32.xlu0 %v1381, 112
        %v1871 = vpop.permute.xlu0 %1870
        %v1872 = vsel %vm1383, %v1869, 0
        %v1874 = vsel %vm1383, %v1871, 0
        %1876 = vmatprep.subr.mxu0 0.0
        %1877 = vmatpush1.xpose.msra.mxu0 %v1874
        %1878 = vmatprep.subr.mxu0 0.0
        %1879 = vmatpush1.xpose.msra.mxu0 0.0
        %1880 = vmatprep.subr.mxu0 0.0
        %1881 = vmatpush1.xpose.msra.mxu0 0.0
        %1882 = vmatprep.subr.mxu0 0.0
        %1883 = vmatpush1.xpose.msra.mxu0 0.0
        %1884 = vmatprep.subr.mxu0 0.0
        %1885 = vmatpush1.xpose.msra.mxu0 0.0
        %1886 = vmatprep.subr.mxu0 0.0
        %1887 = vmatpush1.xpose.msra.mxu0 0.0
        %1888 = vmatprep.subr.mxu0 0.0
        %1889 = vmatpush1.xpose.msra.mxu0 0.0
        %1890 = vmatprep.subr.mxu0 0.0
        %1891 = vmatpush1.xpose.msra.mxu0 0.0
        %1892 = vmatprep.subr.mxu0 0.0
        %1893 = vmatpush1.xpose.msra.mxu0 0.0
        %1894 = vmatprep.subr.mxu0 0.0
        %1895 = vmatpush1.xpose.msra.mxu0 0.0
        %1896 = vmatprep.subr.mxu0 0.0
        %1897 = vmatpush1.xpose.msra.mxu0 0.0
        %1898 = vmatprep.subr.mxu0 0.0
        %1899 = vmatpush1.xpose.msra.mxu0 0.0
        %1900 = vmatprep.subr.mxu0 0.0
        %1901 = vmatpush1.xpose.msra.mxu0 0.0
        %1902 = vmatprep.subr.mxu0 0.0
        %1903 = vmatpush1.xpose.msra.mxu0 0.0
        %1904 = vmatprep.subr.mxu0 0.0
        %1905 = vmatpush1.xpose.msra.mxu0 0.0
        %1906 = vmatprep.subr.mxu0 0.0
        %1907 = vmatpush1.xpose.msra.mxu0 0.0
        %1908 = vmatprep.subr.mxu0 0.0
        %1909 = vmatpush1.xpose.msra.mxu0 0.0
        %1910 = vmatprep.subr.mxu0 0.0
        %1911 = vmatpush1.xpose.msra.mxu0 0.0
        %1912 = vmatprep.subr.mxu0 0.0
        %1913 = vmatpush1.xpose.msra.mxu0 0.0
        %1914 = vmatprep.subr.mxu0 0.0
        %1915 = vmatpush1.xpose.msra.mxu0 0.0
        %1916 = vmatprep.subr.mxu0 0.0
        %1917 = vmatpush1.xpose.msra.mxu0 0.0
        %1918 = vmatprep.subr.mxu0 0.0
        %1919 = vmatpush1.xpose.msra.mxu0 0.0
        %1920 = vmatprep.subr.mxu0 0.0
        %1921 = vmatpush1.xpose.msra.mxu0 0.0
        %1922 = vmatprep.subr.mxu0 0.0
        %1923 = vmatpush1.xpose.msra.mxu0 0.0
        %1924 = vmatprep.subr.mxu0 0.0
        %1925 = vmatpush1.xpose.msra.mxu0 0.0
        %1926 = vmatprep.subr.mxu0 0.0
        %1927 = vmatpush1.xpose.msra.mxu0 0.0
        %1928 = vmatprep.subr.mxu0 0.0
        %1929 = vmatpush1.xpose.msra.mxu0 0.0
        %1930 = vmatprep.subr.mxu0 0.0
        %1931 = vmatpush1.xpose.msra.mxu0 0.0
        %1932 = vmatprep.subr.mxu0 0.0
        %1933 = vmatpush1.xpose.msra.mxu0 0.0
        %1934 = vmatprep.subr.mxu0 0.0
        %1935 = vmatpush1.xpose.msra.mxu0 0.0
        %1936 = vmatprep.subr.mxu0 0.0
        %1937 = vmatpush1.xpose.msra.mxu0 0.0
        %1938 = vmatprep.subr.mxu0 0.0
        %1939 = vmatpush1.xpose.msra.mxu0 0.0
        %1940 = vmatprep.mubr.f32.mxu0 0.0
        %1941 = vmatmul.mubr.f32.gmra.mrb[0].mxu0 %v1872
        %v1942 = vpop.f32.mrb[0].mxu0
        %v1943 = vadd.f32 0.0, %v1942
        %v1944 = vpop.f32.mrb[0].mxu0
        %1945 = vdwg.mxu0
        %v1946 = vmul.f32 %v1943, 0.35355338
        %v1947 = vadd.f32 %v1946, %v1465
        %v1948 = vsel %vm1383, %v1947, -inf
        %1949 = vmax.xlane.f32.xlu0 %v1948
        %v1950 = vpop.xlane.xlu0 %1949
        %v1951 = vsub.f32 %v1947, %v1950
        %v1952 = vmul.f32 %v1951, 1.442695
        %v1953 = vpow.pop %v1952
        %v1954 = vsel %vm1383, %v1953, 0.0
        %1955 = vadd.xlane.f32.xlu0 %v1954
        %v1956 = vpop.xlane.xlu0 %1955
        %v1957 = vrcp.pop %v1956
        %v1958 = vmul.f32 %v1953, %v1957
        %1959 = vrot.lane.b32.xlu0 %v1382, 112
        %v1960 = vpop.permute.xlu0 %1959
        %v1963 = vsel %vm1383, %v1958, 0
        %1965 = vmatprep.subr.mxu0 0.0
        %1966 = vmatpush1.msra.mxu0 %v1960
        %1967 = vmatprep.subr.mxu0 0.0
        %1968 = vmatpush1.msra.mxu0 0.0
        %1969 = vmatprep.subr.mxu0 0.0
        %1970 = vmatpush1.msra.mxu0 0.0
        %1971 = vmatprep.subr.mxu0 0.0
        %1972 = vmatpush1.msra.mxu0 0.0
        %1973 = vmatprep.subr.mxu0 0.0
        %1974 = vmatpush1.msra.mxu0 0.0
        %1975 = vmatprep.subr.mxu0 0.0
        %1976 = vmatpush1.msra.mxu0 0.0
        %1977 = vmatprep.subr.mxu0 0.0
        %1978 = vmatpush1.msra.mxu0 0.0
        %1979 = vmatprep.subr.mxu0 0.0
        %1980 = vmatpush1.msra.mxu0 0.0
        %1981 = vmatprep.subr.mxu0 0.0
        %1982 = vmatpush1.msra.mxu0 0.0
        %1983 = vmatprep.subr.mxu0 0.0
        %1984 = vmatpush1.msra.mxu0 0.0
        %1985 = vmatprep.subr.mxu0 0.0
        %1986 = vmatpush1.msra.mxu0 0.0
        %1987 = vmatprep.subr.mxu0 0.0
        %1988 = vmatpush1.msra.mxu0 0.0
        %1989 = vmatprep.subr.mxu0 0.0
        %1990 = vmatpush1.msra.mxu0 0.0
        %1991 = vmatprep.subr.mxu0 0.0
        %1992 = vmatpush1.msra.mxu0 0.0
        %1993 = vmatprep.subr.mxu0 0.0
        %1994 = vmatpush1.msra.mxu0 0.0
        %1995 = vmatprep.subr.mxu0 0.0
        %1996 = vmatpush1.msra.mxu0 0.0
        %1997 = vmatprep.subr.mxu0 0.0
        %1998 = vmatpush1.msra.mxu0 0.0
        %1999 = vmatprep.subr.mxu0 0.0
        %2000 = vmatpush1.msra.mxu0 0.0
        %2001 = vmatprep.subr.mxu0 0.0
        %2002 = vmatpush1.msra.mxu0 0.0
        %2003 = vmatprep.subr.mxu0 0.0
        %2004 = vmatpush1.msra.mxu0 0.0
        %2005 = vmatprep.subr.mxu0 0.0
        %2006 = vmatpush1.msra.mxu0 0.0
        %2007 = vmatprep.subr.mxu0 0.0
        %2008 = vmatpush1.msra.mxu0 0.0
        %2009 = vmatprep.subr.mxu0 0.0
        %2010 = vmatpush1.msra.mxu0 0.0
        %2011 = vmatprep.subr.mxu0 0.0
        %2012 = vmatpush1.msra.mxu0 0.0
        %2013 = vmatprep.subr.mxu0 0.0
        %2014 = vmatpush1.msra.mxu0 0.0
        %2015 = vmatprep.subr.mxu0 0.0
        %2016 = vmatpush1.msra.mxu0 0.0
        %2017 = vmatprep.subr.mxu0 0.0
        %2018 = vmatpush1.msra.mxu0 0.0
        %2019 = vmatprep.subr.mxu0 0.0
        %2020 = vmatpush1.msra.mxu0 0.0
        %2021 = vmatprep.subr.mxu0 0.0
        %2022 = vmatpush1.msra.mxu0 0.0
        %2023 = vmatprep.subr.mxu0 0.0
        %2024 = vmatpush1.msra.mxu0 0.0
        %2025 = vmatprep.subr.mxu0 0.0
        %2026 = vmatpush1.msra.mxu0 0.0
        %2027 = vmatprep.subr.mxu0 0.0
        %2028 = vmatpush1.msra.mxu0 0.0
        %2029 = vmatprep.mubr.f32.mxu0 0.0
        %2030 = vmatmul.mubr.f32.gmra.mrb[0].mxu0 %v1963
        %v2031 = vpop.f32.mrb[0].mxu0
        %v2032 = vadd.f32 0.0, %v2031
        %v2033 = vpop.f32.mrb[0].mxu0
        %2034 = vdwg.mxu0
        %v2035 = vld [vmem:[#allocation24 + $0x10] sm:$0xff]
        %v2037 = vsel %vm1383, %v2032, 0
        %2039 = vmatprep.subr.mxu0 0.0
        %2040 = vmatpush1.msra.mxu0 %v2035
        %2041 = vmatprep.subr.mxu0 0.0
        %2042 = vmatpush1.msra.mxu0 0.0
        %2043 = vmatprep.subr.mxu0 0.0
        %2044 = vmatpush1.msra.mxu0 0.0
        %2045 = vmatprep.subr.mxu0 0.0
        %2046 = vmatpush1.msra.mxu0 0.0
        %2047 = vmatprep.subr.mxu0 0.0
        %2048 = vmatpush1.msra.mxu0 0.0
        %2049 = vmatprep.subr.mxu0 0.0
        %2050 = vmatpush1.msra.mxu0 0.0
        %2051 = vmatprep.subr.mxu0 0.0
        %2052 = vmatpush1.msra.mxu0 0.0
        %2053 = vmatprep.subr.mxu0 0.0
        %2054 = vmatpush1.msra.mxu0 0.0
        %2055 = vmatprep.subr.mxu0 0.0
        %2056 = vmatpush1.msra.mxu0 0.0
        %2057 = vmatprep.subr.mxu0 0.0
        %2058 = vmatpush1.msra.mxu0 0.0
        %2059 = vmatprep.subr.mxu0 0.0
        %2060 = vmatpush1.msra.mxu0 0.0
        %2061 = vmatprep.subr.mxu0 0.0
        %2062 = vmatpush1.msra.mxu0 0.0
        %2063 = vmatprep.subr.mxu0 0.0
        %2064 = vmatpush1.msra.mxu0 0.0
        %2065 = vmatprep.subr.mxu0 0.0
        %2066 = vmatpush1.msra.mxu0 0.0
        %2067 = vmatprep.subr.mxu0 0.0
        %2068 = vmatpush1.msra.mxu0 0.0
        %2069 = vmatprep.subr.mxu0 0.0
        %2070 = vmatpush1.msra.mxu0 0.0
        %2071 = vmatprep.subr.mxu0 0.0
        %2072 = vmatpush1.msra.mxu0 0.0
        %2073 = vmatprep.subr.mxu0 0.0
        %2074 = vmatpush1.msra.mxu0 0.0
        %2075 = vmatprep.subr.mxu0 0.0
        %2076 = vmatpush1.msra.mxu0 0.0
        %2077 = vmatprep.subr.mxu0 0.0
        %2078 = vmatpush1.msra.mxu0 0.0
        %2079 = vmatprep.subr.mxu0 0.0
        %2080 = vmatpush1.msra.mxu0 0.0
        %2081 = vmatprep.subr.mxu0 0.0
        %2082 = vmatpush1.msra.mxu0 0.0
        %2083 = vmatprep.subr.mxu0 0.0
        %2084 = vmatpush1.msra.mxu0 0.0
        %2085 = vmatprep.subr.mxu0 0.0
        %2086 = vmatpush1.msra.mxu0 0.0
        %2087 = vmatprep.subr.mxu0 0.0
        %2088 = vmatpush1.msra.mxu0 0.0
        %2089 = vmatprep.subr.mxu0 0.0
        %2090 = vmatpush1.msra.mxu0 0.0
        %2091 = vmatprep.subr.mxu0 0.0
        %2092 = vmatpush1.msra.mxu0 0.0
        %2093 = vmatprep.subr.mxu0 0.0
        %2094 = vmatpush1.msra.mxu0 0.0
        %2095 = vmatprep.subr.mxu0 0.0
        %2096 = vmatpush1.msra.mxu0 0.0
        %2097 = vmatprep.subr.mxu0 0.0
        %2098 = vmatpush1.msra.mxu0 0.0
        %2099 = vmatprep.subr.mxu0 0.0
        %2100 = vmatpush1.msra.mxu0 0.0
        %2101 = vmatprep.subr.mxu0 0.0
        %2102 = vmatpush1.msra.mxu0 0.0
        %2103 = vmatprep.mubr.f32.mxu0 0.0
        %2104 = vmatmul.mubr.f32.gmra.mrb[0].mxu0 %v2037
        %v2105 = vpop.f32.mrb[0].mxu0
        %v2106 = vadd.f32 0.0, %v2105
        %v2107 = vpop.f32.mrb[0].mxu0
        %2108 = vdwg.mxu0
        %v2109 = vadd.f32 %v1865, %v2106
        %2110 = vrot.lane.b32.xlu0 %v1378, 104
        %v2111 = vpop.permute.xlu0 %2110
        %2112 = vrot.lane.b32.xlu0 %v1381, 104
        %v2113 = vpop.permute.xlu0 %2112
        %v2114 = vsel %vm1383, %v2111, 0
        %v2116 = vsel %vm1383, %v2113, 0
        %2118 = vmatprep.subr.mxu0 0.0
        %2119 = vmatpush1.xpose.msra.mxu0 %v2116
        %2120 = vmatprep.subr.mxu0 0.0
        %2121 = vmatpush1.xpose.msra.mxu0 0.0
        %2122 = vmatprep.subr.mxu0 0.0
        %2123 = vmatpush1.xpose.msra.mxu0 0.0
        %2124 = vmatprep.subr.mxu0 0.0
        %2125 = vmatpush1.xpose.msra.mxu0 0.0
        %2126 = vmatprep.subr.mxu0 0.0
        %2127 = vmatpush1.xpose.msra.mxu0 0.0
        %2128 = vmatprep.subr.mxu0 0.0
        %2129 = vmatpush1.xpose.msra.mxu0 0.0
        %2130 = vmatprep.subr.mxu0 0.0
        %2131 = vmatpush1.xpose.msra.mxu0 0.0
        %2132 = vmatprep.subr.mxu0 0.0
        %2133 = vmatpush1.xpose.msra.mxu0 0.0
        %2134 = vmatprep.subr.mxu0 0.0
        %2135 = vmatpush1.xpose.msra.mxu0 0.0
        %2136 = vmatprep.subr.mxu0 0.0
        %2137 = vmatpush1.xpose.msra.mxu0 0.0
        %2138 = vmatprep.subr.mxu0 0.0
        %2139 = vmatpush1.xpose.msra.mxu0 0.0
        %2140 = vmatprep.subr.mxu0 0.0
        %2141 = vmatpush1.xpose.msra.mxu0 0.0
        %2142 = vmatprep.subr.mxu0 0.0
        %2143 = vmatpush1.xpose.msra.mxu0 0.0
        %2144 = vmatprep.subr.mxu0 0.0
        %2145 = vmatpush1.xpose.msra.mxu0 0.0
        %2146 = vmatprep.subr.mxu0 0.0
        %2147 = vmatpush1.xpose.msra.mxu0 0.0
        %2148 = vmatprep.subr.mxu0 0.0
        %2149 = vmatpush1.xpose.msra.mxu0 0.0
        %2150 = vmatprep.subr.mxu0 0.0
        %2151 = vmatpush1.xpose.msra.mxu0 0.0
        %2152 = vmatprep.subr.mxu0 0.0
        %2153 = vmatpush1.xpose.msra.mxu0 0.0
        %2154 = vmatprep.subr.mxu0 0.0
        %2155 = vmatpush1.xpose.msra.mxu0 0.0
        %2156 = vmatprep.subr.mxu0 0.0
        %2157 = vmatpush1.xpose.msra.mxu0 0.0
        %2158 = vmatprep.subr.mxu0 0.0
        %2159 = vmatpush1.xpose.msra.mxu0 0.0
        %2160 = vmatprep.subr.mxu0 0.0
        %2161 = vmatpush1.xpose.msra.mxu0 0.0
        %2162 = vmatprep.subr.mxu0 0.0
        %2163 = vmatpush1.xpose.msra.mxu0 0.0
        %2164 = vmatprep.subr.mxu0 0.0
        %2165 = vmatpush1.xpose.msra.mxu0 0.0
        %2166 = vmatprep.subr.mxu0 0.0
        %2167 = vmatpush1.xpose.msra.mxu0 0.0
        %2168 = vmatprep.subr.mxu0 0.0
        %2169 = vmatpush1.xpose.msra.mxu0 0.0
        %2170 = vmatprep.subr.mxu0 0.0
        %2171 = vmatpush1.xpose.msra.mxu0 0.0
        %2172 = vmatprep.subr.mxu0 0.0
        %2173 = vmatpush1.xpose.msra.mxu0 0.0
        %2174 = vmatprep.subr.mxu0 0.0
        %2175 = vmatpush1.xpose.msra.mxu0 0.0
        %2176 = vmatprep.subr.mxu0 0.0
        %2177 = vmatpush1.xpose.msra.mxu0 0.0
        %2178 = vmatprep.subr.mxu0 0.0
        %2179 = vmatpush1.xpose.msra.mxu0 0.0
        %2180 = vmatprep.subr.mxu0 0.0
        %2181 = vmatpush1.xpose.msra.mxu0 0.0
        %2182 = vmatprep.mubr.f32.mxu0 0.0
        %2183 = vmatmul.mubr.f32.gmra.mrb[0].mxu0 %v2114
        %v2184 = vpop.f32.mrb[0].mxu0
        %v2185 = vadd.f32 0.0, %v2184
        %v2186 = vpop.f32.mrb[0].mxu0
        %2187 = vdwg.mxu0
        %v2188 = vmul.f32 %v2185, 0.35355338
        %v2189 = vadd.f32 %v2188, %v1465
        %v2190 = vsel %vm1383, %v2189, -inf
        %2191 = vmax.xlane.f32.xlu0 %v2190
        %v2192 = vpop.xlane.xlu0 %2191
        %v2193 = vsub.f32 %v2189, %v2192
        %v2194 = vmul.f32 %v2193, 1.442695
        %v2195 = vpow.pop %v2194
        %v2196 = vsel %vm1383, %v2195, 0.0
        %2197 = vadd.xlane.f32.xlu0 %v2196
        %v2198 = vpop.xlane.xlu0 %2197
        %v2199 = vrcp.pop %v2198
        %v2200 = vmul.f32 %v2195, %v2199
        %2201 = vrot.lane.b32.xlu0 %v1382, 104
        %v2202 = vpop.permute.xlu0 %2201
        %v2205 = vsel %vm1383, %v2200, 0
        %2207 = vmatprep.subr.mxu0 0.0
        %2208 = vmatpush1.msra.mxu0 %v2202
        %2209 = vmatprep.subr.mxu0 0.0
        %2210 = vmatpush1.msra.mxu0 0.0
        %2211 = vmatprep.subr.mxu0 0.0
        %2212 = vmatpush1.msra.mxu0 0.0
        %2213 = vmatprep.subr.mxu0 0.0
        %2214 = vmatpush1.msra.mxu0 0.0
        %2215 = vmatprep.subr.mxu0 0.0
        %2216 = vmatpush1.msra.mxu0 0.0
        %2217 = vmatprep.subr.mxu0 0.0
        %2218 = vmatpush1.msra.mxu0 0.0
        %2219 = vmatprep.subr.mxu0 0.0
        %2220 = vmatpush1.msra.mxu0 0.0
        %2221 = vmatprep.subr.mxu0 0.0
        %2222 = vmatpush1.msra.mxu0 0.0
        %2223 = vmatprep.subr.mxu0 0.0
        %2224 = vmatpush1.msra.mxu0 0.0
        %2225 = vmatprep.subr.mxu0 0.0
        %2226 = vmatpush1.msra.mxu0 0.0
        %2227 = vmatprep.subr.mxu0 0.0
        %2228 = vmatpush1.msra.mxu0 0.0
        %2229 = vmatprep.subr.mxu0 0.0
        %2230 = vmatpush1.msra.mxu0 0.0
        %2231 = vmatprep.subr.mxu0 0.0
        %2232 = vmatpush1.msra.mxu0 0.0
        %2233 = vmatprep.subr.mxu0 0.0
        %2234 = vmatpush1.msra.mxu0 0.0
        %2235 = vmatprep.subr.mxu0 0.0
        %2236 = vmatpush1.msra.mxu0 0.0
        %2237 = vmatprep.subr.mxu0 0.0
        %2238 = vmatpush1.msra.mxu0 0.0
        %2239 = vmatprep.subr.mxu0 0.0
        %2240 = vmatpush1.msra.mxu0 0.0
        %2241 = vmatprep.subr.mxu0 0.0
        %2242 = vmatpush1.msra.mxu0 0.0
        %2243 = vmatprep.subr.mxu0 0.0
        %2244 = vmatpush1.msra.mxu0 0.0
        %2245 = vmatprep.subr.mxu0 0.0
        %2246 = vmatpush1.msra.mxu0 0.0
        %2247 = vmatprep.subr.mxu0 0.0
        %2248 = vmatpush1.msra.mxu0 0.0
        %2249 = vmatprep.subr.mxu0 0.0
        %2250 = vmatpush1.msra.mxu0 0.0
        %2251 = vmatprep.subr.mxu0 0.0
        %2252 = vmatpush1.msra.mxu0 0.0
        %2253 = vmatprep.subr.mxu0 0.0
        %2254 = vmatpush1.msra.mxu0 0.0
        %2255 = vmatprep.subr.mxu0 0.0
        %2256 = vmatpush1.msra.mxu0 0.0
        %2257 = vmatprep.subr.mxu0 0.0
        %2258 = vmatpush1.msra.mxu0 0.0
        %2259 = vmatprep.subr.mxu0 0.0
        %2260 = vmatpush1.msra.mxu0 0.0
        %2261 = vmatprep.subr.mxu0 0.0
        %2262 = vmatpush1.msra.mxu0 0.0
        %2263 = vmatprep.subr.mxu0 0.0
        %2264 = vmatpush1.msra.mxu0 0.0
        %2265 = vmatprep.subr.mxu0 0.0
        %2266 = vmatpush1.msra.mxu0 0.0
        %2267 = vmatprep.subr.mxu0 0.0
        %2268 = vmatpush1.msra.mxu0 0.0
        %2269 = vmatprep.subr.mxu0 0.0
        %2270 = vmatpush1.msra.mxu0 0.0
        %2271 = vmatprep.mubr.f32.mxu0 0.0
        %2272 = vmatmul.mubr.f32.gmra.mrb[0].mxu0 %v2205
        %v2273 = vpop.f32.mrb[0].mxu0
        %v2274 = vadd.f32 0.0, %v2273
        %v2275 = vpop.f32.mrb[0].mxu0
        %2276 = vdwg.mxu0
        %v2277 = vld [vmem:[#allocation24 + $0x18] sm:$0xff]
        %v2279 = vsel %vm1383, %v2274, 0
        %2281 = vmatprep.subr.mxu0 0.0
        %2282 = vmatpush1.msra.mxu0 %v2277
        %2283 = vmatprep.subr.mxu0 0.0
        %2284 = vmatpush1.msra.mxu0 0.0
        %2285 = vmatprep.subr.mxu0 0.0
        %2286 = vmatpush1.msra.mxu0 0.0
        %2287 = vmatprep.subr.mxu0 0.0
        %2288 = vmatpush1.msra.mxu0 0.0
        %2289 = vmatprep.subr.mxu0 0.0
        %2290 = vmatpush1.msra.mxu0 0.0
        %2291 = vmatprep.subr.mxu0 0.0
        %2292 = vmatpush1.msra.mxu0 0.0
        %2293 = vmatprep.subr.mxu0 0.0
        %2294 = vmatpush1.msra.mxu0 0.0
        %2295 = vmatprep.subr.mxu0 0.0
        %2296 = vmatpush1.msra.mxu0 0.0
        %2297 = vmatprep.subr.mxu0 0.0
        %2298 = vmatpush1.msra.mxu0 0.0
        %2299 = vmatprep.subr.mxu0 0.0
        %2300 = vmatpush1.msra.mxu0 0.0
        %2301 = vmatprep.subr.mxu0 0.0
        %2302 = vmatpush1.msra.mxu0 0.0
        %2303 = vmatprep.subr.mxu0 0.0
        %2304 = vmatpush1.msra.mxu0 0.0
        %2305 = vmatprep.subr.mxu0 0.0
        %2306 = vmatpush1.msra.mxu0 0.0
        %2307 = vmatprep.subr.mxu0 0.0
        %2308 = vmatpush1.msra.mxu0 0.0
        %2309 = vmatprep.subr.mxu0 0.0
        %2310 = vmatpush1.msra.mxu0 0.0
        %2311 = vmatprep.subr.mxu0 0.0
        %2312 = vmatpush1.msra.mxu0 0.0
        %2313 = vmatprep.subr.mxu0 0.0
        %2314 = vmatpush1.msra.mxu0 0.0
        %2315 = vmatprep.subr.mxu0 0.0
        %2316 = vmatpush1.msra.mxu0 0.0
        %2317 = vmatprep.subr.mxu0 0.0
        %2318 = vmatpush1.msra.mxu0 0.0
        %2319 = vmatprep.subr.mxu0 0.0
        %2320 = vmatpush1.msra.mxu0 0.0
        %2321 = vmatprep.subr.mxu0 0.0
        %2322 = vmatpush1.msra.mxu0 0.0
        %2323 = vmatprep.subr.mxu0 0.0
        %2324 = vmatpush1.msra.mxu0 0.0
        %2325 = vmatprep.subr.mxu0 0.0
        %2326 = vmatpush1.msra.mxu0 0.0
        %2327 = vmatprep.subr.mxu0 0.0
        %2328 = vmatpush1.msra.mxu0 0.0
        %2329 = vmatprep.subr.mxu0 0.0
        %2330 = vmatpush1.msra.mxu0 0.0
        %2331 = vmatprep.subr.mxu0 0.0
        %2332 = vmatpush1.msra.mxu0 0.0
        %2333 = vmatprep.subr.mxu0 0.0
        %2334 = vmatpush1.msra.mxu0 0.0
        %2335 = vmatprep.subr.mxu0 0.0
        %2336 = vmatpush1.msra.mxu0 0.0
        %2337 = vmatprep.subr.mxu0 0.0
        %2338 = vmatpush1.msra.mxu0 0.0
        %2339 = vmatprep.subr.mxu0 0.0
        %2340 = vmatpush1.msra.mxu0 0.0
        %2341 = vmatprep.subr.mxu0 0.0
        %2342 = vmatpush1.msra.mxu0 0.0
        %2343 = vmatprep.subr.mxu0 0.0
        %2344 = vmatpush1.msra.mxu0 0.0
        %2345 = vmatprep.mubr.f32.mxu0 0.0
        %2346 = vmatmul.mubr.f32.gmra.mrb[0].mxu0 %v2279
        %v2347 = vpop.f32.mrb[0].mxu0
        %v2348 = vadd.f32 0.0, %v2347
        %v2349 = vpop.f32.mrb[0].mxu0
        %2350 = vdwg.mxu0
        %v2351 = vadd.f32 %v2109, %v2348
        %v2352 = vld [vmem:[#allocation25] sm:$0x1]
        %v2354 = vlaneseq
        %v2355 = vshrl.u32 %v2354, 7
        %v2356 = vsub.s32 0, %v2355
        %v2357 = vrot.slane %v2352, %v2356
        %v2359 = vadd.f32 %v2351, %v2357
        %v2360 = vld [vmem:[#allocation27] sm:$0x1]
        %v2362 = vlaneseq
        %v2363 = vshrl.u32 %v2362, 7
        %v2364 = vsub.s32 0, %v2363
        %v2365 = vrot.slane %v2360, %v2364
        %v2367 = vmul.f32 %v2365, %v2359
        %v2368 = vadd.f32 %v1264, %v2367
        %v2369 = vld [vmem:[#allocation28] sm:$0x1]
        %v2370 = vld [vmem:[#allocation30] sm:$0x1]
        %v2371 = vsel %vm1268, %v2368, 0.0
        %2372 = vadd.xlane.f32.xlu0 %v2371
        %v2373 = vpop.xlane.xlu0 %2372
        %v2374 = vmul.f32 %v2373, %v1272
        %v2375 = vsub.f32 %v2368, %v2374
        %v2376 = vmul.f32 %v2375, %v2375
        %v2377 = vsel %vm1268, %v2376, 0.0
        %2378 = vadd.xlane.f32.xlu0 %v2377
        %v2379 = vpop.xlane.xlu0 %2378
        %v2380 = vmul.f32 %v2379, %v1272
        %v2381 = vadd.f32 %v2380, 1e-05
        %v2382 = vrsqrt.pop %v2381
        %v2383 = vmul.f32 %v2375, %v2382
        %v2385 = vlaneseq
        %v2386 = vshrl.u32 %v2385, 7
        %v2387 = vsub.s32 0, %v2386
        %v2388 = vrot.slane %v2369, %v2387
        %v2390 = vmul.f32 %v2383, %v2388
        %v2392 = vlaneseq
        %v2393 = vshrl.u32 %v2392, 7
        %v2394 = vsub.s32 0, %v2393
        %v2395 = vrot.slane %v2370, %v2394
        %v2397 = vadd.f32 %v2390, %v2395
        %v2398 = vld [vmem:[#allocation31] sm:$0xff]
        %v2399 = vld [vmem:[#allocation31 + $0x8] sm:$0xff]
        %v2400 = vld [vmem:[#allocation31 + $0x10] sm:$0xff]
        %v2401 = vld [vmem:[#allocation31 + $0x18] sm:$0xff]
        %v2402 = vld [vmem:[#allocation33] sm:$0x1]
        %v2404 = vlaneseq
        %v2405 = vshrl.u32 %v2404, 7
        %v2406 = vsub.s32 0, %v2405
        %v2407 = vrot.slane %v2402, %v2406
        %v2410 = vsel %vm1268, %v2397, 0
        %2412 = vmatprep.subr.mxu0 0.0
        %2413 = vmatpush1.msra.mxu0 %v2398
        %2414 = vmatprep.subr.mxu0 0.0
        %2415 = vmatpush1.msra.mxu0 %v2399
        %2416 = vmatprep.subr.mxu0 0.0
        %2417 = vmatpush1.msra.mxu0 %v2400
        %2418 = vmatprep.subr.mxu0 0.0
        %2419 = vmatpush1.msra.mxu0 %v2401
        %2420 = vmatprep.subr.mxu0 0.0
        %2421 = vmatpush1.msra.mxu0 0.0
        %2422 = vmatprep.subr.mxu0 0.0
        %2423 = vmatpush1.msra.mxu0 0.0
        %2424 = vmatprep.subr.mxu0 0.0
        %2425 = vmatpush1.msra.mxu0 0.0
        %2426 = vmatprep.subr.mxu0 0.0
        %2427 = vmatpush1.msra.mxu0 0.0
        %2428 = vmatprep.subr.mxu0 0.0
        %2429 = vmatpush1.msra.mxu0 0.0
        %2430 = vmatprep.subr.mxu0 0.0
        %2431 = vmatpush1.msra.mxu0 0.0
        %2432 = vmatprep.subr.mxu0 0.0
        %2433 = vmatpush1.msra.mxu0 0.0
        %2434 = vmatprep.subr.mxu0 0.0
        %2435 = vmatpush1.msra.mxu0 0.0
        %2436 = vmatprep.subr.mxu0 0.0
        %2437 = vmatpush1.msra.mxu0 0.0
        %2438 = vmatprep.subr.mxu0 0.0
        %2439 = vmatpush1.msra.mxu0 0.0
        %2440 = vmatprep.subr.mxu0 0.0
        %2441 = vmatpush1.msra.mxu0 0.0
        %2442 = vmatprep.subr.mxu0 0.0
        %2443 = vmatpush1.msra.mxu0 0.0
        %2444 = vmatprep.subr.mxu0 0.0
        %2445 = vmatpush1.msra.mxu0 0.0
        %2446 = vmatprep.subr.mxu0 0.0
        %2447 = vmatpush1.msra.mxu0 0.0
        %2448 = vmatprep.subr.mxu0 0.0
        %2449 = vmatpush1.msra.mxu0 0.0
        %2450 = vmatprep.subr.mxu0 0.0
        %2451 = vmatpush1.msra.mxu0 0.0
        %2452 = vmatprep.subr.mxu0 0.0
        %2453 = vmatpush1.msra.mxu0 0.0
        %2454 = vmatprep.subr.mxu0 0.0
        %2455 = vmatpush1.msra.mxu0 0.0
        %2456 = vmatprep.subr.mxu0 0.0
        %2457 = vmatpush1.msra.mxu0 0.0
        %2458 = vmatprep.subr.mxu0 0.0
        %2459 = vmatpush1.msra.mxu0 0.0
        %2460 = vmatprep.subr.mxu0 0.0
        %2461 = vmatpush1.msra.mxu0 0.0
        %2462 = vmatprep.subr.mxu0 0.0
        %2463 = vmatpush1.msra.mxu0 0.0
        %2464 = vmatprep.subr.mxu0 0.0
        %2465 = vmatpush1.msra.mxu0 0.0
        %2466 = vmatprep.subr.mxu0 0.0
        %2467 = vmatpush1.msra.mxu0 0.0
        %2468 = vmatprep.subr.mxu0 0.0
        %2469 = vmatpush1.msra.mxu0 0.0
        %2470 = vmatprep.subr.mxu0 0.0
        %2471 = vmatpush1.msra.mxu0 0.0
        %2472 = vmatprep.subr.mxu0 0.0
        %2473 = vmatpush1.msra.mxu0 0.0
        %2474 = vmatprep.subr.mxu0 0.0
        %2475 = vmatpush1.msra.mxu0 0.0
        %2476 = vmatprep.mubr.f32.mxu0 0.0
        %2477 = vmatmul.mubr.f32.gmra.mrb[0].mxu0 %v2410
        %v2478 = vpop.f32.mrb[0].mxu0
        %v2479 = vadd.f32 %v2407, %v2478
        %v2480 = vpop.f32.mrb[0].mxu0
        %2481 = vdwg.mxu0
        %v2482 = vmul.f32 %v2479, %v2479
        %v2483 = vmul.f32 %v2479, %v2482
        %v2484 = vmul.f32 %v2483, 0.044715
        %v2485 = vadd.f32 %v2479, %v2484
        %v2486 = vmul.f32 %v2485, 0.7978846
        %v2487 = vtanh.pop %v2486
        %v2488 = vadd.f32 %v2487, 1.0
        %v2489 = vmul.f32 %v2488, 0.5
        %v2490 = vmul.f32 %v2479, %v2489
        %v2491 = vld [vmem:[#allocation34] sm:$0xff]
        %v2492 = vld [vmem:[#allocation34 + $0x8] sm:$0xff]
        %v2493 = vld [vmem:[#allocation34 + $0x10] sm:$0xff]
        %v2494 = vld [vmem:[#allocation34 + $0x18] sm:$0xff]
        %v2495 = vld [vmem:[#allocation34 + $0x20] sm:$0xff]
        %v2496 = vld [vmem:[#allocation34 + $0x28] sm:$0xff]
        %v2497 = vld [vmem:[#allocation34 + $0x30] sm:$0xff]
        %v2498 = vld [vmem:[#allocation34 + $0x38] sm:$0xff]
        %v2499 = vld [vmem:[#allocation34 + $0x40] sm:$0xff]
        %v2500 = vld [vmem:[#allocation34 + $0x48] sm:$0xff]
        %v2501 = vld [vmem:[#allocation34 + $0x50] sm:$0xff]
        %v2502 = vld [vmem:[#allocation34 + $0x58] sm:$0xff]
        %v2503 = vld [vmem:[#allocation34 + $0x60] sm:$0xff]
        %v2504 = vld [vmem:[#allocation34 + $0x68] sm:$0xff]
        %v2505 = vld [vmem:[#allocation34 + $0x70] sm:$0xff]
        %v2506 = vld [vmem:[#allocation34 + $0x78] sm:$0xff]
        %v2507 = vld [vmem:[#allocation36] sm:$0x1]
        %v2509 = vlaneseq
        %v2510 = vshrl.u32 %v2509, 7
        %v2511 = vsub.s32 0, %v2510
        %v2512 = vrot.slane %v2507, %v2511
        %2514 = vmatprep.subr.mxu0 0.0
        %2515 = vmatpush1.msra.mxu0 %v2491
        %2516 = vmatprep.subr.mxu0 0.0
        %2517 = vmatpush1.msra.mxu0 %v2492
        %2518 = vmatprep.subr.mxu0 0.0
        %2519 = vmatpush1.msra.mxu0 %v2493
        %2520 = vmatprep.subr.mxu0 0.0
        %2521 = vmatpush1.msra.mxu0 %v2494
        %2522 = vmatprep.subr.mxu0 0.0
        %2523 = vmatpush1.msra.mxu0 %v2495
        %2524 = vmatprep.subr.mxu0 0.0
        %2525 = vmatpush1.msra.mxu0 %v2496
        %2526 = vmatprep.subr.mxu0 0.0
        %2527 = vmatpush1.msra.mxu0 %v2497
        %2528 = vmatprep.subr.mxu0 0.0
        %2529 = vmatpush1.msra.mxu0 %v2498
        %2530 = vmatprep.subr.mxu0 0.0
        %2531 = vmatpush1.msra.mxu0 %v2499
        %2532 = vmatprep.subr.mxu0 0.0
        %2533 = vmatpush1.msra.mxu0 %v2500
        %2534 = vmatprep.subr.mxu0 0.0
        %2535 = vmatpush1.msra.mxu0 %v2501
        %2536 = vmatprep.subr.mxu0 0.0
        %2537 = vmatpush1.msra.mxu0 %v2502
        %2538 = vmatprep.subr.mxu0 0.0
        %2539 = vmatpush1.msra.mxu0 %v2503
        %2540 = vmatprep.subr.mxu0 0.0
        %2541 = vmatpush1.msra.mxu0 %v2504
        %2542 = vmatprep.subr.mxu0 0.0
        %2543 = vmatpush1.msra.mxu0 %v2505
        %2544 = vmatprep.subr.mxu0 0.0
        %2545 = vmatpush1.msra.mxu0 %v2506
        %2546 = vmatprep.subr.mxu0 0.0
        %2547 = vmatpush1.msra.mxu0 0.0
        %2548 = vmatprep.subr.mxu0 0.0
        %2549 = vmatpush1.msra.mxu0 0.0
        %2550 = vmatprep.subr.mxu0 0.0
        %2551 = vmatpush1.msra.mxu0 0.0
        %2552 = vmatprep.subr.mxu0 0.0
        %2553 = vmatpush1.msra.mxu0 0.0
        %2554 = vmatprep.subr.mxu0 0.0
        %2555 = vmatpush1.msra.mxu0 0.0
        %2556 = vmatprep.subr.mxu0 0.0
        %2557 = vmatpush1.msra.mxu0 0.0
        %2558 = vmatprep.subr.mxu0 0.0
        %2559 = vmatpush1.msra.mxu0 0.0
        %2560 = vmatprep.subr.mxu0 0.0
        %2561 = vmatpush1.msra.mxu0 0.0
        %2562 = vmatprep.subr.mxu0 0.0
        %2563 = vmatpush1.msra.mxu0 0.0
        %2564 = vmatprep.subr.mxu0 0.0
        %2565 = vmatpush1.msra.mxu0 0.0
        %2566 = vmatprep.subr.mxu0 0.0
        %2567 = vmatpush1.msra.mxu0 0.0
        %2568 = vmatprep.subr.mxu0 0.0
        %2569 = vmatpush1.msra.mxu0 0.0
        %2570 = vmatprep.subr.mxu0 0.0
        %2571 = vmatpush1.msra.mxu0 0.0
        %2572 = vmatprep.subr.mxu0 0.0
        %2573 = vmatpush1.msra.mxu0 0.0
        %2574 = vmatprep.subr.mxu0 0.0
        %2575 = vmatpush1.msra.mxu0 0.0
        %2576 = vmatprep.subr.mxu0 0.0
        %2577 = vmatpush1.msra.mxu0 0.0
        %2578 = vmatprep.mubr.f32.mxu0 0.0
        %2579 = vmatmul.mubr.f32.gmra.mrb[0].mxu0 %v2490
        %v2580 = vpop.f32.mrb[0].mxu0
        %v2581 = vadd.f32 %v2512, %v2580
        %v2582 = vpop.f32.mrb[0].mxu0
        %2583 = vdwg.mxu0
        %v2584 = vld [vmem:[%s914] sm:$0xff]
        %2586 = vset.pattern.permute.xlu0 0
        %2587 = vperm.xlu0 %2586, %v2584
        %v2588 = vpop.permute.xlu0 %2587
        %v2590 = vmul.f32 %v2581, %v2588
        %v2591 = vld [vmem:[#allocation37] sm:$0x1]
        %v2593 = vlaneseq
        %v2594 = vshrl.u32 %v2593, 7
        %v2595 = vsub.s32 0, %v2594
        %v2596 = vrot.slane %v2591, %v2595
        %v2598 = vmul.f32 %v2596, %v2590
        %v2599 = vadd.f32 %v2368, %v2598
        %2600 = vst.msk [vmem:[%s1060] sm:$0xff] %vm1268, %v2599
        %s2601 = sand.u32 %s562, 1
        %s2602 = scalar_lea.sflag [#allocation6], %s2601
        %s2603 = sand.u32 %s562, 1
        %s2604 = smul.addr %s2603, 8
        %s2605 = scalar_lea.vmem [#allocation39], %s2604
        // Predicated region
        $region201: #{tpu_custom_call.1} parent=107 // pred_check
          %p2606 = pneg %p572
        $region202: #{tpu_custom_call.1} parent=107 // pred_check_branch
          %2608 = sbr.rel (%p2606) target = $region204
        $region203: #{tpu_custom_call.1} parent=107 // pred_region
          %s2610 = ssub.s32 128, 128
          %2611 = vsyncadd %s2602, %s2610
          %s2612 = sadd.s32 %s59, %s58
          %s2613 = smul.addr %s2612, 128
          %s2614 = scalar_lea.hbm %s22, %s2613
          %s2616 = sshll.u32 %s2605, 4
          %s2617 = int_to_ptr.vmem [resolvable:$true] %s2616
          %2619 = dma.vmem_to_hbm [thread:$0]  %s2617, 128, %s2614, %s2602
        $region204: #{tpu_custom_call.1} parent=107 // pred_fallthru
          _
      $region108: #{tpu_custom_call.1} parent=5 // pred_fallthru
        _
      %p2620 = scmp.le.s32.totalorder 2, %s49
      // Predicated region
      $region205: #{tpu_custom_call.1} parent=5 // pred_check
        %p2621 = pneg %p2620
      $region206: #{tpu_custom_call.1} parent=5 // pred_check_branch
        %2623 = sbr.rel (%p2621) target = $region208
      $region207: #{tpu_custom_call.1} parent=5 // pred_region
        %s2624 = ssub.s32 %s49, 2
        // Predicated region
        $region209: #{tpu_custom_call.1} parent=207 // pred_check
          %p2625 = pneg %p578
        $region210: #{tpu_custom_call.1} parent=207 // pred_check_branch
          %2627 = sbr.rel (%p2625) target = $region212
        $region211: #{tpu_custom_call.1} parent=207 // pred_region
          %s2628 = sand.u32 %s563, 1
          %s2629 = scalar_lea.sflag [#allocation6], %s2628
          %s2630 = sand.u32 %s563, 1
          %s2631 = smul.addr %s2630, 8
          %s2632 = scalar_lea.vmem [#allocation39], %s2631
          %2633 = dma.done %s2629, 128
        $region212: #{tpu_custom_call.1} parent=207 // pred_fallthru
          _
      $region208: #{tpu_custom_call.1} parent=5 // pred_fallthru
        _
    $region6: #{tpu_custom_call.1} parent=1 // loop_footer
      %s53 = sadd.s32 1, %s49
    $region7: #{tpu_custom_call.1} parent=1 // loop_footer_branch
      %48 = sbr.rel target = $region3
    $region8: #{tpu_custom_call.1} parent=1 // loop_exit
      _
    %2634 = vsyncpa [#allocation5], 1
    %s2635 = scalar_lea.sflag [#allocation5], 1
    %2636 = vsyncpa %s2635, 1
    %2637 = vsyncpa [#allocation8], 1
    %s2638 = scalar_lea.sflag [#allocation8], 1
    %2639 = vsyncpa %s2638, 1
    %2640 = vsyncpa [#allocation11], 1
    %s2641 = scalar_lea.sflag [#allocation11], 1
    %2642 = vsyncpa %s2641, 1
    %2643 = vsyncpa [#allocation14], 1
    %2644 = vsyncpa [#allocation17], 1
    %2645 = vsyncpa [#allocation20], 1
    %2646 = vsyncpa [#allocation23], 1
    %2647 = vsyncpa [#allocation26], 1
    %2648 = vsyncpa [#allocation29], 1
    %2649 = vsyncpa [#allocation32], 1
    %2650 = vsyncpa [#allocation35], 1
    %2651 = vsyncpa [#allocation38], 1
    %2652 = vsyncpa [#allocation6], 1
    %s2653 = scalar_lea.sflag [#allocation6], 1
    %2654 = vsyncpa %s2653, 1

</llo_original>
